<compile_context>
chip_gen: v6e
topology: v6e:2x2x1
jax: 0.10.0
libtpu: 0.0.40
codegen_flags: <defaults>
</compile_context>

<pallas_src>
import functools

import jax
import jax.numpy as jnp
from jax.experimental import pallas as pl
from jax.experimental.pallas import tpu as pltpu

EPS = 1e-5                      # nn.InstanceNorm2d default (affine=False, biased var)
COMPUTE_DTYPE = jnp.float32     # set jnp.bfloat16 on v6e/v7x (relax test tol ~3e-2)


def _reflect_pad_into(pad_ref, act_hw_c, H, W, C):
    """Write ReflectionPad2d(1) of a flat (H*W, C) activation into pad_ref (H+2, W+2, C)."""
    img = act_hw_c.reshape(H, W, C).astype(pad_ref.dtype)   # cast once here
    # interior
    pad_ref[1:H + 1, 1:W + 1, :] = img
    # top / bottom rows: padded row 0 <- img row 1, padded row H+1 <- img row H-2
    pad_ref[0:1, 1:W + 1, :] = img[1:2]
    pad_ref[H + 1:H + 2, 1:W + 1, :] = img[H - 2:H - 1]
    # left / right columns from the already row-padded buffer (corners correct):
    # padded col 0 <- padded col 2, padded col W+1 <- padded col W-1.
    pad_ref[:, 0:1, :] = pad_ref[:, 2:3, :]
    pad_ref[:, W + 1:W + 2, :] = pad_ref[:, W - 1:W, :]


def _im2col_into(col_ref, pad_ref, H, W, C):
    """Single write pass: fill col_ref (H*W, 9*C) from pad_ref (H+2, W+2, C).

    Column ordering is (kh, kw, ci), matching the (9*C, C) weight matrix rows.
    """
    HW = H * W
    for t in range(9):
        kh, kw = divmod(t, 3)
        col_ref[:, t * C:(t + 1) * C] = pad_ref[kh:kh + H, kw:kw + W, :].reshape(HW, C)


def _conv_in(col_ref, w_ref, b_ref):
    """One K=9C MXU matmul + bias + instance norm (biased var), stats in f32.

    col_ref: (H*W, 9*C) im2col buffer.  w_ref: (9*C, C).  b_ref: (1, C) f32.
    Returns a float32 (H*W, C) normalized tensor (no activation applied).
    """
    y = jnp.dot(col_ref[...], w_ref[...], preferred_element_type=jnp.float32)
    y = y + b_ref[...]                                       # (HW, C) + (1, C)
    inv_n = 1.0 / y.shape[0]
    mean = jnp.sum(y, axis=0, keepdims=True) * inv_n         # (1, C)
    mean_sq = jnp.sum(y * y, axis=0, keepdims=True) * inv_n  # (1, C)
    var = mean_sq - mean * mean
    return (y - mean) * jax.lax.rsqrt(var + EPS)


def _residual_block_kernel(x_ref, w1_ref, b1_ref, w2_ref, b2_ref, out_ref,
                           pad_ref, col_ref, *, C, H, W):
    # ---- conv1 + IN + ReLU (y1 never leaves VMEM) ----
    _reflect_pad_into(pad_ref, x_ref[0], H, W, C)
    _im2col_into(col_ref, pad_ref, H, W, C)
    y1 = jnp.maximum(_conv_in(col_ref, w1_ref, b1_ref), 0.0)

    # ---- conv2 + IN (reuse the same padded / im2col scratches) ----
    _reflect_pad_into(pad_ref, y1, H, W, C)
    _im2col_into(col_ref, pad_ref, H, W, C)
    y2 = _conv_in(col_ref, w2_ref, b2_ref)

    # ---- residual add: re-read x here (not held live across both convs) ----
    out_ref[0] = (x_ref[0].astype(jnp.float32) + y2).astype(out_ref.dtype)


def _to_matmul_weight(w_oihw):
    """(Cout, Cin, 3, 3) OIHW -> lane-dense (9*Cin, Cout), rows ordered (kh, kw, ci)."""
    co, ci, kh, kw = w_oihw.shape
    return jnp.transpose(w_oihw, (2, 3, 1, 0)).reshape(kh * kw * ci, co)


@jax.jit
def residual_block(x_nchw, w1_oihw, b1, w2_oihw, b2):
    """x_nchw: (N, C, H, W) f32; w*: (C, C, 3, 3) OIHW (PyTorch layout); b*: (C,)."""
    N, C, H, W = x_nchw.shape
    HW = H * W

    # NCHW -> (N, H*W, C): channels on lanes, 2-D lane-dense kernel blocks.
    x = jnp.transpose(x_nchw, (0, 2, 3, 1)).reshape(N, HW, C)

    w1m = _to_matmul_weight(w1_oihw).astype(COMPUTE_DTYPE)   # (9C, C)
    w2m = _to_matmul_weight(w2_oihw).astype(COMPUTE_DTYPE)
    b1r = b1.reshape(1, C).astype(jnp.float32)
    b2r = b2.reshape(1, C).astype(jnp.float32)

    # Per-step VMEM estimate: double-buffered x/out f32 blocks, double-buffered
    # weights/biases, padded scratch, im2col scratch.  Floor 32 MiB, cap 100 MiB
    # (v5e/v6e have 128 MiB physical VMEM; v7x large shapes need the banding TODO).
    cbytes = jnp.dtype(COMPUTE_DTYPE).itemsize
    est = (2 * 2 * HW * C * 4
           + 2 * 2 * (9 * C * C + C) * cbytes
           + (H + 2) * (W + 2) * C * cbytes
           + HW * 9 * C * cbytes)
    vmem_limit = int(min(100 * 1024 * 1024, max(32 * 1024 * 1024, 2 * est)))

    kernel = functools.partial(_residual_block_kernel, C=C, H=H, W=W)
    out = pl.pallas_call(
        kernel,
        out_shape=jax.ShapeDtypeStruct((N, HW, C), jnp.float32),
        grid_spec=pltpu.PrefetchScalarGridSpec(
            num_scalar_prefetch=0,
            grid=(N,),
            in_specs=[
                pl.BlockSpec((1, HW, C), lambda n: (n, 0, 0)),
                # TODO(synk): on v7x use pipeline_mode=pl.Buffered(1) (or bf16
                # weights) to drop the redundant double-buffer of these constants.
                pl.BlockSpec((9 * C, C), lambda n: (0, 0)),
                pl.BlockSpec((1, C), lambda n: (0, 0)),
                pl.BlockSpec((9 * C, C), lambda n: (0, 0)),
                pl.BlockSpec((1, C), lambda n: (0, 0)),
            ],
            out_specs=pl.BlockSpec((1, HW, C), lambda n: (n, 0, 0)),
            scratch_shapes=[
                pltpu.VMEM((H + 2, W + 2, C), COMPUTE_DTYPE),   # padded image
                pltpu.VMEM((HW, 9 * C), COMPUTE_DTYPE),         # im2col buffer
            ],
        ),
        compiler_params=pltpu.CompilerParams(
            dimension_semantics=("parallel",),        # batch across cores
            vmem_limit_bytes=vmem_limit,
        ),
    )(x, w1m, b1r, w2m, b2r)

    return jnp.transpose(out.reshape(N, H, W, C), (0, 3, 1, 2))   # back to NCHW


def _init_conv_params(key, c):
    """Deterministic PyTorch-like Conv2d init: U(-1/sqrt(fan_in), 1/sqrt(fan_in))."""
    kw_key, kb_key = jax.random.split(key)
    fan_in = c * 3 * 3
    bound = 1.0 / jnp.sqrt(fan_in)
    w_oihw = jax.random.uniform(kw_key, (c, c, 3, 3), jnp.float32, -bound, bound)
    b = jax.random.uniform(kb_key, (c,), jnp.float32, -bound, bound)
    return w_oihw, b


def _reference(x, w1, b1, w2, b2):
    """Pure-JAX reference of ResidualBlock.forward (NCHW) for verification."""
    def conv_in(h, w, b, relu):
        hp = jnp.pad(h, ((0, 0), (0, 0), (1, 1), (1, 1)), mode="reflect")
        y = jax.lax.conv_general_dilated(
            hp, w, (1, 1), "VALID",
            dimension_numbers=("NCHW", "OIHW", "NCHW"),
            precision=jax.lax.Precision.HIGHEST)
        y = y + b.reshape(1, -1, 1, 1)
        mean = y.mean(axis=(2, 3), keepdims=True)
        var = ((y - mean) ** 2).mean(axis=(2, 3), keepdims=True)
        y = (y - mean) / jnp.sqrt(var + EPS)
        return jnp.maximum(y, 0.0) if relu else y

    y1 = conv_in(x, w1, b1, relu=True)
    y2 = conv_in(y1, w2, b2, relu=False)
    return x + y2


def _run_case(key, N, C, H, W, tol):
    kx, k1, k2 = jax.random.split(key, 3)
    x = jax.random.normal(kx, (N, C, H, W), jnp.float32)
    w1, b1 = _init_conv_params(k1, C)
    w2, b2 = _init_conv_params(k2, C)

    out = jax.block_until_ready(residual_block(x, w1, b1, w2, b2))
    ref = _reference(x, w1, b1, w2, b2)

    assert out.shape == (N, C, H, W)
    assert jnp.allclose(out, ref, atol=tol, rtol=tol), (
        (N, C, H, W), float(jnp.max(jnp.abs(out - ref))))


if __name__ == "__main__":
    key = jax.random.PRNGKey(0)
    k_small, k_lane = jax.random.split(key)

    # Module-consistent small case (toy C=4 -> masked-lane path).
    _run_case(k_small, N=2, C=4, H=16, W=16, tol=1e-3)
    # Lane-dense path the kernel is actually designed for (C=128), small spatial.
    # (bf16 COMPUTE_DTYPE -> relax both tolerances to ~3e-2.)
    _run_case(k_lane, N=1, C=128, H=8, W=8, tol=5e-3)

    print("KERNEL_OK")
</pallas_src>

<mosaic_0001>
module attributes {stable_mosaic.version = 11 : i64} {
  func.func @_residual_block_kernel(%arg0: i32, %arg1: memref<1x256x4xf32, #tpu.memory_space<vmem>>, %arg2: memref<36x4xf32, #tpu.memory_space<vmem>>, %arg3: memref<1x4xf32, #tpu.memory_space<vmem>>, %arg4: memref<36x4xf32, #tpu.memory_space<vmem>>, %arg5: memref<1x4xf32, #tpu.memory_space<vmem>>, %arg6: memref<1x256x4xf32, #tpu.memory_space<vmem>>, %arg7: memref<18x18x4xf32, #tpu.memory_space<vmem>>, %arg8: memref<256x36xf32, #tpu.memory_space<vmem>>) attributes {dimension_semantics = [#tpu.dimension_semantics<parallel>], iteration_bounds = array<i64: 2>, scalar_prefetch = 0 : i64, scratch_operands = 2 : i64, tpu.core_type = #tpu.core_type<tc>, window_params = [{transform_indices = @transform_0, window_bounds = array<i64: 1, 256, 4>}, {pipeline_mode = #tpu.pipeline_mode<synchronous>, transform_indices = @transform_1, window_bounds = array<i64: 36, 4>}, {pipeline_mode = #tpu.pipeline_mode<synchronous>, transform_indices = @transform_2, window_bounds = array<i64: 1, 4>}, {pipeline_mode = #tpu.pipeline_mode<synchronous>, transform_indices = @transform_3, window_bounds = array<i64: 36, 4>}, {pipeline_mode = #tpu.pipeline_mode<synchronous>, transform_indices = @transform_4, window_bounds = array<i64: 1, 4>}, {transform_indices = @transform_5, window_bounds = array<i64: 1, 256, 4>}]} {
    %c0 = arith.constant 0 : index
    %c0_0 = arith.constant 0 : index
    %c0_1 = arith.constant 0 : index
    %0 = vector.load %arg1[%c0, %c0_0, %c0_1] : memref<1x256x4xf32, #tpu.memory_space<vmem>>, vector<1x256x4xf32>
    %1 = vector.shape_cast %0 : vector<1x256x4xf32> to vector<256x4xf32>
    %2 = vector.shape_cast %1 : vector<256x4xf32> to vector<16x16x4xf32>
    %c1 = arith.constant 1 : index
    %c1_2 = arith.constant 1 : index
    %c0_3 = arith.constant 0 : index
    %3 = vector.load %arg7[%c1, %c1_2, %c0_3] : memref<18x18x4xf32, #tpu.memory_space<vmem>>, vector<16x16x4xf32>
    tpu.vector_store %arg7[%c1, %c1_2, %c0_3], %2 {strides = array<i32>} : memref<18x18x4xf32, #tpu.memory_space<vmem>>, vector<16x16x4xf32>,
    %4 = vector.extract_strided_slice %2 {offsets = [1, 0, 0], sizes = [1, 16, 4], strides = [1, 1, 1]} : vector<16x16x4xf32> to vector<1x16x4xf32>
    %c0_4 = arith.constant 0 : index
    %c1_5 = arith.constant 1 : index
    %c0_6 = arith.constant 0 : index
    %5 = vector.load %arg7[%c0_4, %c1_5, %c0_6] : memref<18x18x4xf32, #tpu.memory_space<vmem>>, vector<1x16x4xf32>
    tpu.vector_store %arg7[%c0_4, %c1_5, %c0_6], %4 {strides = array<i32>} : memref<18x18x4xf32, #tpu.memory_space<vmem>>, vector<1x16x4xf32>,
    %6 = vector.extract_strided_slice %2 {offsets = [14, 0, 0], sizes = [1, 16, 4], strides = [1, 1, 1]} : vector<16x16x4xf32> to vector<1x16x4xf32>
    %c17 = arith.constant 17 : index
    %c1_7 = arith.constant 1 : index
    %c0_8 = arith.constant 0 : index
    %7 = vector.load %arg7[%c17, %c1_7, %c0_8] : memref<18x18x4xf32, #tpu.memory_space<vmem>>, vector<1x16x4xf32>
    tpu.vector_store %arg7[%c17, %c1_7, %c0_8], %6 {strides = array<i32>} : memref<18x18x4xf32, #tpu.memory_space<vmem>>, vector<1x16x4xf32>,
    %c0_9 = arith.constant 0 : index
    %c2 = arith.constant 2 : index
    %c0_10 = arith.constant 0 : index
    %8 = vector.load %arg7[%c0_9, %c2, %c0_10] : memref<18x18x4xf32, #tpu.memory_space<vmem>>, vector<18x1x4xf32>
    %c0_11 = arith.constant 0 : index
    %c0_12 = arith.constant 0 : index
    %c0_13 = arith.constant 0 : index
    %9 = vector.load %arg7[%c0_11, %c0_12, %c0_13] : memref<18x18x4xf32, #tpu.memory_space<vmem>>, vector<18x1x4xf32>
    tpu.vector_store %arg7[%c0_11, %c0_12, %c0_13], %8 {strides = array<i32>} : memref<18x18x4xf32, #tpu.memory_space<vmem>>, vector<18x1x4xf32>,
    %c0_14 = arith.constant 0 : index
    %c15 = arith.constant 15 : index
    %c0_15 = arith.constant 0 : index
    %10 = vector.load %arg7[%c0_14, %c15, %c0_15] : memref<18x18x4xf32, #tpu.memory_space<vmem>>, vector<18x1x4xf32>
    %c0_16 = arith.constant 0 : index
    %c17_17 = arith.constant 17 : index
    %c0_18 = arith.constant 0 : index
    %11 = vector.load %arg7[%c0_16, %c17_17, %c0_18] : memref<18x18x4xf32, #tpu.memory_space<vmem>>, vector<18x1x4xf32>
    tpu.vector_store %arg7[%c0_16, %c17_17, %c0_18], %10 {strides = array<i32>} : memref<18x18x4xf32, #tpu.memory_space<vmem>>, vector<18x1x4xf32>,
    %c0_19 = arith.constant 0 : index
    %c0_20 = arith.constant 0 : index
    %c0_21 = arith.constant 0 : index
    %12 = vector.load %arg7[%c0_19, %c0_20, %c0_21] : memref<18x18x4xf32, #tpu.memory_space<vmem>>, vector<16x16x4xf32>
    %13 = vector.shape_cast %12 : vector<16x16x4xf32> to vector<256x4xf32>
    %c0_22 = arith.constant 0 : index
    %c0_23 = arith.constant 0 : index
    %14 = vector.load %arg8[%c0_22, %c0_23] : memref<256x36xf32, #tpu.memory_space<vmem>>, vector<256x4xf32>
    tpu.vector_store %arg8[%c0_22, %c0_23], %13 {strides = array<i32>} : memref<256x36xf32, #tpu.memory_space<vmem>>, vector<256x4xf32>,
    %c0_24 = arith.constant 0 : index
    %c1_25 = arith.constant 1 : index
    %c0_26 = arith.constant 0 : index
    %15 = vector.load %arg7[%c0_24, %c1_25, %c0_26] : memref<18x18x4xf32, #tpu.memory_space<vmem>>, vector<16x16x4xf32>
    %16 = vector.shape_cast %15 : vector<16x16x4xf32> to vector<256x4xf32>
    %c0_27 = arith.constant 0 : index
    %c4 = arith.constant 4 : index
    %17 = vector.load %arg8[%c0_27, %c4] : memref<256x36xf32, #tpu.memory_space<vmem>>, vector<256x4xf32>
    tpu.vector_store %arg8[%c0_27, %c4], %16 {strides = array<i32>} : memref<256x36xf32, #tpu.memory_space<vmem>>, vector<256x4xf32>,
    %c0_28 = arith.constant 0 : index
    %c2_29 = arith.constant 2 : index
    %c0_30 = arith.constant 0 : index
    %18 = vector.load %arg7[%c0_28, %c2_29, %c0_30] : memref<18x18x4xf32, #tpu.memory_space<vmem>>, vector<16x16x4xf32>
    %19 = vector.shape_cast %18 : vector<16x16x4xf32> to vector<256x4xf32>
    %c0_31 = arith.constant 0 : index
    %c8 = arith.constant 8 : index
    %20 = vector.load %arg8[%c0_31, %c8] : memref<256x36xf32, #tpu.memory_space<vmem>>, vector<256x4xf32>
    tpu.vector_store %arg8[%c0_31, %c8], %19 {strides = array<i32>} : memref<256x36xf32, #tpu.memory_space<vmem>>, vector<256x4xf32>,
    %c1_32 = arith.constant 1 : index
    %c0_33 = arith.constant 0 : index
    %c0_34 = arith.constant 0 : index
    %21 = vector.load %arg7[%c1_32, %c0_33, %c0_34] : memref<18x18x4xf32, #tpu.memory_space<vmem>>, vector<16x16x4xf32>
    %22 = vector.shape_cast %21 : vector<16x16x4xf32> to vector<256x4xf32>
    %c0_35 = arith.constant 0 : index
    %c12 = arith.constant 12 : index
    %23 = vector.load %arg8[%c0_35, %c12] : memref<256x36xf32, #tpu.memory_space<vmem>>, vector<256x4xf32>
    tpu.vector_store %arg8[%c0_35, %c12], %22 {strides = array<i32>} : memref<256x36xf32, #tpu.memory_space<vmem>>, vector<256x4xf32>,
    %c1_36 = arith.constant 1 : index
    %c1_37 = arith.constant 1 : index
    %c0_38 = arith.constant 0 : index
    %24 = vector.load %arg7[%c1_36, %c1_37, %c0_38] : memref<18x18x4xf32, #tpu.memory_space<vmem>>, vector<16x16x4xf32>
    %25 = vector.shape_cast %24 : vector<16x16x4xf32> to vector<256x4xf32>
    %c0_39 = arith.constant 0 : index
    %c16 = arith.constant 16 : index
    %26 = vector.load %arg8[%c0_39, %c16] : memref<256x36xf32, #tpu.memory_space<vmem>>, vector<256x4xf32>
    tpu.vector_store %arg8[%c0_39, %c16], %25 {strides = array<i32>} : memref<256x36xf32, #tpu.memory_space<vmem>>, vector<256x4xf32>,
    %c1_40 = arith.constant 1 : index
    %c2_41 = arith.constant 2 : index
    %c0_42 = arith.constant 0 : index
    %27 = vector.load %arg7[%c1_40, %c2_41, %c0_42] : memref<18x18x4xf32, #tpu.memory_space<vmem>>, vector<16x16x4xf32>
    %28 = vector.shape_cast %27 : vector<16x16x4xf32> to vector<256x4xf32>
    %c0_43 = arith.constant 0 : index
    %c20 = arith.constant 20 : index
    %29 = vector.load %arg8[%c0_43, %c20] : memref<256x36xf32, #tpu.memory_space<vmem>>, vector<256x4xf32>
    tpu.vector_store %arg8[%c0_43, %c20], %28 {strides = array<i32>} : memref<256x36xf32, #tpu.memory_space<vmem>>, vector<256x4xf32>,
    %c2_44 = arith.constant 2 : index
    %c0_45 = arith.constant 0 : index
    %c0_46 = arith.constant 0 : index
    %30 = vector.load %arg7[%c2_44, %c0_45, %c0_46] : memref<18x18x4xf32, #tpu.memory_space<vmem>>, vector<16x16x4xf32>
    %31 = vector.shape_cast %30 : vector<16x16x4xf32> to vector<256x4xf32>
    %c0_47 = arith.constant 0 : index
    %c24 = arith.constant 24 : index
    %32 = vector.load %arg8[%c0_47, %c24] : memref<256x36xf32, #tpu.memory_space<vmem>>, vector<256x4xf32>
    tpu.vector_store %arg8[%c0_47, %c24], %31 {strides = array<i32>} : memref<256x36xf32, #tpu.memory_space<vmem>>, vector<256x4xf32>,
    %c2_48 = arith.constant 2 : index
    %c1_49 = arith.constant 1 : index
    %c0_50 = arith.constant 0 : index
    %33 = vector.load %arg7[%c2_48, %c1_49, %c0_50] : memref<18x18x4xf32, #tpu.memory_space<vmem>>, vector<16x16x4xf32>
    %34 = vector.shape_cast %33 : vector<16x16x4xf32> to vector<256x4xf32>
    %c0_51 = arith.constant 0 : index
    %c28 = arith.constant 28 : index
    %35 = vector.load %arg8[%c0_51, %c28] : memref<256x36xf32, #tpu.memory_space<vmem>>, vector<256x4xf32>
    tpu.vector_store %arg8[%c0_51, %c28], %34 {strides = array<i32>} : memref<256x36xf32, #tpu.memory_space<vmem>>, vector<256x4xf32>,
    %c2_52 = arith.constant 2 : index
    %c2_53 = arith.constant 2 : index
    %c0_54 = arith.constant 0 : index
    %36 = vector.load %arg7[%c2_52, %c2_53, %c0_54] : memref<18x18x4xf32, #tpu.memory_space<vmem>>, vector<16x16x4xf32>
    %37 = vector.shape_cast %36 : vector<16x16x4xf32> to vector<256x4xf32>
    %c0_55 = arith.constant 0 : index
    %c32 = arith.constant 32 : index
    %38 = vector.load %arg8[%c0_55, %c32] : memref<256x36xf32, #tpu.memory_space<vmem>>, vector<256x4xf32>
    tpu.vector_store %arg8[%c0_55, %c32], %37 {strides = array<i32>} : memref<256x36xf32, #tpu.memory_space<vmem>>, vector<256x4xf32>,
    %c0_56 = arith.constant 0 : index
    %c0_57 = arith.constant 0 : index
    %39 = vector.load %arg8[%c0_56, %c0_57] : memref<256x36xf32, #tpu.memory_space<vmem>>, vector<256x36xf32>
    %c0_58 = arith.constant 0 : index
    %c0_59 = arith.constant 0 : index
    %40 = vector.load %arg2[%c0_58, %c0_59] : memref<36x4xf32, #tpu.memory_space<vmem>>, vector<36x4xf32>
    %cst = arith.constant dense<0.000000e+00> : vector<256x4xf32>
    %41 = tpu.matmul %39, %40, %cst {dimension_numbers = #tpu.dot_dimension_numbers<[1], [0], [0], [1], [0, 0, 1, 1], [], []>} : vector<256x36xf32>, vector<36x4xf32>, vector<256x4xf32> -> vector<256x4xf32>
    %c0_60 = arith.constant 0 : index
    %c0_61 = arith.constant 0 : index
    %42 = vector.load %arg3[%c0_60, %c0_61] : memref<1x4xf32, #tpu.memory_space<vmem>>, vector<1x4xf32>
    %43 = vector.broadcast %42 : vector<1x4xf32> to vector<256x4xf32>
    %44 = arith.addf %41, %43 : vector<256x4xf32>
    %cst_62 = arith.constant dense<0.000000e+00> : vector<4xf32>
    %45 = vector.multi_reduction <add>, %44, %cst_62 [0] : vector<256x4xf32> to vector<4xf32>
    %46 = vector.shape_cast %45 : vector<4xf32> to vector<1x4xf32>
    %cst_63 = arith.constant 3.906250e-03 : f32
    %47 = vector.broadcast %cst_63 : f32 to vector<1x4xf32>
    %48 = arith.mulf %46, %47 : vector<1x4xf32>
    %49 = arith.mulf %44, %44 : vector<256x4xf32>
    %cst_64 = arith.constant dense<0.000000e+00> : vector<4xf32>
    %50 = vector.multi_reduction <add>, %49, %cst_64 [0] : vector<256x4xf32> to vector<4xf32>
    %51 = vector.shape_cast %50 : vector<4xf32> to vector<1x4xf32>
    %cst_65 = arith.constant 3.906250e-03 : f32
    %52 = vector.broadcast %cst_65 : f32 to vector<1x4xf32>
    %53 = arith.mulf %51, %52 : vector<1x4xf32>
    %54 = arith.mulf %48, %48 : vector<1x4xf32>
    %55 = arith.subf %53, %54 : vector<1x4xf32>
    %56 = vector.broadcast %48 : vector<1x4xf32> to vector<256x4xf32>
    %57 = arith.subf %44, %56 : vector<256x4xf32>
    %cst_66 = arith.constant 9.99999974E-6 : f32
    %58 = vector.broadcast %cst_66 : f32 to vector<1x4xf32>
    %59 = arith.addf %55, %58 : vector<1x4xf32>
    %60 = math.rsqrt %59 : vector<1x4xf32>
    %61 = vector.broadcast %60 : vector<1x4xf32> to vector<256x4xf32>
    %62 = arith.mulf %57, %61 : vector<256x4xf32>
    %cst_67 = arith.constant 0.000000e+00 : f32
    %63 = vector.broadcast %cst_67 : f32 to vector<256x4xf32>
    %64 = arith.maximumf %62, %63 : vector<256x4xf32>
    %65 = vector.shape_cast %64 : vector<256x4xf32> to vector<16x16x4xf32>
    %c1_68 = arith.constant 1 : index
    %c1_69 = arith.constant 1 : index
    %c0_70 = arith.constant 0 : index
    %66 = vector.load %arg7[%c1_68, %c1_69, %c0_70] : memref<18x18x4xf32, #tpu.memory_space<vmem>>, vector<16x16x4xf32>
    tpu.vector_store %arg7[%c1_68, %c1_69, %c0_70], %65 {strides = array<i32>} : memref<18x18x4xf32, #tpu.memory_space<vmem>>, vector<16x16x4xf32>,
    %67 = vector.extract_strided_slice %65 {offsets = [1, 0, 0], sizes = [1, 16, 4], strides = [1, 1, 1]} : vector<16x16x4xf32> to vector<1x16x4xf32>
    %c0_71 = arith.constant 0 : index
    %c1_72 = arith.constant 1 : index
    %c0_73 = arith.constant 0 : index
    %68 = vector.load %arg7[%c0_71, %c1_72, %c0_73] : memref<18x18x4xf32, #tpu.memory_space<vmem>>, vector<1x16x4xf32>
    tpu.vector_store %arg7[%c0_71, %c1_72, %c0_73], %67 {strides = array<i32>} : memref<18x18x4xf32, #tpu.memory_space<vmem>>, vector<1x16x4xf32>,
    %69 = vector.extract_strided_slice %65 {offsets = [14, 0, 0], sizes = [1, 16, 4], strides = [1, 1, 1]} : vector<16x16x4xf32> to vector<1x16x4xf32>
    %c17_74 = arith.constant 17 : index
    %c1_75 = arith.constant 1 : index
    %c0_76 = arith.constant 0 : index
    %70 = vector.load %arg7[%c17_74, %c1_75, %c0_76] : memref<18x18x4xf32, #tpu.memory_space<vmem>>, vector<1x16x4xf32>
    tpu.vector_store %arg7[%c17_74, %c1_75, %c0_76], %69 {strides = array<i32>} : memref<18x18x4xf32, #tpu.memory_space<vmem>>, vector<1x16x4xf32>,
    %c0_77 = arith.constant 0 : index
    %c2_78 = arith.constant 2 : index
    %c0_79 = arith.constant 0 : index
    %71 = vector.load %arg7[%c0_77, %c2_78, %c0_79] : memref<18x18x4xf32, #tpu.memory_space<vmem>>, vector<18x1x4xf32>
    %c0_80 = arith.constant 0 : index
    %c0_81 = arith.constant 0 : index
    %c0_82 = arith.constant 0 : index
    %72 = vector.load %arg7[%c0_80, %c0_81, %c0_82] : memref<18x18x4xf32, #tpu.memory_space<vmem>>, vector<18x1x4xf32>
    tpu.vector_store %arg7[%c0_80, %c0_81, %c0_82], %71 {strides = array<i32>} : memref<18x18x4xf32, #tpu.memory_space<vmem>>, vector<18x1x4xf32>,
    %c0_83 = arith.constant 0 : index
    %c15_84 = arith.constant 15 : index
    %c0_85 = arith.constant 0 : index
    %73 = vector.load %arg7[%c0_83, %c15_84, %c0_85] : memref<18x18x4xf32, #tpu.memory_space<vmem>>, vector<18x1x4xf32>
    %c0_86 = arith.constant 0 : index
    %c17_87 = arith.constant 17 : index
    %c0_88 = arith.constant 0 : index
    %74 = vector.load %arg7[%c0_86, %c17_87, %c0_88] : memref<18x18x4xf32, #tpu.memory_space<vmem>>, vector<18x1x4xf32>
    tpu.vector_store %arg7[%c0_86, %c17_87, %c0_88], %73 {strides = array<i32>} : memref<18x18x4xf32, #tpu.memory_space<vmem>>, vector<18x1x4xf32>,
    %c0_89 = arith.constant 0 : index
    %c0_90 = arith.constant 0 : index
    %c0_91 = arith.constant 0 : index
    %75 = vector.load %arg7[%c0_89, %c0_90, %c0_91] : memref<18x18x4xf32, #tpu.memory_space<vmem>>, vector<16x16x4xf32>
    %76 = vector.shape_cast %75 : vector<16x16x4xf32> to vector<256x4xf32>
    %c0_92 = arith.constant 0 : index
    %c0_93 = arith.constant 0 : index
    %77 = vector.load %arg8[%c0_92, %c0_93] : memref<256x36xf32, #tpu.memory_space<vmem>>, vector<256x4xf32>
    tpu.vector_store %arg8[%c0_92, %c0_93], %76 {strides = array<i32>} : memref<256x36xf32, #tpu.memory_space<vmem>>, vector<256x4xf32>,
    %c0_94 = arith.constant 0 : index
    %c1_95 = arith.constant 1 : index
    %c0_96 = arith.constant 0 : index
    %78 = vector.load %arg7[%c0_94, %c1_95, %c0_96] : memref<18x18x4xf32, #tpu.memory_space<vmem>>, vector<16x16x4xf32>
    %79 = vector.shape_cast %78 : vector<16x16x4xf32> to vector<256x4xf32>
    %c0_97 = arith.constant 0 : index
    %c4_98 = arith.constant 4 : index
    %80 = vector.load %arg8[%c0_97, %c4_98] : memref<256x36xf32, #tpu.memory_space<vmem>>, vector<256x4xf32>
    tpu.vector_store %arg8[%c0_97, %c4_98], %79 {strides = array<i32>} : memref<256x36xf32, #tpu.memory_space<vmem>>, vector<256x4xf32>,
    %c0_99 = arith.constant 0 : index
    %c2_100 = arith.constant 2 : index
    %c0_101 = arith.constant 0 : index
    %81 = vector.load %arg7[%c0_99, %c2_100, %c0_101] : memref<18x18x4xf32, #tpu.memory_space<vmem>>, vector<16x16x4xf32>
    %82 = vector.shape_cast %81 : vector<16x16x4xf32> to vector<256x4xf32>
    %c0_102 = arith.constant 0 : index
    %c8_103 = arith.constant 8 : index
    %83 = vector.load %arg8[%c0_102, %c8_103] : memref<256x36xf32, #tpu.memory_space<vmem>>, vector<256x4xf32>
    tpu.vector_store %arg8[%c0_102, %c8_103], %82 {strides = array<i32>} : memref<256x36xf32, #tpu.memory_space<vmem>>, vector<256x4xf32>,
    %c1_104 = arith.constant 1 : index
    %c0_105 = arith.constant 0 : index
    %c0_106 = arith.constant 0 : index
    %84 = vector.load %arg7[%c1_104, %c0_105, %c0_106] : memref<18x18x4xf32, #tpu.memory_space<vmem>>, vector<16x16x4xf32>
    %85 = vector.shape_cast %84 : vector<16x16x4xf32> to vector<256x4xf32>
    %c0_107 = arith.constant 0 : index
    %c12_108 = arith.constant 12 : index
    %86 = vector.load %arg8[%c0_107, %c12_108] : memref<256x36xf32, #tpu.memory_space<vmem>>, vector<256x4xf32>
    tpu.vector_store %arg8[%c0_107, %c12_108], %85 {strides = array<i32>} : memref<256x36xf32, #tpu.memory_space<vmem>>, vector<256x4xf32>,
    %c1_109 = arith.constant 1 : index
    %c1_110 = arith.constant 1 : index
    %c0_111 = arith.constant 0 : index
    %87 = vector.load %arg7[%c1_109, %c1_110, %c0_111] : memref<18x18x4xf32, #tpu.memory_space<vmem>>, vector<16x16x4xf32>
    %88 = vector.shape_cast %87 : vector<16x16x4xf32> to vector<256x4xf32>
    %c0_112 = arith.constant 0 : index
    %c16_113 = arith.constant 16 : index
    %89 = vector.load %arg8[%c0_112, %c16_113] : memref<256x36xf32, #tpu.memory_space<vmem>>, vector<256x4xf32>
    tpu.vector_store %arg8[%c0_112, %c16_113], %88 {strides = array<i32>} : memref<256x36xf32, #tpu.memory_space<vmem>>, vector<256x4xf32>,
    %c1_114 = arith.constant 1 : index
    %c2_115 = arith.constant 2 : index
    %c0_116 = arith.constant 0 : index
    %90 = vector.load %arg7[%c1_114, %c2_115, %c0_116] : memref<18x18x4xf32, #tpu.memory_space<vmem>>, vector<16x16x4xf32>
    %91 = vector.shape_cast %90 : vector<16x16x4xf32> to vector<256x4xf32>
    %c0_117 = arith.constant 0 : index
    %c20_118 = arith.constant 20 : index
    %92 = vector.load %arg8[%c0_117, %c20_118] : memref<256x36xf32, #tpu.memory_space<vmem>>, vector<256x4xf32>
    tpu.vector_store %arg8[%c0_117, %c20_118], %91 {strides = array<i32>} : memref<256x36xf32, #tpu.memory_space<vmem>>, vector<256x4xf32>,
    %c2_119 = arith.constant 2 : index
    %c0_120 = arith.constant 0 : index
    %c0_121 = arith.constant 0 : index
    %93 = vector.load %arg7[%c2_119, %c0_120, %c0_121] : memref<18x18x4xf32, #tpu.memory_space<vmem>>, vector<16x16x4xf32>
    %94 = vector.shape_cast %93 : vector<16x16x4xf32> to vector<256x4xf32>
    %c0_122 = arith.constant 0 : index
    %c24_123 = arith.constant 24 : index
    %95 = vector.load %arg8[%c0_122, %c24_123] : memref<256x36xf32, #tpu.memory_space<vmem>>, vector<256x4xf32>
    tpu.vector_store %arg8[%c0_122, %c24_123], %94 {strides = array<i32>} : memref<256x36xf32, #tpu.memory_space<vmem>>, vector<256x4xf32>,
    %c2_124 = arith.constant 2 : index
    %c1_125 = arith.constant 1 : index
    %c0_126 = arith.constant 0 : index
    %96 = vector.load %arg7[%c2_124, %c1_125, %c0_126] : memref<18x18x4xf32, #tpu.memory_space<vmem>>, vector<16x16x4xf32>
    %97 = vector.shape_cast %96 : vector<16x16x4xf32> to vector<256x4xf32>
    %c0_127 = arith.constant 0 : index
    %c28_128 = arith.constant 28 : index
    %98 = vector.load %arg8[%c0_127, %c28_128] : memref<256x36xf32, #tpu.memory_space<vmem>>, vector<256x4xf32>
    tpu.vector_store %arg8[%c0_127, %c28_128], %97 {strides = array<i32>} : memref<256x36xf32, #tpu.memory_space<vmem>>, vector<256x4xf32>,
    %c2_129 = arith.constant 2 : index
    %c2_130 = arith.constant 2 : index
    %c0_131 = arith.constant 0 : index
    %99 = vector.load %arg7[%c2_129, %c2_130, %c0_131] : memref<18x18x4xf32, #tpu.memory_space<vmem>>, vector<16x16x4xf32>
    %100 = vector.shape_cast %99 : vector<16x16x4xf32> to vector<256x4xf32>
    %c0_132 = arith.constant 0 : index
    %c32_133 = arith.constant 32 : index
    %101 = vector.load %arg8[%c0_132, %c32_133] : memref<256x36xf32, #tpu.memory_space<vmem>>, vector<256x4xf32>
    tpu.vector_store %arg8[%c0_132, %c32_133], %100 {strides = array<i32>} : memref<256x36xf32, #tpu.memory_space<vmem>>, vector<256x4xf32>,
    %c0_134 = arith.constant 0 : index
    %c0_135 = arith.constant 0 : index
    %102 = vector.load %arg8[%c0_134, %c0_135] : memref<256x36xf32, #tpu.memory_space<vmem>>, vector<256x36xf32>
    %c0_136 = arith.constant 0 : index
    %c0_137 = arith.constant 0 : index
    %103 = vector.load %arg4[%c0_136, %c0_137] : memref<36x4xf32, #tpu.memory_space<vmem>>, vector<36x4xf32>
    %cst_138 = arith.constant dense<0.000000e+00> : vector<256x4xf32>
    %104 = tpu.matmul %102, %103, %cst_138 {dimension_numbers = #tpu.dot_dimension_numbers<[1], [0], [0], [1], [0, 0, 1, 1], [], []>} : vector<256x36xf32>, vector<36x4xf32>, vector<256x4xf32> -> vector<256x4xf32>
    %c0_139 = arith.constant 0 : index
    %c0_140 = arith.constant 0 : index
    %105 = vector.load %arg5[%c0_139, %c0_140] : memref<1x4xf32, #tpu.memory_space<vmem>>, vector<1x4xf32>
    %106 = vector.broadcast %105 : vector<1x4xf32> to vector<256x4xf32>
    %107 = arith.addf %104, %106 : vector<256x4xf32>
    %cst_141 = arith.constant dense<0.000000e+00> : vector<4xf32>
    %108 = vector.multi_reduction <add>, %107, %cst_141 [0] : vector<256x4xf32> to vector<4xf32>
    %109 = vector.shape_cast %108 : vector<4xf32> to vector<1x4xf32>
    %cst_142 = arith.constant 3.906250e-03 : f32
    %110 = vector.broadcast %cst_142 : f32 to vector<1x4xf32>
    %111 = arith.mulf %109, %110 : vector<1x4xf32>
    %112 = arith.mulf %107, %107 : vector<256x4xf32>
    %cst_143 = arith.constant dense<0.000000e+00> : vector<4xf32>
    %113 = vector.multi_reduction <add>, %112, %cst_143 [0] : vector<256x4xf32> to vector<4xf32>
    %114 = vector.shape_cast %113 : vector<4xf32> to vector<1x4xf32>
    %cst_144 = arith.constant 3.906250e-03 : f32
    %115 = vector.broadcast %cst_144 : f32 to vector<1x4xf32>
    %116 = arith.mulf %114, %115 : vector<1x4xf32>
    %117 = arith.mulf %111, %111 : vector<1x4xf32>
    %118 = arith.subf %116, %117 : vector<1x4xf32>
    %119 = vector.broadcast %111 : vector<1x4xf32> to vector<256x4xf32>
    %120 = arith.subf %107, %119 : vector<256x4xf32>
    %cst_145 = arith.constant 9.99999974E-6 : f32
    %121 = vector.broadcast %cst_145 : f32 to vector<1x4xf32>
    %122 = arith.addf %118, %121 : vector<1x4xf32>
    %123 = math.rsqrt %122 : vector<1x4xf32>
    %124 = vector.broadcast %123 : vector<1x4xf32> to vector<256x4xf32>
    %125 = arith.mulf %120, %124 : vector<256x4xf32>
    %c0_146 = arith.constant 0 : index
    %c0_147 = arith.constant 0 : index
    %c0_148 = arith.constant 0 : index
    %126 = vector.load %arg1[%c0_146, %c0_147, %c0_148] : memref<1x256x4xf32, #tpu.memory_space<vmem>>, vector<1x256x4xf32>
    %127 = vector.shape_cast %126 : vector<1x256x4xf32> to vector<256x4xf32>
    %128 = arith.addf %127, %125 : vector<256x4xf32>
    %c0_149 = arith.constant 0 : index
    %c0_150 = arith.constant 0 : index
    %c0_151 = arith.constant 0 : index
    %129 = vector.load %arg6[%c0_149, %c0_150, %c0_151] : memref<1x256x4xf32, #tpu.memory_space<vmem>>, vector<1x256x4xf32>
    %130 = vector.shape_cast %129 : vector<1x256x4xf32> to vector<256x4xf32>
    %131 = vector.shape_cast %128 : vector<256x4xf32> to vector<1x256x4xf32>
    tpu.vector_store %arg6[%c0_149, %c0_150, %c0_151], %131 {strides = array<i32>} : memref<1x256x4xf32, #tpu.memory_space<vmem>>, vector<1x256x4xf32>,
    return
  }
  func.func @transform_0(%arg0: i32) -> (i32, i32, i32) {
    %c0_i32 = arith.constant 0 : i32
    %c0_i32_0 = arith.constant 0 : i32
    %c0_i32_1 = arith.constant 0 : i32
    return %arg0, %c0_i32, %c0_i32_0 : i32, i32, i32
  }
  func.func @transform_1(%arg0: i32) -> (i32, i32) {
    %c0_i32 = arith.constant 0 : i32
    %c0_i32_0 = arith.constant 0 : i32
    %c0_i32_1 = arith.constant 0 : i32
    return %c0_i32, %c0_i32_0 : i32, i32
  }
  func.func @transform_2(%arg0: i32) -> (i32, i32) {
    %c0_i32 = arith.constant 0 : i32
    %c0_i32_0 = arith.constant 0 : i32
    %c0_i32_1 = arith.constant 0 : i32
    return %c0_i32, %c0_i32_0 : i32, i32
  }
  func.func @transform_3(%arg0: i32) -> (i32, i32) {
    %c0_i32 = arith.constant 0 : i32
    %c0_i32_0 = arith.constant 0 : i32
    %c0_i32_1 = arith.constant 0 : i32
    return %c0_i32, %c0_i32_0 : i32, i32
  }
  func.func @transform_4(%arg0: i32) -> (i32, i32) {
    %c0_i32 = arith.constant 0 : i32
    %c0_i32_0 = arith.constant 0 : i32
    %c0_i32_1 = arith.constant 0 : i32
    return %c0_i32, %c0_i32_0 : i32, i32
  }
  func.func @transform_5(%arg0: i32) -> (i32, i32, i32) {
    %c0_i32 = arith.constant 0 : i32
    %c0_i32_0 = arith.constant 0 : i32
    %c0_i32_1 = arith.constant 0 : i32
    return %arg0, %c0_i32, %c0_i32_0 : i32, i32, i32
  }
}

</mosaic_0001>

<llo_original>
// kernel: residual_block.1
$region0: #{residual_block.1}
  #allocation0 [shape = 'u32[]', space=smem, size = 0x4, offset = 0x4, fixed_abs, tag = 'smem constant byte address 0x4 - core index']
  #allocation1 [shape = 'u32[144,128]{1,0:T(1,128)}', space=vmem, size = 0x12000, scoped, tag = 'internal scratch']
  #allocation2 [shape = 'f32[18,18,4]{2,1,0:T(8,128)}', space=vmem, size = 0x36000, scoped, tag = 'scratch operand']
  #allocation3 [shape = 'f32[256,36]{1,0:T(8,128)}', space=vmem, size = 0x20000, scoped, tag = 'scratch operand']
  %s0 = inlined_call_operand.vmem [shape: f32[2,256,4], index: 0, kind: input, shape index: {}]
  %s1 = inlined_call_operand.vmem [shape: f32[36,4], index: 1, kind: input, shape index: {}]
  %s2 = inlined_call_operand.vmem [shape: f32[1,4], index: 2, kind: input, shape index: {}]
  %s3 = inlined_call_operand.vmem [shape: f32[36,4], index: 3, kind: input, shape index: {}]
  %s4 = inlined_call_operand.vmem [shape: f32[1,4], index: 4, kind: input, shape index: {}]
  %s5 = inlined_call_operand.vmem [shape: f32[2,256,4], index: 5, kind: output, shape index: {}]
  %s6 = sld [smem:[#allocation0]]
  $region53: #{residual_block.1} parent=0
    _
  %s8 = ssub.s32 1, %s6
  %s9 = scalar_select 0, %s8, %s6
  loop: start=0, step=1, limit=4
  $region2: #{residual_block.1} parent=0 // loop_pre_header
    _
  $region3: #{residual_block.1} parent=0 // loop_header
    %s11 = sphi 0, %s15
    %p12 = scmp.ge.s32.totalorder %s11, 4
    %s21 = sphi 0, %s23
    %s24 = sphi 0, %s21
    %s25 = sphi 0, %s24
    %s41 = sphi 0, %s25
    %s45 = sphi 0, %s45
    %s47 = sphi 0, %s45
    %s48 = sphi 0, %s47
    %s62 = sphi 0, %s48
    %s66 = sphi 0, %s66
    %s68 = sphi 0, %s66
    %s69 = sphi 0, %s68
    %s83 = sphi 0, %s69
    %s87 = sphi 0, %s87
    %s89 = sphi 0, %s87
    %s90 = sphi 0, %s89
    %s104 = sphi 0, %s90
    %s108 = sphi 0, %s108
    %s110 = sphi 0, %s108
    %s111 = sphi 0, %s110
    %s125 = sphi 0, %s111
    %s131 = sphi 0, %s133
    %s134 = sphi 0, %s131
    %s135 = sphi 0, %s134
    %s151 = sphi 0, %s135
  $region4: #{residual_block.1} parent=0 // loop_header_branch
    %14 = sbr.rel (%p12) target = $region8
  $region5: #{residual_block.1} parent=0 // loop_body
    %s16 = ssub.s32 %s11, 1
    %s17 = ssub.s32 %s11, 2
    %s18 = sadd.s32 %s11, 1
    %s19 = ssub.s32 %s11, %s18
    %p20 = scmp.eq.s32.totalorder %s19, 0
    %s22 = sadd.s32 %s21, 1
    %s23 = scalar_select %p20, %s21, %s22
    %p26 = pneg %p20
    %p27 = scmp.eq.s32.totalorder %s11, 1
    %p28 = por %p26, %p27
    %p29 = scmp.ne.s32.totalorder %s21, %s24
    %p30 = scmp.eq.s32.totalorder %s11, 0
    %p31 = por %p29, %p30
    %p32 = scmp.ne.s32.totalorder %s21, %s24
    %p33 = scmp.eq.s32.totalorder %s16, 1
    %p34 = por %p32, %p33
    %p35 = scmp.ne.s32.totalorder %s24, %s25
    %p36 = scmp.eq.s32.totalorder %s16, 0
    %p37 = por %p35, %p36
    %p38 = scmp.ne.s32.totalorder %s24, %s25
    %p39 = scmp.eq.s32.totalorder %s17, 1
    %p40 = por %p38, %p39
    %p42 = scmp.ne.s32.totalorder %s25, %s41
    %p43 = scmp.eq.s32.totalorder %s17, 0
    %p44 = por %p42, %p43
    %s46 = sadd.s32 %s45, 1
    %p49 = scmp.eq.s32.totalorder %s11, 1
    %p50 = scmp.ne.s32.totalorder %s45, %s47
    %p51 = scmp.eq.s32.totalorder %s11, 0
    %p52 = por %p50, %p51
    %p53 = scmp.ne.s32.totalorder %s45, %s47
    %p54 = scmp.eq.s32.totalorder %s16, 1
    %p55 = por %p53, %p54
    %p56 = scmp.ne.s32.totalorder %s47, %s48
    %p57 = scmp.eq.s32.totalorder %s16, 0
    %p58 = por %p56, %p57
    %p59 = scmp.ne.s32.totalorder %s47, %s48
    %p60 = scmp.eq.s32.totalorder %s17, 1
    %p61 = por %p59, %p60
    %p63 = scmp.ne.s32.totalorder %s48, %s62
    %p64 = scmp.eq.s32.totalorder %s17, 0
    %p65 = por %p63, %p64
    %s67 = sadd.s32 %s66, 1
    %p70 = scmp.eq.s32.totalorder %s11, 1
    %p71 = scmp.ne.s32.totalorder %s66, %s68
    %p72 = scmp.eq.s32.totalorder %s11, 0
    %p73 = por %p71, %p72
    %p74 = scmp.ne.s32.totalorder %s66, %s68
    %p75 = scmp.eq.s32.totalorder %s16, 1
    %p76 = por %p74, %p75
    %p77 = scmp.ne.s32.totalorder %s68, %s69
    %p78 = scmp.eq.s32.totalorder %s16, 0
    %p79 = por %p77, %p78
    %p80 = scmp.ne.s32.totalorder %s68, %s69
    %p81 = scmp.eq.s32.totalorder %s17, 1
    %p82 = por %p80, %p81
    %p84 = scmp.ne.s32.totalorder %s69, %s83
    %p85 = scmp.eq.s32.totalorder %s17, 0
    %p86 = por %p84, %p85
    %s88 = sadd.s32 %s87, 1
    %p91 = scmp.eq.s32.totalorder %s11, 1
    %p92 = scmp.ne.s32.totalorder %s87, %s89
    %p93 = scmp.eq.s32.totalorder %s11, 0
    %p94 = por %p92, %p93
    %p95 = scmp.ne.s32.totalorder %s87, %s89
    %p96 = scmp.eq.s32.totalorder %s16, 1
    %p97 = por %p95, %p96
    %p98 = scmp.ne.s32.totalorder %s89, %s90
    %p99 = scmp.eq.s32.totalorder %s16, 0
    %p100 = por %p98, %p99
    %p101 = scmp.ne.s32.totalorder %s89, %s90
    %p102 = scmp.eq.s32.totalorder %s17, 1
    %p103 = por %p101, %p102
    %p105 = scmp.ne.s32.totalorder %s90, %s104
    %p106 = scmp.eq.s32.totalorder %s17, 0
    %p107 = por %p105, %p106
    %s109 = sadd.s32 %s108, 1
    %p112 = scmp.eq.s32.totalorder %s11, 1
    %p113 = scmp.ne.s32.totalorder %s108, %s110
    %p114 = scmp.eq.s32.totalorder %s11, 0
    %p115 = por %p113, %p114
    %p116 = scmp.ne.s32.totalorder %s108, %s110
    %p117 = scmp.eq.s32.totalorder %s16, 1
    %p118 = por %p116, %p117
    %p119 = scmp.ne.s32.totalorder %s110, %s111
    %p120 = scmp.eq.s32.totalorder %s16, 0
    %p121 = por %p119, %p120
    %p122 = scmp.ne.s32.totalorder %s110, %s111
    %p123 = scmp.eq.s32.totalorder %s17, 1
    %p124 = por %p122, %p123
    %p126 = scmp.ne.s32.totalorder %s111, %s125
    %p127 = scmp.eq.s32.totalorder %s17, 0
    %p128 = por %p126, %p127
    %s129 = ssub.s32 %s11, %s18
    %p130 = scmp.eq.s32.totalorder %s129, 0
    %s132 = sadd.s32 %s131, 1
    %s133 = scalar_select %p130, %s131, %s132
    %p136 = pneg %p130
    %p137 = scmp.eq.s32.totalorder %s11, 1
    %p138 = por %p136, %p137
    %p139 = scmp.ne.s32.totalorder %s131, %s134
    %p140 = scmp.eq.s32.totalorder %s11, 0
    %p141 = por %p139, %p140
    %p142 = scmp.ne.s32.totalorder %s131, %s134
    %p143 = scmp.eq.s32.totalorder %s16, 1
    %p144 = por %p142, %p143
    %p145 = scmp.ne.s32.totalorder %s134, %s135
    %p146 = scmp.eq.s32.totalorder %s16, 0
    %p147 = por %p145, %p146
    %p148 = scmp.ne.s32.totalorder %s134, %s135
    %p149 = scmp.eq.s32.totalorder %s17, 1
    %p150 = por %p148, %p149
    %p152 = scmp.ne.s32.totalorder %s135, %s151
    %p153 = scmp.eq.s32.totalorder %s17, 0
    %p154 = por %p152, %p153
    %p155 = scmp.le.s32.totalorder 1, %s11
    %p156 = scmp.lt.s32.totalorder %s11, 3
    %p157 = pnand %p155, %p156
    %p158 = pneg %p157
    // Predicated region
    $region9: #{residual_block.1} parent=5 // pred_check
      _
    $region10: #{residual_block.1} parent=5 // pred_check_branch
      %160 = sbr.rel (%p157) target = $region12
    $region11: #{residual_block.1} parent=5 // pred_region
      %s161 = ssub.s32 %s11, 1
      // Predicated region
      $region13: #{residual_block.1} parent=11 // pred_check
        %p162 = pneg %p58
      $region14: #{residual_block.1} parent=11 // pred_check_branch
        %164 = sbr.rel (%p162) target = $region16
      $region15: #{residual_block.1} parent=11 // pred_region
        _
      $region16: #{residual_block.1} parent=11 // pred_fallthru
        _
      // Predicated region
      $region17: #{residual_block.1} parent=11 // pred_check
        %p165 = pneg %p79
      $region18: #{residual_block.1} parent=11 // pred_check_branch
        %167 = sbr.rel (%p165) target = $region20
      $region19: #{residual_block.1} parent=11 // pred_region
        _
      $region20: #{residual_block.1} parent=11 // pred_fallthru
        _
      // Predicated region
      $region21: #{residual_block.1} parent=11 // pred_check
        %p168 = pneg %p100
      $region22: #{residual_block.1} parent=11 // pred_check_branch
        %170 = sbr.rel (%p168) target = $region24
      $region23: #{residual_block.1} parent=11 // pred_region
        _
      $region24: #{residual_block.1} parent=11 // pred_fallthru
        _
      // Predicated region
      $region25: #{residual_block.1} parent=11 // pred_check
        %p171 = pneg %p121
      $region26: #{residual_block.1} parent=11 // pred_check_branch
        %173 = sbr.rel (%p171) target = $region28
      $region27: #{residual_block.1} parent=11 // pred_region
        _
      $region28: #{residual_block.1} parent=11 // pred_fallthru
        _
    $region12: #{residual_block.1} parent=5 // pred_fallthru
      _
    %p174 = scmp.lt.s32.totalorder %s11, 2
    // Predicated region
    $region29: #{residual_block.1} parent=5 // pred_check
      %p175 = pneg %p174
    $region30: #{residual_block.1} parent=5 // pred_check_branch
      %177 = sbr.rel (%p175) target = $region32
    $region31: #{residual_block.1} parent=5 // pred_region
      // Predicated region
      $region33: #{residual_block.1} parent=31 // pred_check
        %p178 = pneg %p31
      $region34: #{residual_block.1} parent=31 // pred_check_branch
        %180 = sbr.rel (%p178) target = $region36
      $region35: #{residual_block.1} parent=31 // pred_region
        %p181 = scmp.lt.s32.totalorder %s11, 1
        %s182 = scalar_select %p181, %s11, 1
        %s183 = smul.addr %s182, 32
        %s184 = smul.addr %s183, 8
        %s185 = scalar_lea.vmem %s0, %s184
      $region36: #{residual_block.1} parent=31 // pred_fallthru
        _
    $region32: #{residual_block.1} parent=5 // pred_fallthru
      _
    %p186 = scmp.le.s32.totalorder 1, %s11
    %p187 = scmp.lt.s32.totalorder %s11, 3
    %p188 = pnand %p186, %p187
    %p189 = pneg %p188
    // Predicated region
    $region37: #{residual_block.1} parent=5 // pred_check
      _
    $region38: #{residual_block.1} parent=5 // pred_check_branch
      %191 = sbr.rel (%p188) target = $region40
    $region39: #{residual_block.1} parent=5 // pred_region
      %s192 = ssub.s32 %s11, 1
      %p193 = scmp.lt.s32.totalorder %s16, 1
      %s194 = scalar_select %p193, %s16, 1
      %s195 = smul.addr %s194, 32
      %s196 = smul.addr %s195, 8
      %s197 = scalar_lea.vmem %s0, %s196
      %p198 = pneg %p37
      %p199 = pneg %p34
      %p200 = pneg %p58
      %p201 = pneg %p55
      %p202 = pneg %p79
      %p203 = pneg %p76
      %p204 = pneg %p100
      %p205 = pneg %p97
      %p206 = pneg %p121
      %p207 = pneg %p118
      %p208 = pneg %p147
      %p209 = pneg %p144
      %p210 = scmp.lt.s32.totalorder %s16, 1
      %s211 = scalar_select %p210, %s16, 1
      %s212 = smul.addr %s211, 32
      %s213 = smul.addr %s212, 8
      %s214 = scalar_lea.vmem %s5, %s213
      %p215 = scmp.lt.s32.totalorder %s16, 1
      %s216 = scalar_select %p215, %s16, 1
      %s217 = smul.addr %s216, 32
      %s218 = smul.addr %s217, 8
      %s219 = scalar_lea.vmem %s0, %s218
      %p220 = scmp.lt.s32.totalorder %s16, 1
      %s221 = scalar_select %p220, %s16, 1
      %s222 = smul.addr %s221, 32
      %s223 = smul.addr %s222, 8
      %s224 = scalar_lea.vmem %s5, %s223
      %v225 = vld [vmem:[%s219] sm:$0xff]
      %v226 = vld [vmem:[%s219 + $0x8] sm:$0xff]
      %v227 = vld [vmem:[%s219 + $0x10] sm:$0xff]
      %v228 = vld [vmem:[%s219 + $0x18] sm:$0xff]
      %v229 = vld [vmem:[%s219 + $0x20] sm:$0xff]
      %v230 = vld [vmem:[%s219 + $0x28] sm:$0xff]
      %v231 = vld [vmem:[%s219 + $0x30] sm:$0xff]
      %v232 = vld [vmem:[%s219 + $0x38] sm:$0xff]
      %v233 = vld [vmem:[%s219 + $0x40] sm:$0xff]
      %v234 = vld [vmem:[%s219 + $0x48] sm:$0xff]
      %v235 = vld [vmem:[%s219 + $0x50] sm:$0xff]
      %v236 = vld [vmem:[%s219 + $0x58] sm:$0xff]
      %v237 = vld [vmem:[%s219 + $0x60] sm:$0xff]
      %v238 = vld [vmem:[%s219 + $0x68] sm:$0xff]
      %v239 = vld [vmem:[%s219 + $0x70] sm:$0xff]
      %v240 = vld [vmem:[%s219 + $0x78] sm:$0xff]
      %v241 = vld [vmem:[%s219 + $0x80] sm:$0xff]
      %v242 = vld [vmem:[%s219 + $0x88] sm:$0xff]
      %v243 = vld [vmem:[%s219 + $0x90] sm:$0xff]
      %v244 = vld [vmem:[%s219 + $0x98] sm:$0xff]
      %v245 = vld [vmem:[%s219 + $0xa0] sm:$0xff]
      %v246 = vld [vmem:[%s219 + $0xa8] sm:$0xff]
      %v247 = vld [vmem:[%s219 + $0xb0] sm:$0xff]
      %v248 = vld [vmem:[%s219 + $0xb8] sm:$0xff]
      %v249 = vld [vmem:[%s219 + $0xc0] sm:$0xff]
      %v250 = vld [vmem:[%s219 + $0xc8] sm:$0xff]
      %v251 = vld [vmem:[%s219 + $0xd0] sm:$0xff]
      %v252 = vld [vmem:[%s219 + $0xd8] sm:$0xff]
      %v253 = vld [vmem:[%s219 + $0xe0] sm:$0xff]
      %v254 = vld [vmem:[%s219 + $0xe8] sm:$0xff]
      %v255 = vld [vmem:[%s219 + $0xf0] sm:$0xff]
      %v256 = vld [vmem:[%s219 + $0xf8] sm:$0xff]
      %s257 = scalar_lea.vmem [#allocation2], 24
      %vm258 = vcmask 31744
      %259 = vst.msk [vmem:[%s257 + $0x1] sm:$0xff] %vm258, %v225
      %260 = vst.msk [vmem:[%s257 + $0x9] sm:$0xff] %vm258, %v226
      %261 = vst.msk [vmem:[%s257 + $0x19] sm:$0xff] %vm258, %v227
      %262 = vst.msk [vmem:[%s257 + $0x21] sm:$0xff] %vm258, %v228
      %263 = vst.msk [vmem:[%s257 + $0x31] sm:$0xff] %vm258, %v229
      %264 = vst.msk [vmem:[%s257 + $0x39] sm:$0xff] %vm258, %v230
      %265 = vst.msk [vmem:[%s257 + $0x49] sm:$0xff] %vm258, %v231
      %266 = vst.msk [vmem:[%s257 + $0x51] sm:$0xff] %vm258, %v232
      %267 = vst.msk [vmem:[%s257 + $0x61] sm:$0xff] %vm258, %v233
      %268 = vst.msk [vmem:[%s257 + $0x69] sm:$0xff] %vm258, %v234
      %269 = vst.msk [vmem:[%s257 + $0x79] sm:$0xff] %vm258, %v235
      %270 = vst.msk [vmem:[%s257 + $0x81] sm:$0xff] %vm258, %v236
      %271 = vst.msk [vmem:[%s257 + $0x91] sm:$0xff] %vm258, %v237
      %272 = vst.msk [vmem:[%s257 + $0x99] sm:$0xff] %vm258, %v238
      %273 = vst.msk [vmem:[%s257 + $0xa9] sm:$0xff] %vm258, %v239
      %274 = vst.msk [vmem:[%s257 + $0xb1] sm:$0xff] %vm258, %v240
      %275 = vst.msk [vmem:[%s257 + $0xc1] sm:$0xff] %vm258, %v241
      %276 = vst.msk [vmem:[%s257 + $0xc9] sm:$0xff] %vm258, %v242
      %277 = vst.msk [vmem:[%s257 + $0xd9] sm:$0xff] %vm258, %v243
      %278 = vst.msk [vmem:[%s257 + $0xe1] sm:$0xff] %vm258, %v244
      %279 = vst.msk [vmem:[%s257 + $0xf1] sm:$0xff] %vm258, %v245
      %280 = vst.msk [vmem:[%s257 + $0xf9] sm:$0xff] %vm258, %v246
      %281 = vst.msk [vmem:[%s257 + $0x109] sm:$0xff] %vm258, %v247
      %282 = vst.msk [vmem:[%s257 + $0x111] sm:$0xff] %vm258, %v248
      %283 = vst.msk [vmem:[%s257 + $0x121] sm:$0xff] %vm258, %v249
      %284 = vst.msk [vmem:[%s257 + $0x129] sm:$0xff] %vm258, %v250
      %285 = vst.msk [vmem:[%s257 + $0x139] sm:$0xff] %vm258, %v251
      %286 = vst.msk [vmem:[%s257 + $0x141] sm:$0xff] %vm258, %v252
      %287 = vst.msk [vmem:[%s257 + $0x151] sm:$0xff] %vm258, %v253
      %288 = vst.msk [vmem:[%s257 + $0x159] sm:$0xff] %vm258, %v254
      %289 = vst.msk [vmem:[%s257 + $0x169] sm:$0xff] %vm258, %v255
      %290 = vst.msk [vmem:[%s257 + $0x171] sm:$0xff] %vm258, %v256
      %291 = vst.msk [vmem:[#allocation2 + $0x1] sm:$0xff] %vm258, %v227
      %292 = vst.msk [vmem:[#allocation2 + $0x9] sm:$0xff] %vm258, %v228
      %s293 = scalar_lea.vmem [#allocation2], 408
      %294 = vst.msk [vmem:[%s293 + $0x1] sm:$0xff] %vm258, %v253
      %295 = vst.msk [vmem:[%s293 + $0x9] sm:$0xff] %vm258, %v254
      %v296 = vld [vmem:[#allocation2 + $0x2] sm:$0x1]
      %v297 = vld [vmem:[#allocation2 + $0x1a] sm:$0x1]
      %v298 = vld [vmem:[#allocation2 + $0x32] sm:$0x1]
      %v299 = vld [vmem:[#allocation2 + $0x4a] sm:$0x1]
      %v300 = vld [vmem:[#allocation2 + $0x62] sm:$0x1]
      %v301 = vld [vmem:[#allocation2 + $0x7a] sm:$0x1]
      %v302 = vld [vmem:[#allocation2 + $0x92] sm:$0x1]
      %v303 = vld [vmem:[#allocation2 + $0xaa] sm:$0x1]
      %v304 = vld [vmem:[#allocation2 + $0xc2] sm:$0x1]
      %v305 = vld [vmem:[#allocation2 + $0xda] sm:$0x1]
      %v306 = vld [vmem:[#allocation2 + $0xf2] sm:$0x1]
      %v307 = vld [vmem:[#allocation2 + $0x10a] sm:$0x1]
      %v308 = vld [vmem:[#allocation2 + $0x122] sm:$0x1]
      %v309 = vld [vmem:[#allocation2 + $0x13a] sm:$0x1]
      %v310 = vld [vmem:[#allocation2 + $0x152] sm:$0x1]
      %v311 = vld [vmem:[#allocation2 + $0x16a] sm:$0x1]
      %v312 = vld [vmem:[#allocation2 + $0x182] sm:$0x1]
      %v313 = vld [vmem:[#allocation2 + $0x19a] sm:$0x1]
      %vm314 = vcmask 24576
      %315 = vst.msk [vmem:[#allocation2] sm:$0x1] %vm314, %v296
      %316 = vst.msk [vmem:[#allocation2 + $0x18] sm:$0x1] %vm314, %v297
      %317 = vst.msk [vmem:[#allocation2 + $0x30] sm:$0x1] %vm314, %v298
      %318 = vst.msk [vmem:[#allocation2 + $0x48] sm:$0x1] %vm314, %v299
      %319 = vst.msk [vmem:[#allocation2 + $0x60] sm:$0x1] %vm314, %v300
      %320 = vst.msk [vmem:[#allocation2 + $0x78] sm:$0x1] %vm314, %v301
      %321 = vst.msk [vmem:[#allocation2 + $0x90] sm:$0x1] %vm314, %v302
      %322 = vst.msk [vmem:[#allocation2 + $0xa8] sm:$0x1] %vm314, %v303
      %323 = vst.msk [vmem:[#allocation2 + $0xc0] sm:$0x1] %vm314, %v304
      %324 = vst.msk [vmem:[#allocation2 + $0xd8] sm:$0x1] %vm314, %v305
      %325 = vst.msk [vmem:[#allocation2 + $0xf0] sm:$0x1] %vm314, %v306
      %326 = vst.msk [vmem:[#allocation2 + $0x108] sm:$0x1] %vm314, %v307
      %327 = vst.msk [vmem:[#allocation2 + $0x120] sm:$0x1] %vm314, %v308
      %328 = vst.msk [vmem:[#allocation2 + $0x138] sm:$0x1] %vm314, %v309
      %329 = vst.msk [vmem:[#allocation2 + $0x150] sm:$0x1] %vm314, %v310
      %330 = vst.msk [vmem:[#allocation2 + $0x168] sm:$0x1] %vm314, %v311
      %331 = vst.msk [vmem:[#allocation2 + $0x180] sm:$0x1] %vm314, %v312
      %332 = vst.msk [vmem:[#allocation2 + $0x198] sm:$0x1] %vm314, %v313
      %v333 = vld [vmem:[#allocation2 + $0xf] sm:$0x1]
      %v334 = vld [vmem:[#allocation2 + $0x27] sm:$0x1]
      %v335 = vld [vmem:[#allocation2 + $0x3f] sm:$0x1]
      %v336 = vld [vmem:[#allocation2 + $0x57] sm:$0x1]
      %v337 = vld [vmem:[#allocation2 + $0x6f] sm:$0x1]
      %v338 = vld [vmem:[#allocation2 + $0x87] sm:$0x1]
      %v339 = vld [vmem:[#allocation2 + $0x9f] sm:$0x1]
      %v340 = vld [vmem:[#allocation2 + $0xb7] sm:$0x1]
      %v341 = vld [vmem:[#allocation2 + $0xcf] sm:$0x1]
      %v342 = vld [vmem:[#allocation2 + $0xe7] sm:$0x1]
      %v343 = vld [vmem:[#allocation2 + $0xff] sm:$0x1]
      %v344 = vld [vmem:[#allocation2 + $0x117] sm:$0x1]
      %v345 = vld [vmem:[#allocation2 + $0x12f] sm:$0x1]
      %v346 = vld [vmem:[#allocation2 + $0x147] sm:$0x1]
      %v347 = vld [vmem:[#allocation2 + $0x15f] sm:$0x1]
      %v348 = vld [vmem:[#allocation2 + $0x177] sm:$0x1]
      %v349 = vld [vmem:[#allocation2 + $0x18f] sm:$0x1]
      %v350 = vld [vmem:[#allocation2 + $0x1a7] sm:$0x1]
      %351 = vst.msk [vmem:[#allocation2 + $0x11] sm:$0x1] %vm314, %v333
      %352 = vst.msk [vmem:[#allocation2 + $0x29] sm:$0x1] %vm314, %v334
      %353 = vst.msk [vmem:[#allocation2 + $0x41] sm:$0x1] %vm314, %v335
      %354 = vst.msk [vmem:[#allocation2 + $0x59] sm:$0x1] %vm314, %v336
      %355 = vst.msk [vmem:[#allocation2 + $0x71] sm:$0x1] %vm314, %v337
      %356 = vst.msk [vmem:[#allocation2 + $0x89] sm:$0x1] %vm314, %v338
      %357 = vst.msk [vmem:[#allocation2 + $0xa1] sm:$0x1] %vm314, %v339
      %358 = vst.msk [vmem:[#allocation2 + $0xb9] sm:$0x1] %vm314, %v340
      %359 = vst.msk [vmem:[#allocation2 + $0xd1] sm:$0x1] %vm314, %v341
      %360 = vst.msk [vmem:[#allocation2 + $0xe9] sm:$0x1] %vm314, %v342
      %361 = vst.msk [vmem:[#allocation2 + $0x101] sm:$0x1] %vm314, %v343
      %362 = vst.msk [vmem:[#allocation2 + $0x119] sm:$0x1] %vm314, %v344
      %363 = vst.msk [vmem:[#allocation2 + $0x131] sm:$0x1] %vm314, %v345
      %364 = vst.msk [vmem:[#allocation2 + $0x149] sm:$0x1] %vm314, %v346
      %365 = vst.msk [vmem:[#allocation2 + $0x161] sm:$0x1] %vm314, %v347
      %366 = vst.msk [vmem:[#allocation2 + $0x179] sm:$0x1] %vm314, %v348
      %367 = vst.msk [vmem:[#allocation2 + $0x191] sm:$0x1] %vm314, %v349
      %368 = vst.msk [vmem:[#allocation2 + $0x1a9] sm:$0x1] %vm314, %v350
      %v369 = vld [vmem:[#allocation2] sm:$0xff]
      %v370 = vld [vmem:[#allocation2 + $0x8] sm:$0xff]
      %v371 = vld [vmem:[#allocation2 + $0x18] sm:$0xff]
      %v372 = vld [vmem:[#allocation2 + $0x20] sm:$0xff]
      %v373 = vld [vmem:[#allocation2 + $0x30] sm:$0xff]
      %v374 = vld [vmem:[#allocation2 + $0x38] sm:$0xff]
      %v375 = vld [vmem:[#allocation2 + $0x48] sm:$0xff]
      %v376 = vld [vmem:[#allocation2 + $0x50] sm:$0xff]
      %v377 = vld [vmem:[#allocation2 + $0x60] sm:$0xff]
      %v378 = vld [vmem:[#allocation2 + $0x68] sm:$0xff]
      %v379 = vld [vmem:[#allocation2 + $0x78] sm:$0xff]
      %v380 = vld [vmem:[#allocation2 + $0x80] sm:$0xff]
      %v381 = vld [vmem:[#allocation2 + $0x90] sm:$0xff]
      %v382 = vld [vmem:[#allocation2 + $0x98] sm:$0xff]
      %v383 = vld [vmem:[#allocation2 + $0xa8] sm:$0xff]
      %v384 = vld [vmem:[#allocation2 + $0xb0] sm:$0xff]
      %v385 = vld [vmem:[#allocation2 + $0xc0] sm:$0xff]
      %v386 = vld [vmem:[#allocation2 + $0xc8] sm:$0xff]
      %v387 = vld [vmem:[#allocation2 + $0xd8] sm:$0xff]
      %v388 = vld [vmem:[#allocation2 + $0xe0] sm:$0xff]
      %v389 = vld [vmem:[#allocation2 + $0xf0] sm:$0xff]
      %v390 = vld [vmem:[#allocation2 + $0xf8] sm:$0xff]
      %v391 = vld [vmem:[#allocation2 + $0x108] sm:$0xff]
      %v392 = vld [vmem:[#allocation2 + $0x110] sm:$0xff]
      %v393 = vld [vmem:[#allocation2 + $0x120] sm:$0xff]
      %v394 = vld [vmem:[#allocation2 + $0x128] sm:$0xff]
      %v395 = vld [vmem:[#allocation2 + $0x138] sm:$0xff]
      %v396 = vld [vmem:[#allocation2 + $0x140] sm:$0xff]
      %v397 = vld [vmem:[#allocation2 + $0x150] sm:$0xff]
      %v398 = vld [vmem:[#allocation2 + $0x158] sm:$0xff]
      %v399 = vld [vmem:[#allocation2 + $0x168] sm:$0xff]
      %v400 = vld [vmem:[#allocation2 + $0x170] sm:$0xff]
      %401 = vst.msk [vmem:[#allocation3] sm:$0xff] %vm258, %v369
      %402 = vst.msk [vmem:[#allocation3 + $0x8] sm:$0xff] %vm258, %v370
      %403 = vst.msk [vmem:[#allocation3 + $0x10] sm:$0xff] %vm258, %v371
      %404 = vst.msk [vmem:[#allocation3 + $0x18] sm:$0xff] %vm258, %v372
      %405 = vst.msk [vmem:[#allocation3 + $0x20] sm:$0xff] %vm258, %v373
      %406 = vst.msk [vmem:[#allocation3 + $0x28] sm:$0xff] %vm258, %v374
      %407 = vst.msk [vmem:[#allocation3 + $0x30] sm:$0xff] %vm258, %v375
      %408 = vst.msk [vmem:[#allocation3 + $0x38] sm:$0xff] %vm258, %v376
      %409 = vst.msk [vmem:[#allocation3 + $0x40] sm:$0xff] %vm258, %v377
      %410 = vst.msk [vmem:[#allocation3 + $0x48] sm:$0xff] %vm258, %v378
      %411 = vst.msk [vmem:[#allocation3 + $0x50] sm:$0xff] %vm258, %v379
      %412 = vst.msk [vmem:[#allocation3 + $0x58] sm:$0xff] %vm258, %v380
      %413 = vst.msk [vmem:[#allocation3 + $0x60] sm:$0xff] %vm258, %v381
      %414 = vst.msk [vmem:[#allocation3 + $0x68] sm:$0xff] %vm258, %v382
      %415 = vst.msk [vmem:[#allocation3 + $0x70] sm:$0xff] %vm258, %v383
      %416 = vst.msk [vmem:[#allocation3 + $0x78] sm:$0xff] %vm258, %v384
      %417 = vst.msk [vmem:[#allocation3 + $0x80] sm:$0xff] %vm258, %v385
      %418 = vst.msk [vmem:[#allocation3 + $0x88] sm:$0xff] %vm258, %v386
      %419 = vst.msk [vmem:[#allocation3 + $0x90] sm:$0xff] %vm258, %v387
      %420 = vst.msk [vmem:[#allocation3 + $0x98] sm:$0xff] %vm258, %v388
      %421 = vst.msk [vmem:[#allocation3 + $0xa0] sm:$0xff] %vm258, %v389
      %422 = vst.msk [vmem:[#allocation3 + $0xa8] sm:$0xff] %vm258, %v390
      %423 = vst.msk [vmem:[#allocation3 + $0xb0] sm:$0xff] %vm258, %v391
      %424 = vst.msk [vmem:[#allocation3 + $0xb8] sm:$0xff] %vm258, %v392
      %425 = vst.msk [vmem:[#allocation3 + $0xc0] sm:$0xff] %vm258, %v393
      %426 = vst.msk [vmem:[#allocation3 + $0xc8] sm:$0xff] %vm258, %v394
      %427 = vst.msk [vmem:[#allocation3 + $0xd0] sm:$0xff] %vm258, %v395
      %428 = vst.msk [vmem:[#allocation3 + $0xd8] sm:$0xff] %vm258, %v396
      %429 = vst.msk [vmem:[#allocation3 + $0xe0] sm:$0xff] %vm258, %v397
      %430 = vst.msk [vmem:[#allocation3 + $0xe8] sm:$0xff] %vm258, %v398
      %431 = vst.msk [vmem:[#allocation3 + $0xf0] sm:$0xff] %vm258, %v399
      %432 = vst.msk [vmem:[#allocation3 + $0xf8] sm:$0xff] %vm258, %v400
      %v433 = vld [vmem:[#allocation2 + $0x1] sm:$0xff]
      %v434 = vld [vmem:[#allocation2 + $0x9] sm:$0xff]
      %v435 = vld [vmem:[#allocation2 + $0x19] sm:$0xff]
      %v436 = vld [vmem:[#allocation2 + $0x21] sm:$0xff]
      %v437 = vld [vmem:[#allocation2 + $0x31] sm:$0xff]
      %v438 = vld [vmem:[#allocation2 + $0x39] sm:$0xff]
      %v439 = vld [vmem:[#allocation2 + $0x49] sm:$0xff]
      %v440 = vld [vmem:[#allocation2 + $0x51] sm:$0xff]
      %v441 = vld [vmem:[#allocation2 + $0x61] sm:$0xff]
      %v442 = vld [vmem:[#allocation2 + $0x69] sm:$0xff]
      %v443 = vld [vmem:[#allocation2 + $0x79] sm:$0xff]
      %v444 = vld [vmem:[#allocation2 + $0x81] sm:$0xff]
      %v445 = vld [vmem:[#allocation2 + $0x91] sm:$0xff]
      %v446 = vld [vmem:[#allocation2 + $0x99] sm:$0xff]
      %v447 = vld [vmem:[#allocation2 + $0xa9] sm:$0xff]
      %v448 = vld [vmem:[#allocation2 + $0xb1] sm:$0xff]
      %v449 = vld [vmem:[#allocation2 + $0xc1] sm:$0xff]
      %v450 = vld [vmem:[#allocation2 + $0xc9] sm:$0xff]
      %v451 = vld [vmem:[#allocation2 + $0xd9] sm:$0xff]
      %v452 = vld [vmem:[#allocation2 + $0xe1] sm:$0xff]
      %v453 = vld [vmem:[#allocation2 + $0xf1] sm:$0xff]
      %v454 = vld [vmem:[#allocation2 + $0xf9] sm:$0xff]
      %v455 = vld [vmem:[#allocation2 + $0x109] sm:$0xff]
      %v456 = vld [vmem:[#allocation2 + $0x111] sm:$0xff]
      %v457 = vld [vmem:[#allocation2 + $0x121] sm:$0xff]
      %v458 = vld [vmem:[#allocation2 + $0x129] sm:$0xff]
      %v459 = vld [vmem:[#allocation2 + $0x139] sm:$0xff]
      %v460 = vld [vmem:[#allocation2 + $0x141] sm:$0xff]
      %v461 = vld [vmem:[#allocation2 + $0x151] sm:$0xff]
      %v462 = vld [vmem:[#allocation2 + $0x159] sm:$0xff]
      %v463 = vld [vmem:[#allocation2 + $0x169] sm:$0xff]
      %v464 = vld [vmem:[#allocation2 + $0x171] sm:$0xff]
      %497 = vrot.lane.b32.xlu0 %v433, 4
      %v498 = vpop.permute.xlu0 %497
      %499 = vrot.lane.b32.xlu0 %v434, 4
      %v500 = vpop.permute.xlu0 %499
      %501 = vrot.lane.b32.xlu0 %v435, 4
      %v502 = vpop.permute.xlu0 %501
      %503 = vrot.lane.b32.xlu0 %v436, 4
      %v504 = vpop.permute.xlu0 %503
      %505 = vrot.lane.b32.xlu0 %v437, 4
      %v506 = vpop.permute.xlu0 %505
      %507 = vrot.lane.b32.xlu0 %v438, 4
      %v508 = vpop.permute.xlu0 %507
      %509 = vrot.lane.b32.xlu0 %v439, 4
      %v510 = vpop.permute.xlu0 %509
      %511 = vrot.lane.b32.xlu0 %v440, 4
      %v512 = vpop.permute.xlu0 %511
      %513 = vrot.lane.b32.xlu0 %v441, 4
      %v514 = vpop.permute.xlu0 %513
      %515 = vrot.lane.b32.xlu0 %v442, 4
      %v516 = vpop.permute.xlu0 %515
      %517 = vrot.lane.b32.xlu0 %v443, 4
      %v518 = vpop.permute.xlu0 %517
      %519 = vrot.lane.b32.xlu0 %v444, 4
      %v520 = vpop.permute.xlu0 %519
      %521 = vrot.lane.b32.xlu0 %v445, 4
      %v522 = vpop.permute.xlu0 %521
      %523 = vrot.lane.b32.xlu0 %v446, 4
      %v524 = vpop.permute.xlu0 %523
      %525 = vrot.lane.b32.xlu0 %v447, 4
      %v526 = vpop.permute.xlu0 %525
      %527 = vrot.lane.b32.xlu0 %v448, 4
      %v528 = vpop.permute.xlu0 %527
      %529 = vrot.lane.b32.xlu0 %v449, 4
      %v530 = vpop.permute.xlu0 %529
      %531 = vrot.lane.b32.xlu0 %v450, 4
      %v532 = vpop.permute.xlu0 %531
      %533 = vrot.lane.b32.xlu0 %v451, 4
      %v534 = vpop.permute.xlu0 %533
      %535 = vrot.lane.b32.xlu0 %v452, 4
      %v536 = vpop.permute.xlu0 %535
      %537 = vrot.lane.b32.xlu0 %v453, 4
      %v538 = vpop.permute.xlu0 %537
      %539 = vrot.lane.b32.xlu0 %v454, 4
      %v540 = vpop.permute.xlu0 %539
      %541 = vrot.lane.b32.xlu0 %v455, 4
      %v542 = vpop.permute.xlu0 %541
      %543 = vrot.lane.b32.xlu0 %v456, 4
      %v544 = vpop.permute.xlu0 %543
      %545 = vrot.lane.b32.xlu0 %v457, 4
      %v546 = vpop.permute.xlu0 %545
      %547 = vrot.lane.b32.xlu0 %v458, 4
      %v548 = vpop.permute.xlu0 %547
      %549 = vrot.lane.b32.xlu0 %v459, 4
      %v550 = vpop.permute.xlu0 %549
      %551 = vrot.lane.b32.xlu0 %v460, 4
      %v552 = vpop.permute.xlu0 %551
      %553 = vrot.lane.b32.xlu0 %v461, 4
      %v554 = vpop.permute.xlu0 %553
      %555 = vrot.lane.b32.xlu0 %v462, 4
      %v556 = vpop.permute.xlu0 %555
      %557 = vrot.lane.b32.xlu0 %v463, 4
      %v558 = vpop.permute.xlu0 %557
      %559 = vrot.lane.b32.xlu0 %v464, 4
      %v560 = vpop.permute.xlu0 %559
      %vm593 = vcmask 64544
      %594 = vst.msk [vmem:[#allocation3] sm:$0xff] %vm593, %v498
      %595 = vst.msk [vmem:[#allocation3 + $0x8] sm:$0xff] %vm593, %v500
      %596 = vst.msk [vmem:[#allocation3 + $0x10] sm:$0xff] %vm593, %v502
      %597 = vst.msk [vmem:[#allocation3 + $0x18] sm:$0xff] %vm593, %v504
      %598 = vst.msk [vmem:[#allocation3 + $0x20] sm:$0xff] %vm593, %v506
      %599 = vst.msk [vmem:[#allocation3 + $0x28] sm:$0xff] %vm593, %v508
      %600 = vst.msk [vmem:[#allocation3 + $0x30] sm:$0xff] %vm593, %v510
      %601 = vst.msk [vmem:[#allocation3 + $0x38] sm:$0xff] %vm593, %v512
      %602 = vst.msk [vmem:[#allocation3 + $0x40] sm:$0xff] %vm593, %v514
      %603 = vst.msk [vmem:[#allocation3 + $0x48] sm:$0xff] %vm593, %v516
      %604 = vst.msk [vmem:[#allocation3 + $0x50] sm:$0xff] %vm593, %v518
      %605 = vst.msk [vmem:[#allocation3 + $0x58] sm:$0xff] %vm593, %v520
      %606 = vst.msk [vmem:[#allocation3 + $0x60] sm:$0xff] %vm593, %v522
      %607 = vst.msk [vmem:[#allocation3 + $0x68] sm:$0xff] %vm593, %v524
      %608 = vst.msk [vmem:[#allocation3 + $0x70] sm:$0xff] %vm593, %v526
      %609 = vst.msk [vmem:[#allocation3 + $0x78] sm:$0xff] %vm593, %v528
      %610 = vst.msk [vmem:[#allocation3 + $0x80] sm:$0xff] %vm593, %v530
      %611 = vst.msk [vmem:[#allocation3 + $0x88] sm:$0xff] %vm593, %v532
      %612 = vst.msk [vmem:[#allocation3 + $0x90] sm:$0xff] %vm593, %v534
      %613 = vst.msk [vmem:[#allocation3 + $0x98] sm:$0xff] %vm593, %v536
      %614 = vst.msk [vmem:[#allocation3 + $0xa0] sm:$0xff] %vm593, %v538
      %615 = vst.msk [vmem:[#allocation3 + $0xa8] sm:$0xff] %vm593, %v540
      %616 = vst.msk [vmem:[#allocation3 + $0xb0] sm:$0xff] %vm593, %v542
      %617 = vst.msk [vmem:[#allocation3 + $0xb8] sm:$0xff] %vm593, %v544
      %618 = vst.msk [vmem:[#allocation3 + $0xc0] sm:$0xff] %vm593, %v546
      %619 = vst.msk [vmem:[#allocation3 + $0xc8] sm:$0xff] %vm593, %v548
      %620 = vst.msk [vmem:[#allocation3 + $0xd0] sm:$0xff] %vm593, %v550
      %621 = vst.msk [vmem:[#allocation3 + $0xd8] sm:$0xff] %vm593, %v552
      %622 = vst.msk [vmem:[#allocation3 + $0xe0] sm:$0xff] %vm593, %v554
      %623 = vst.msk [vmem:[#allocation3 + $0xe8] sm:$0xff] %vm593, %v556
      %624 = vst.msk [vmem:[#allocation3 + $0xf0] sm:$0xff] %vm593, %v558
      %625 = vst.msk [vmem:[#allocation3 + $0xf8] sm:$0xff] %vm593, %v560
      %v626 = vld [vmem:[#allocation2 + $0x2] sm:$0xff]
      %v627 = vld [vmem:[#allocation2 + $0xa] sm:$0xff]
      %v628 = vld [vmem:[#allocation2 + $0x1a] sm:$0xff]
      %v629 = vld [vmem:[#allocation2 + $0x22] sm:$0xff]
      %v630 = vld [vmem:[#allocation2 + $0x32] sm:$0xff]
      %v631 = vld [vmem:[#allocation2 + $0x3a] sm:$0xff]
      %v632 = vld [vmem:[#allocation2 + $0x4a] sm:$0xff]
      %v633 = vld [vmem:[#allocation2 + $0x52] sm:$0xff]
      %v634 = vld [vmem:[#allocation2 + $0x62] sm:$0xff]
      %v635 = vld [vmem:[#allocation2 + $0x6a] sm:$0xff]
      %v636 = vld [vmem:[#allocation2 + $0x7a] sm:$0xff]
      %v637 = vld [vmem:[#allocation2 + $0x82] sm:$0xff]
      %v638 = vld [vmem:[#allocation2 + $0x92] sm:$0xff]
      %v639 = vld [vmem:[#allocation2 + $0x9a] sm:$0xff]
      %v640 = vld [vmem:[#allocation2 + $0xaa] sm:$0xff]
      %v641 = vld [vmem:[#allocation2 + $0xb2] sm:$0xff]
      %v642 = vld [vmem:[#allocation2 + $0xc2] sm:$0xff]
      %v643 = vld [vmem:[#allocation2 + $0xca] sm:$0xff]
      %v644 = vld [vmem:[#allocation2 + $0xda] sm:$0xff]
      %v645 = vld [vmem:[#allocation2 + $0xe2] sm:$0xff]
      %v646 = vld [vmem:[#allocation2 + $0xf2] sm:$0xff]
      %v647 = vld [vmem:[#allocation2 + $0xfa] sm:$0xff]
      %v648 = vld [vmem:[#allocation2 + $0x10a] sm:$0xff]
      %v649 = vld [vmem:[#allocation2 + $0x112] sm:$0xff]
      %v650 = vld [vmem:[#allocation2 + $0x122] sm:$0xff]
      %v651 = vld [vmem:[#allocation2 + $0x12a] sm:$0xff]
      %v652 = vld [vmem:[#allocation2 + $0x13a] sm:$0xff]
      %v653 = vld [vmem:[#allocation2 + $0x142] sm:$0xff]
      %v654 = vld [vmem:[#allocation2 + $0x152] sm:$0xff]
      %v655 = vld [vmem:[#allocation2 + $0x15a] sm:$0xff]
      %v656 = vld [vmem:[#allocation2 + $0x16a] sm:$0xff]
      %v657 = vld [vmem:[#allocation2 + $0x172] sm:$0xff]
      %690 = vrot.lane.b32.xlu0 %v626, 8
      %v691 = vpop.permute.xlu0 %690
      %692 = vrot.lane.b32.xlu0 %v627, 8
      %v693 = vpop.permute.xlu0 %692
      %694 = vrot.lane.b32.xlu0 %v628, 8
      %v695 = vpop.permute.xlu0 %694
      %696 = vrot.lane.b32.xlu0 %v629, 8
      %v697 = vpop.permute.xlu0 %696
      %698 = vrot.lane.b32.xlu0 %v630, 8
      %v699 = vpop.permute.xlu0 %698
      %700 = vrot.lane.b32.xlu0 %v631, 8
      %v701 = vpop.permute.xlu0 %700
      %702 = vrot.lane.b32.xlu0 %v632, 8
      %v703 = vpop.permute.xlu0 %702
      %704 = vrot.lane.b32.xlu0 %v633, 8
      %v705 = vpop.permute.xlu0 %704
      %706 = vrot.lane.b32.xlu0 %v634, 8
      %v707 = vpop.permute.xlu0 %706
      %708 = vrot.lane.b32.xlu0 %v635, 8
      %v709 = vpop.permute.xlu0 %708
      %710 = vrot.lane.b32.xlu0 %v636, 8
      %v711 = vpop.permute.xlu0 %710
      %712 = vrot.lane.b32.xlu0 %v637, 8
      %v713 = vpop.permute.xlu0 %712
      %714 = vrot.lane.b32.xlu0 %v638, 8
      %v715 = vpop.permute.xlu0 %714
      %716 = vrot.lane.b32.xlu0 %v639, 8
      %v717 = vpop.permute.xlu0 %716
      %718 = vrot.lane.b32.xlu0 %v640, 8
      %v719 = vpop.permute.xlu0 %718
      %720 = vrot.lane.b32.xlu0 %v641, 8
      %v721 = vpop.permute.xlu0 %720
      %722 = vrot.lane.b32.xlu0 %v642, 8
      %v723 = vpop.permute.xlu0 %722
      %724 = vrot.lane.b32.xlu0 %v643, 8
      %v725 = vpop.permute.xlu0 %724
      %726 = vrot.lane.b32.xlu0 %v644, 8
      %v727 = vpop.permute.xlu0 %726
      %728 = vrot.lane.b32.xlu0 %v645, 8
      %v729 = vpop.permute.xlu0 %728
      %730 = vrot.lane.b32.xlu0 %v646, 8
      %v731 = vpop.permute.xlu0 %730
      %732 = vrot.lane.b32.xlu0 %v647, 8
      %v733 = vpop.permute.xlu0 %732
      %734 = vrot.lane.b32.xlu0 %v648, 8
      %v735 = vpop.permute.xlu0 %734
      %736 = vrot.lane.b32.xlu0 %v649, 8
      %v737 = vpop.permute.xlu0 %736
      %738 = vrot.lane.b32.xlu0 %v650, 8
      %v739 = vpop.permute.xlu0 %738
      %740 = vrot.lane.b32.xlu0 %v651, 8
      %v741 = vpop.permute.xlu0 %740
      %742 = vrot.lane.b32.xlu0 %v652, 8
      %v743 = vpop.permute.xlu0 %742
      %744 = vrot.lane.b32.xlu0 %v653, 8
      %v745 = vpop.permute.xlu0 %744
      %746 = vrot.lane.b32.xlu0 %v654, 8
      %v747 = vpop.permute.xlu0 %746
      %748 = vrot.lane.b32.xlu0 %v655, 8
      %v749 = vpop.permute.xlu0 %748
      %750 = vrot.lane.b32.xlu0 %v656, 8
      %v751 = vpop.permute.xlu0 %750
      %752 = vrot.lane.b32.xlu0 %v657, 8
      %v753 = vpop.permute.xlu0 %752
      %vm786 = vcmask 97344
      %787 = vst.msk [vmem:[#allocation3] sm:$0xff] %vm786, %v691
      %788 = vst.msk [vmem:[#allocation3 + $0x8] sm:$0xff] %vm786, %v693
      %789 = vst.msk [vmem:[#allocation3 + $0x10] sm:$0xff] %vm786, %v695
      %790 = vst.msk [vmem:[#allocation3 + $0x18] sm:$0xff] %vm786, %v697
      %791 = vst.msk [vmem:[#allocation3 + $0x20] sm:$0xff] %vm786, %v699
      %792 = vst.msk [vmem:[#allocation3 + $0x28] sm:$0xff] %vm786, %v701
      %793 = vst.msk [vmem:[#allocation3 + $0x30] sm:$0xff] %vm786, %v703
      %794 = vst.msk [vmem:[#allocation3 + $0x38] sm:$0xff] %vm786, %v705
      %795 = vst.msk [vmem:[#allocation3 + $0x40] sm:$0xff] %vm786, %v707
      %796 = vst.msk [vmem:[#allocation3 + $0x48] sm:$0xff] %vm786, %v709
      %797 = vst.msk [vmem:[#allocation3 + $0x50] sm:$0xff] %vm786, %v711
      %798 = vst.msk [vmem:[#allocation3 + $0x58] sm:$0xff] %vm786, %v713
      %799 = vst.msk [vmem:[#allocation3 + $0x60] sm:$0xff] %vm786, %v715
      %800 = vst.msk [vmem:[#allocation3 + $0x68] sm:$0xff] %vm786, %v717
      %801 = vst.msk [vmem:[#allocation3 + $0x70] sm:$0xff] %vm786, %v719
      %802 = vst.msk [vmem:[#allocation3 + $0x78] sm:$0xff] %vm786, %v721
      %803 = vst.msk [vmem:[#allocation3 + $0x80] sm:$0xff] %vm786, %v723
      %804 = vst.msk [vmem:[#allocation3 + $0x88] sm:$0xff] %vm786, %v725
      %805 = vst.msk [vmem:[#allocation3 + $0x90] sm:$0xff] %vm786, %v727
      %806 = vst.msk [vmem:[#allocation3 + $0x98] sm:$0xff] %vm786, %v729
      %807 = vst.msk [vmem:[#allocation3 + $0xa0] sm:$0xff] %vm786, %v731
      %808 = vst.msk [vmem:[#allocation3 + $0xa8] sm:$0xff] %vm786, %v733
      %809 = vst.msk [vmem:[#allocation3 + $0xb0] sm:$0xff] %vm786, %v735
      %810 = vst.msk [vmem:[#allocation3 + $0xb8] sm:$0xff] %vm786, %v737
      %811 = vst.msk [vmem:[#allocation3 + $0xc0] sm:$0xff] %vm786, %v739
      %812 = vst.msk [vmem:[#allocation3 + $0xc8] sm:$0xff] %vm786, %v741
      %813 = vst.msk [vmem:[#allocation3 + $0xd0] sm:$0xff] %vm786, %v743
      %814 = vst.msk [vmem:[#allocation3 + $0xd8] sm:$0xff] %vm786, %v745
      %815 = vst.msk [vmem:[#allocation3 + $0xe0] sm:$0xff] %vm786, %v747
      %816 = vst.msk [vmem:[#allocation3 + $0xe8] sm:$0xff] %vm786, %v749
      %817 = vst.msk [vmem:[#allocation3 + $0xf0] sm:$0xff] %vm786, %v751
      %818 = vst.msk [vmem:[#allocation3 + $0xf8] sm:$0xff] %vm786, %v753
      %v819 = vld [vmem:[%s257] sm:$0xff]
      %v820 = vld [vmem:[%s257 + $0x8] sm:$0xff]
      %v821 = vld [vmem:[%s257 + $0x18] sm:$0xff]
      %v822 = vld [vmem:[%s257 + $0x20] sm:$0xff]
      %v823 = vld [vmem:[%s257 + $0x30] sm:$0xff]
      %v824 = vld [vmem:[%s257 + $0x38] sm:$0xff]
      %v825 = vld [vmem:[%s257 + $0x48] sm:$0xff]
      %v826 = vld [vmem:[%s257 + $0x50] sm:$0xff]
      %v827 = vld [vmem:[%s257 + $0x60] sm:$0xff]
      %v828 = vld [vmem:[%s257 + $0x68] sm:$0xff]
      %v829 = vld [vmem:[%s257 + $0x78] sm:$0xff]
      %v830 = vld [vmem:[%s257 + $0x80] sm:$0xff]
      %v831 = vld [vmem:[%s257 + $0x90] sm:$0xff]
      %v832 = vld [vmem:[%s257 + $0x98] sm:$0xff]
      %v833 = vld [vmem:[%s257 + $0xa8] sm:$0xff]
      %v834 = vld [vmem:[%s257 + $0xb0] sm:$0xff]
      %v835 = vld [vmem:[%s257 + $0xc0] sm:$0xff]
      %v836 = vld [vmem:[%s257 + $0xc8] sm:$0xff]
      %v837 = vld [vmem:[%s257 + $0xd8] sm:$0xff]
      %v838 = vld [vmem:[%s257 + $0xe0] sm:$0xff]
      %v839 = vld [vmem:[%s257 + $0xf0] sm:$0xff]
      %v840 = vld [vmem:[%s257 + $0xf8] sm:$0xff]
      %v841 = vld [vmem:[%s257 + $0x108] sm:$0xff]
      %v842 = vld [vmem:[%s257 + $0x110] sm:$0xff]
      %v843 = vld [vmem:[%s257 + $0x120] sm:$0xff]
      %v844 = vld [vmem:[%s257 + $0x128] sm:$0xff]
      %v845 = vld [vmem:[%s257 + $0x138] sm:$0xff]
      %v846 = vld [vmem:[%s257 + $0x140] sm:$0xff]
      %v847 = vld [vmem:[%s257 + $0x150] sm:$0xff]
      %v848 = vld [vmem:[%s257 + $0x158] sm:$0xff]
      %v849 = vld [vmem:[%s257 + $0x168] sm:$0xff]
      %v850 = vld [vmem:[%s257 + $0x170] sm:$0xff]
      %883 = vrot.lane.b32.xlu0 %v819, 12
      %v884 = vpop.permute.xlu0 %883
      %885 = vrot.lane.b32.xlu0 %v820, 12
      %v886 = vpop.permute.xlu0 %885
      %887 = vrot.lane.b32.xlu0 %v821, 12
      %v888 = vpop.permute.xlu0 %887
      %889 = vrot.lane.b32.xlu0 %v822, 12
      %v890 = vpop.permute.xlu0 %889
      %891 = vrot.lane.b32.xlu0 %v823, 12
      %v892 = vpop.permute.xlu0 %891
      %893 = vrot.lane.b32.xlu0 %v824, 12
      %v894 = vpop.permute.xlu0 %893
      %895 = vrot.lane.b32.xlu0 %v825, 12
      %v896 = vpop.permute.xlu0 %895
      %897 = vrot.lane.b32.xlu0 %v826, 12
      %v898 = vpop.permute.xlu0 %897
      %899 = vrot.lane.b32.xlu0 %v827, 12
      %v900 = vpop.permute.xlu0 %899
      %901 = vrot.lane.b32.xlu0 %v828, 12
      %v902 = vpop.permute.xlu0 %901
      %903 = vrot.lane.b32.xlu0 %v829, 12
      %v904 = vpop.permute.xlu0 %903
      %905 = vrot.lane.b32.xlu0 %v830, 12
      %v906 = vpop.permute.xlu0 %905
      %907 = vrot.lane.b32.xlu0 %v831, 12
      %v908 = vpop.permute.xlu0 %907
      %909 = vrot.lane.b32.xlu0 %v832, 12
      %v910 = vpop.permute.xlu0 %909
      %911 = vrot.lane.b32.xlu0 %v833, 12
      %v912 = vpop.permute.xlu0 %911
      %913 = vrot.lane.b32.xlu0 %v834, 12
      %v914 = vpop.permute.xlu0 %913
      %915 = vrot.lane.b32.xlu0 %v835, 12
      %v916 = vpop.permute.xlu0 %915
      %917 = vrot.lane.b32.xlu0 %v836, 12
      %v918 = vpop.permute.xlu0 %917
      %919 = vrot.lane.b32.xlu0 %v837, 12
      %v920 = vpop.permute.xlu0 %919
      %921 = vrot.lane.b32.xlu0 %v838, 12
      %v922 = vpop.permute.xlu0 %921
      %923 = vrot.lane.b32.xlu0 %v839, 12
      %v924 = vpop.permute.xlu0 %923
      %925 = vrot.lane.b32.xlu0 %v840, 12
      %v926 = vpop.permute.xlu0 %925
      %927 = vrot.lane.b32.xlu0 %v841, 12
      %v928 = vpop.permute.xlu0 %927
      %929 = vrot.lane.b32.xlu0 %v842, 12
      %v930 = vpop.permute.xlu0 %929
      %931 = vrot.lane.b32.xlu0 %v843, 12
      %v932 = vpop.permute.xlu0 %931
      %933 = vrot.lane.b32.xlu0 %v844, 12
      %v934 = vpop.permute.xlu0 %933
      %935 = vrot.lane.b32.xlu0 %v845, 12
      %v936 = vpop.permute.xlu0 %935
      %937 = vrot.lane.b32.xlu0 %v846, 12
      %v938 = vpop.permute.xlu0 %937
      %939 = vrot.lane.b32.xlu0 %v847, 12
      %v940 = vpop.permute.xlu0 %939
      %941 = vrot.lane.b32.xlu0 %v848, 12
      %v942 = vpop.permute.xlu0 %941
      %943 = vrot.lane.b32.xlu0 %v849, 12
      %v944 = vpop.permute.xlu0 %943
      %945 = vrot.lane.b32.xlu0 %v850, 12
      %v946 = vpop.permute.xlu0 %945
      %vm979 = vcmask 130144
      %980 = vst.msk [vmem:[#allocation3] sm:$0xff] %vm979, %v884
      %981 = vst.msk [vmem:[#allocation3 + $0x8] sm:$0xff] %vm979, %v886
      %982 = vst.msk [vmem:[#allocation3 + $0x10] sm:$0xff] %vm979, %v888
      %983 = vst.msk [vmem:[#allocation3 + $0x18] sm:$0xff] %vm979, %v890
      %984 = vst.msk [vmem:[#allocation3 + $0x20] sm:$0xff] %vm979, %v892
      %985 = vst.msk [vmem:[#allocation3 + $0x28] sm:$0xff] %vm979, %v894
      %986 = vst.msk [vmem:[#allocation3 + $0x30] sm:$0xff] %vm979, %v896
      %987 = vst.msk [vmem:[#allocation3 + $0x38] sm:$0xff] %vm979, %v898
      %988 = vst.msk [vmem:[#allocation3 + $0x40] sm:$0xff] %vm979, %v900
      %989 = vst.msk [vmem:[#allocation3 + $0x48] sm:$0xff] %vm979, %v902
      %990 = vst.msk [vmem:[#allocation3 + $0x50] sm:$0xff] %vm979, %v904
      %991 = vst.msk [vmem:[#allocation3 + $0x58] sm:$0xff] %vm979, %v906
      %992 = vst.msk [vmem:[#allocation3 + $0x60] sm:$0xff] %vm979, %v908
      %993 = vst.msk [vmem:[#allocation3 + $0x68] sm:$0xff] %vm979, %v910
      %994 = vst.msk [vmem:[#allocation3 + $0x70] sm:$0xff] %vm979, %v912
      %995 = vst.msk [vmem:[#allocation3 + $0x78] sm:$0xff] %vm979, %v914
      %996 = vst.msk [vmem:[#allocation3 + $0x80] sm:$0xff] %vm979, %v916
      %997 = vst.msk [vmem:[#allocation3 + $0x88] sm:$0xff] %vm979, %v918
      %998 = vst.msk [vmem:[#allocation3 + $0x90] sm:$0xff] %vm979, %v920
      %999 = vst.msk [vmem:[#allocation3 + $0x98] sm:$0xff] %vm979, %v922
      %1000 = vst.msk [vmem:[#allocation3 + $0xa0] sm:$0xff] %vm979, %v924
      %1001 = vst.msk [vmem:[#allocation3 + $0xa8] sm:$0xff] %vm979, %v926
      %1002 = vst.msk [vmem:[#allocation3 + $0xb0] sm:$0xff] %vm979, %v928
      %1003 = vst.msk [vmem:[#allocation3 + $0xb8] sm:$0xff] %vm979, %v930
      %1004 = vst.msk [vmem:[#allocation3 + $0xc0] sm:$0xff] %vm979, %v932
      %1005 = vst.msk [vmem:[#allocation3 + $0xc8] sm:$0xff] %vm979, %v934
      %1006 = vst.msk [vmem:[#allocation3 + $0xd0] sm:$0xff] %vm979, %v936
      %1007 = vst.msk [vmem:[#allocation3 + $0xd8] sm:$0xff] %vm979, %v938
      %1008 = vst.msk [vmem:[#allocation3 + $0xe0] sm:$0xff] %vm979, %v940
      %1009 = vst.msk [vmem:[#allocation3 + $0xe8] sm:$0xff] %vm979, %v942
      %1010 = vst.msk [vmem:[#allocation3 + $0xf0] sm:$0xff] %vm979, %v944
      %1011 = vst.msk [vmem:[#allocation3 + $0xf8] sm:$0xff] %vm979, %v946
      %v1012 = vld [vmem:[%s257 + $0x1] sm:$0xff]
      %v1013 = vld [vmem:[%s257 + $0x9] sm:$0xff]
      %v1014 = vld [vmem:[%s257 + $0x19] sm:$0xff]
      %v1015 = vld [vmem:[%s257 + $0x21] sm:$0xff]
      %v1016 = vld [vmem:[%s257 + $0x31] sm:$0xff]
      %v1017 = vld [vmem:[%s257 + $0x39] sm:$0xff]
      %v1018 = vld [vmem:[%s257 + $0x49] sm:$0xff]
      %v1019 = vld [vmem:[%s257 + $0x51] sm:$0xff]
      %v1020 = vld [vmem:[%s257 + $0x61] sm:$0xff]
      %v1021 = vld [vmem:[%s257 + $0x69] sm:$0xff]
      %v1022 = vld [vmem:[%s257 + $0x79] sm:$0xff]
      %v1023 = vld [vmem:[%s257 + $0x81] sm:$0xff]
      %v1024 = vld [vmem:[%s257 + $0x91] sm:$0xff]
      %v1025 = vld [vmem:[%s257 + $0x99] sm:$0xff]
      %v1026 = vld [vmem:[%s257 + $0xa9] sm:$0xff]
      %v1027 = vld [vmem:[%s257 + $0xb1] sm:$0xff]
      %v1028 = vld [vmem:[%s257 + $0xc1] sm:$0xff]
      %v1029 = vld [vmem:[%s257 + $0xc9] sm:$0xff]
      %v1030 = vld [vmem:[%s257 + $0xd9] sm:$0xff]
      %v1031 = vld [vmem:[%s257 + $0xe1] sm:$0xff]
      %v1032 = vld [vmem:[%s257 + $0xf1] sm:$0xff]
      %v1033 = vld [vmem:[%s257 + $0xf9] sm:$0xff]
      %v1034 = vld [vmem:[%s257 + $0x109] sm:$0xff]
      %v1035 = vld [vmem:[%s257 + $0x111] sm:$0xff]
      %v1036 = vld [vmem:[%s257 + $0x121] sm:$0xff]
      %v1037 = vld [vmem:[%s257 + $0x129] sm:$0xff]
      %v1038 = vld [vmem:[%s257 + $0x139] sm:$0xff]
      %v1039 = vld [vmem:[%s257 + $0x141] sm:$0xff]
      %v1040 = vld [vmem:[%s257 + $0x151] sm:$0xff]
      %v1041 = vld [vmem:[%s257 + $0x159] sm:$0xff]
      %v1042 = vld [vmem:[%s257 + $0x169] sm:$0xff]
      %v1043 = vld [vmem:[%s257 + $0x171] sm:$0xff]
      %1076 = vrot.lane.b32.xlu0 %v1012, 16
      %v1077 = vpop.permute.xlu0 %1076
      %1078 = vrot.lane.b32.xlu0 %v1013, 16
      %v1079 = vpop.permute.xlu0 %1078
      %1080 = vrot.lane.b32.xlu0 %v1014, 16
      %v1081 = vpop.permute.xlu0 %1080
      %1082 = vrot.lane.b32.xlu0 %v1015, 16
      %v1083 = vpop.permute.xlu0 %1082
      %1084 = vrot.lane.b32.xlu0 %v1016, 16
      %v1085 = vpop.permute.xlu0 %1084
      %1086 = vrot.lane.b32.xlu0 %v1017, 16
      %v1087 = vpop.permute.xlu0 %1086
      %1088 = vrot.lane.b32.xlu0 %v1018, 16
      %v1089 = vpop.permute.xlu0 %1088
      %1090 = vrot.lane.b32.xlu0 %v1019, 16
      %v1091 = vpop.permute.xlu0 %1090
      %1092 = vrot.lane.b32.xlu0 %v1020, 16
      %v1093 = vpop.permute.xlu0 %1092
      %1094 = vrot.lane.b32.xlu0 %v1021, 16
      %v1095 = vpop.permute.xlu0 %1094
      %1096 = vrot.lane.b32.xlu0 %v1022, 16
      %v1097 = vpop.permute.xlu0 %1096
      %1098 = vrot.lane.b32.xlu0 %v1023, 16
      %v1099 = vpop.permute.xlu0 %1098
      %1100 = vrot.lane.b32.xlu0 %v1024, 16
      %v1101 = vpop.permute.xlu0 %1100
      %1102 = vrot.lane.b32.xlu0 %v1025, 16
      %v1103 = vpop.permute.xlu0 %1102
      %1104 = vrot.lane.b32.xlu0 %v1026, 16
      %v1105 = vpop.permute.xlu0 %1104
      %1106 = vrot.lane.b32.xlu0 %v1027, 16
      %v1107 = vpop.permute.xlu0 %1106
      %1108 = vrot.lane.b32.xlu0 %v1028, 16
      %v1109 = vpop.permute.xlu0 %1108
      %1110 = vrot.lane.b32.xlu0 %v1029, 16
      %v1111 = vpop.permute.xlu0 %1110
      %1112 = vrot.lane.b32.xlu0 %v1030, 16
      %v1113 = vpop.permute.xlu0 %1112
      %1114 = vrot.lane.b32.xlu0 %v1031, 16
      %v1115 = vpop.permute.xlu0 %1114
      %1116 = vrot.lane.b32.xlu0 %v1032, 16
      %v1117 = vpop.permute.xlu0 %1116
      %1118 = vrot.lane.b32.xlu0 %v1033, 16
      %v1119 = vpop.permute.xlu0 %1118
      %1120 = vrot.lane.b32.xlu0 %v1034, 16
      %v1121 = vpop.permute.xlu0 %1120
      %1122 = vrot.lane.b32.xlu0 %v1035, 16
      %v1123 = vpop.permute.xlu0 %1122
      %1124 = vrot.lane.b32.xlu0 %v1036, 16
      %v1125 = vpop.permute.xlu0 %1124
      %1126 = vrot.lane.b32.xlu0 %v1037, 16
      %v1127 = vpop.permute.xlu0 %1126
      %1128 = vrot.lane.b32.xlu0 %v1038, 16
      %v1129 = vpop.permute.xlu0 %1128
      %1130 = vrot.lane.b32.xlu0 %v1039, 16
      %v1131 = vpop.permute.xlu0 %1130
      %1132 = vrot.lane.b32.xlu0 %v1040, 16
      %v1133 = vpop.permute.xlu0 %1132
      %1134 = vrot.lane.b32.xlu0 %v1041, 16
      %v1135 = vpop.permute.xlu0 %1134
      %1136 = vrot.lane.b32.xlu0 %v1042, 16
      %v1137 = vpop.permute.xlu0 %1136
      %1138 = vrot.lane.b32.xlu0 %v1043, 16
      %v1139 = vpop.permute.xlu0 %1138
      %vm1172 = vcmask 162944
      %1173 = vst.msk [vmem:[#allocation3] sm:$0xff] %vm1172, %v1077
      %1174 = vst.msk [vmem:[#allocation3 + $0x8] sm:$0xff] %vm1172, %v1079
      %1175 = vst.msk [vmem:[#allocation3 + $0x10] sm:$0xff] %vm1172, %v1081
      %1176 = vst.msk [vmem:[#allocation3 + $0x18] sm:$0xff] %vm1172, %v1083
      %1177 = vst.msk [vmem:[#allocation3 + $0x20] sm:$0xff] %vm1172, %v1085
      %1178 = vst.msk [vmem:[#allocation3 + $0x28] sm:$0xff] %vm1172, %v1087
      %1179 = vst.msk [vmem:[#allocation3 + $0x30] sm:$0xff] %vm1172, %v1089
      %1180 = vst.msk [vmem:[#allocation3 + $0x38] sm:$0xff] %vm1172, %v1091
      %1181 = vst.msk [vmem:[#allocation3 + $0x40] sm:$0xff] %vm1172, %v1093
      %1182 = vst.msk [vmem:[#allocation3 + $0x48] sm:$0xff] %vm1172, %v1095
      %1183 = vst.msk [vmem:[#allocation3 + $0x50] sm:$0xff] %vm1172, %v1097
      %1184 = vst.msk [vmem:[#allocation3 + $0x58] sm:$0xff] %vm1172, %v1099
      %1185 = vst.msk [vmem:[#allocation3 + $0x60] sm:$0xff] %vm1172, %v1101
      %1186 = vst.msk [vmem:[#allocation3 + $0x68] sm:$0xff] %vm1172, %v1103
      %1187 = vst.msk [vmem:[#allocation3 + $0x70] sm:$0xff] %vm1172, %v1105
      %1188 = vst.msk [vmem:[#allocation3 + $0x78] sm:$0xff] %vm1172, %v1107
      %1189 = vst.msk [vmem:[#allocation3 + $0x80] sm:$0xff] %vm1172, %v1109
      %1190 = vst.msk [vmem:[#allocation3 + $0x88] sm:$0xff] %vm1172, %v1111
      %1191 = vst.msk [vmem:[#allocation3 + $0x90] sm:$0xff] %vm1172, %v1113
      %1192 = vst.msk [vmem:[#allocation3 + $0x98] sm:$0xff] %vm1172, %v1115
      %1193 = vst.msk [vmem:[#allocation3 + $0xa0] sm:$0xff] %vm1172, %v1117
      %1194 = vst.msk [vmem:[#allocation3 + $0xa8] sm:$0xff] %vm1172, %v1119
      %1195 = vst.msk [vmem:[#allocation3 + $0xb0] sm:$0xff] %vm1172, %v1121
      %1196 = vst.msk [vmem:[#allocation3 + $0xb8] sm:$0xff] %vm1172, %v1123
      %1197 = vst.msk [vmem:[#allocation3 + $0xc0] sm:$0xff] %vm1172, %v1125
      %1198 = vst.msk [vmem:[#allocation3 + $0xc8] sm:$0xff] %vm1172, %v1127
      %1199 = vst.msk [vmem:[#allocation3 + $0xd0] sm:$0xff] %vm1172, %v1129
      %1200 = vst.msk [vmem:[#allocation3 + $0xd8] sm:$0xff] %vm1172, %v1131
      %1201 = vst.msk [vmem:[#allocation3 + $0xe0] sm:$0xff] %vm1172, %v1133
      %1202 = vst.msk [vmem:[#allocation3 + $0xe8] sm:$0xff] %vm1172, %v1135
      %1203 = vst.msk [vmem:[#allocation3 + $0xf0] sm:$0xff] %vm1172, %v1137
      %1204 = vst.msk [vmem:[#allocation3 + $0xf8] sm:$0xff] %vm1172, %v1139
      %v1205 = vld [vmem:[%s257 + $0x2] sm:$0xff]
      %v1206 = vld [vmem:[%s257 + $0xa] sm:$0xff]
      %v1207 = vld [vmem:[%s257 + $0x1a] sm:$0xff]
      %v1208 = vld [vmem:[%s257 + $0x22] sm:$0xff]
      %v1209 = vld [vmem:[%s257 + $0x32] sm:$0xff]
      %v1210 = vld [vmem:[%s257 + $0x3a] sm:$0xff]
      %v1211 = vld [vmem:[%s257 + $0x4a] sm:$0xff]
      %v1212 = vld [vmem:[%s257 + $0x52] sm:$0xff]
      %v1213 = vld [vmem:[%s257 + $0x62] sm:$0xff]
      %v1214 = vld [vmem:[%s257 + $0x6a] sm:$0xff]
      %v1215 = vld [vmem:[%s257 + $0x7a] sm:$0xff]
      %v1216 = vld [vmem:[%s257 + $0x82] sm:$0xff]
      %v1217 = vld [vmem:[%s257 + $0x92] sm:$0xff]
      %v1218 = vld [vmem:[%s257 + $0x9a] sm:$0xff]
      %v1219 = vld [vmem:[%s257 + $0xaa] sm:$0xff]
      %v1220 = vld [vmem:[%s257 + $0xb2] sm:$0xff]
      %v1221 = vld [vmem:[%s257 + $0xc2] sm:$0xff]
      %v1222 = vld [vmem:[%s257 + $0xca] sm:$0xff]
      %v1223 = vld [vmem:[%s257 + $0xda] sm:$0xff]
      %v1224 = vld [vmem:[%s257 + $0xe2] sm:$0xff]
      %v1225 = vld [vmem:[%s257 + $0xf2] sm:$0xff]
      %v1226 = vld [vmem:[%s257 + $0xfa] sm:$0xff]
      %v1227 = vld [vmem:[%s257 + $0x10a] sm:$0xff]
      %v1228 = vld [vmem:[%s257 + $0x112] sm:$0xff]
      %v1229 = vld [vmem:[%s257 + $0x122] sm:$0xff]
      %v1230 = vld [vmem:[%s257 + $0x12a] sm:$0xff]
      %v1231 = vld [vmem:[%s257 + $0x13a] sm:$0xff]
      %v1232 = vld [vmem:[%s257 + $0x142] sm:$0xff]
      %v1233 = vld [vmem:[%s257 + $0x152] sm:$0xff]
      %v1234 = vld [vmem:[%s257 + $0x15a] sm:$0xff]
      %v1235 = vld [vmem:[%s257 + $0x16a] sm:$0xff]
      %v1236 = vld [vmem:[%s257 + $0x172] sm:$0xff]
      %1269 = vrot.lane.b32.xlu0 %v1205, 20
      %v1270 = vpop.permute.xlu0 %1269
      %1271 = vrot.lane.b32.xlu0 %v1206, 20
      %v1272 = vpop.permute.xlu0 %1271
      %1273 = vrot.lane.b32.xlu0 %v1207, 20
      %v1274 = vpop.permute.xlu0 %1273
      %1275 = vrot.lane.b32.xlu0 %v1208, 20
      %v1276 = vpop.permute.xlu0 %1275
      %1277 = vrot.lane.b32.xlu0 %v1209, 20
      %v1278 = vpop.permute.xlu0 %1277
      %1279 = vrot.lane.b32.xlu0 %v1210, 20
      %v1280 = vpop.permute.xlu0 %1279
      %1281 = vrot.lane.b32.xlu0 %v1211, 20
      %v1282 = vpop.permute.xlu0 %1281
      %1283 = vrot.lane.b32.xlu0 %v1212, 20
      %v1284 = vpop.permute.xlu0 %1283
      %1285 = vrot.lane.b32.xlu0 %v1213, 20
      %v1286 = vpop.permute.xlu0 %1285
      %1287 = vrot.lane.b32.xlu0 %v1214, 20
      %v1288 = vpop.permute.xlu0 %1287
      %1289 = vrot.lane.b32.xlu0 %v1215, 20
      %v1290 = vpop.permute.xlu0 %1289
      %1291 = vrot.lane.b32.xlu0 %v1216, 20
      %v1292 = vpop.permute.xlu0 %1291
      %1293 = vrot.lane.b32.xlu0 %v1217, 20
      %v1294 = vpop.permute.xlu0 %1293
      %1295 = vrot.lane.b32.xlu0 %v1218, 20
      %v1296 = vpop.permute.xlu0 %1295
      %1297 = vrot.lane.b32.xlu0 %v1219, 20
      %v1298 = vpop.permute.xlu0 %1297
      %1299 = vrot.lane.b32.xlu0 %v1220, 20
      %v1300 = vpop.permute.xlu0 %1299
      %1301 = vrot.lane.b32.xlu0 %v1221, 20
      %v1302 = vpop.permute.xlu0 %1301
      %1303 = vrot.lane.b32.xlu0 %v1222, 20
      %v1304 = vpop.permute.xlu0 %1303
      %1305 = vrot.lane.b32.xlu0 %v1223, 20
      %v1306 = vpop.permute.xlu0 %1305
      %1307 = vrot.lane.b32.xlu0 %v1224, 20
      %v1308 = vpop.permute.xlu0 %1307
      %1309 = vrot.lane.b32.xlu0 %v1225, 20
      %v1310 = vpop.permute.xlu0 %1309
      %1311 = vrot.lane.b32.xlu0 %v1226, 20
      %v1312 = vpop.permute.xlu0 %1311
      %1313 = vrot.lane.b32.xlu0 %v1227, 20
      %v1314 = vpop.permute.xlu0 %1313
      %1315 = vrot.lane.b32.xlu0 %v1228, 20
      %v1316 = vpop.permute.xlu0 %1315
      %1317 = vrot.lane.b32.xlu0 %v1229, 20
      %v1318 = vpop.permute.xlu0 %1317
      %1319 = vrot.lane.b32.xlu0 %v1230, 20
      %v1320 = vpop.permute.xlu0 %1319
      %1321 = vrot.lane.b32.xlu0 %v1231, 20
      %v1322 = vpop.permute.xlu0 %1321
      %1323 = vrot.lane.b32.xlu0 %v1232, 20
      %v1324 = vpop.permute.xlu0 %1323
      %1325 = vrot.lane.b32.xlu0 %v1233, 20
      %v1326 = vpop.permute.xlu0 %1325
      %1327 = vrot.lane.b32.xlu0 %v1234, 20
      %v1328 = vpop.permute.xlu0 %1327
      %1329 = vrot.lane.b32.xlu0 %v1235, 20
      %v1330 = vpop.permute.xlu0 %1329
      %1331 = vrot.lane.b32.xlu0 %v1236, 20
      %v1332 = vpop.permute.xlu0 %1331
      %vm1365 = vcmask 195744
      %1366 = vst.msk [vmem:[#allocation3] sm:$0xff] %vm1365, %v1270
      %1367 = vst.msk [vmem:[#allocation3 + $0x8] sm:$0xff] %vm1365, %v1272
      %1368 = vst.msk [vmem:[#allocation3 + $0x10] sm:$0xff] %vm1365, %v1274
      %1369 = vst.msk [vmem:[#allocation3 + $0x18] sm:$0xff] %vm1365, %v1276
      %1370 = vst.msk [vmem:[#allocation3 + $0x20] sm:$0xff] %vm1365, %v1278
      %1371 = vst.msk [vmem:[#allocation3 + $0x28] sm:$0xff] %vm1365, %v1280
      %1372 = vst.msk [vmem:[#allocation3 + $0x30] sm:$0xff] %vm1365, %v1282
      %1373 = vst.msk [vmem:[#allocation3 + $0x38] sm:$0xff] %vm1365, %v1284
      %1374 = vst.msk [vmem:[#allocation3 + $0x40] sm:$0xff] %vm1365, %v1286
      %1375 = vst.msk [vmem:[#allocation3 + $0x48] sm:$0xff] %vm1365, %v1288
      %1376 = vst.msk [vmem:[#allocation3 + $0x50] sm:$0xff] %vm1365, %v1290
      %1377 = vst.msk [vmem:[#allocation3 + $0x58] sm:$0xff] %vm1365, %v1292
      %1378 = vst.msk [vmem:[#allocation3 + $0x60] sm:$0xff] %vm1365, %v1294
      %1379 = vst.msk [vmem:[#allocation3 + $0x68] sm:$0xff] %vm1365, %v1296
      %1380 = vst.msk [vmem:[#allocation3 + $0x70] sm:$0xff] %vm1365, %v1298
      %1381 = vst.msk [vmem:[#allocation3 + $0x78] sm:$0xff] %vm1365, %v1300
      %1382 = vst.msk [vmem:[#allocation3 + $0x80] sm:$0xff] %vm1365, %v1302
      %1383 = vst.msk [vmem:[#allocation3 + $0x88] sm:$0xff] %vm1365, %v1304
      %1384 = vst.msk [vmem:[#allocation3 + $0x90] sm:$0xff] %vm1365, %v1306
      %1385 = vst.msk [vmem:[#allocation3 + $0x98] sm:$0xff] %vm1365, %v1308
      %1386 = vst.msk [vmem:[#allocation3 + $0xa0] sm:$0xff] %vm1365, %v1310
      %1387 = vst.msk [vmem:[#allocation3 + $0xa8] sm:$0xff] %vm1365, %v1312
      %1388 = vst.msk [vmem:[#allocation3 + $0xb0] sm:$0xff] %vm1365, %v1314
      %1389 = vst.msk [vmem:[#allocation3 + $0xb8] sm:$0xff] %vm1365, %v1316
      %1390 = vst.msk [vmem:[#allocation3 + $0xc0] sm:$0xff] %vm1365, %v1318
      %1391 = vst.msk [vmem:[#allocation3 + $0xc8] sm:$0xff] %vm1365, %v1320
      %1392 = vst.msk [vmem:[#allocation3 + $0xd0] sm:$0xff] %vm1365, %v1322
      %1393 = vst.msk [vmem:[#allocation3 + $0xd8] sm:$0xff] %vm1365, %v1324
      %1394 = vst.msk [vmem:[#allocation3 + $0xe0] sm:$0xff] %vm1365, %v1326
      %1395 = vst.msk [vmem:[#allocation3 + $0xe8] sm:$0xff] %vm1365, %v1328
      %1396 = vst.msk [vmem:[#allocation3 + $0xf0] sm:$0xff] %vm1365, %v1330
      %1397 = vst.msk [vmem:[#allocation3 + $0xf8] sm:$0xff] %vm1365, %v1332
      %s1398 = scalar_lea.vmem [#allocation2], 48
      %v1399 = vld [vmem:[%s1398] sm:$0xff]
      %v1400 = vld [vmem:[%s1398 + $0x8] sm:$0xff]
      %v1401 = vld [vmem:[%s1398 + $0x18] sm:$0xff]
      %v1402 = vld [vmem:[%s1398 + $0x20] sm:$0xff]
      %v1403 = vld [vmem:[%s1398 + $0x30] sm:$0xff]
      %v1404 = vld [vmem:[%s1398 + $0x38] sm:$0xff]
      %v1405 = vld [vmem:[%s1398 + $0x48] sm:$0xff]
      %v1406 = vld [vmem:[%s1398 + $0x50] sm:$0xff]
      %v1407 = vld [vmem:[%s1398 + $0x60] sm:$0xff]
      %v1408 = vld [vmem:[%s1398 + $0x68] sm:$0xff]
      %v1409 = vld [vmem:[%s1398 + $0x78] sm:$0xff]
      %v1410 = vld [vmem:[%s1398 + $0x80] sm:$0xff]
      %v1411 = vld [vmem:[%s1398 + $0x90] sm:$0xff]
      %v1412 = vld [vmem:[%s1398 + $0x98] sm:$0xff]
      %v1413 = vld [vmem:[%s1398 + $0xa8] sm:$0xff]
      %v1414 = vld [vmem:[%s1398 + $0xb0] sm:$0xff]
      %v1415 = vld [vmem:[%s1398 + $0xc0] sm:$0xff]
      %v1416 = vld [vmem:[%s1398 + $0xc8] sm:$0xff]
      %v1417 = vld [vmem:[%s1398 + $0xd8] sm:$0xff]
      %v1418 = vld [vmem:[%s1398 + $0xe0] sm:$0xff]
      %v1419 = vld [vmem:[%s1398 + $0xf0] sm:$0xff]
      %v1420 = vld [vmem:[%s1398 + $0xf8] sm:$0xff]
      %v1421 = vld [vmem:[%s1398 + $0x108] sm:$0xff]
      %v1422 = vld [vmem:[%s1398 + $0x110] sm:$0xff]
      %v1423 = vld [vmem:[%s1398 + $0x120] sm:$0xff]
      %v1424 = vld [vmem:[%s1398 + $0x128] sm:$0xff]
      %v1425 = vld [vmem:[%s1398 + $0x138] sm:$0xff]
      %v1426 = vld [vmem:[%s1398 + $0x140] sm:$0xff]
      %v1427 = vld [vmem:[%s1398 + $0x150] sm:$0xff]
      %v1428 = vld [vmem:[%s1398 + $0x158] sm:$0xff]
      %v1429 = vld [vmem:[%s1398 + $0x168] sm:$0xff]
      %v1430 = vld [vmem:[%s1398 + $0x170] sm:$0xff]
      %1463 = vrot.lane.b32.xlu0 %v1399, 24
      %v1464 = vpop.permute.xlu0 %1463
      %1465 = vrot.lane.b32.xlu0 %v1400, 24
      %v1466 = vpop.permute.xlu0 %1465
      %1467 = vrot.lane.b32.xlu0 %v1401, 24
      %v1468 = vpop.permute.xlu0 %1467
      %1469 = vrot.lane.b32.xlu0 %v1402, 24
      %v1470 = vpop.permute.xlu0 %1469
      %1471 = vrot.lane.b32.xlu0 %v1403, 24
      %v1472 = vpop.permute.xlu0 %1471
      %1473 = vrot.lane.b32.xlu0 %v1404, 24
      %v1474 = vpop.permute.xlu0 %1473
      %1475 = vrot.lane.b32.xlu0 %v1405, 24
      %v1476 = vpop.permute.xlu0 %1475
      %1477 = vrot.lane.b32.xlu0 %v1406, 24
      %v1478 = vpop.permute.xlu0 %1477
      %1479 = vrot.lane.b32.xlu0 %v1407, 24
      %v1480 = vpop.permute.xlu0 %1479
      %1481 = vrot.lane.b32.xlu0 %v1408, 24
      %v1482 = vpop.permute.xlu0 %1481
      %1483 = vrot.lane.b32.xlu0 %v1409, 24
      %v1484 = vpop.permute.xlu0 %1483
      %1485 = vrot.lane.b32.xlu0 %v1410, 24
      %v1486 = vpop.permute.xlu0 %1485
      %1487 = vrot.lane.b32.xlu0 %v1411, 24
      %v1488 = vpop.permute.xlu0 %1487
      %1489 = vrot.lane.b32.xlu0 %v1412, 24
      %v1490 = vpop.permute.xlu0 %1489
      %1491 = vrot.lane.b32.xlu0 %v1413, 24
      %v1492 = vpop.permute.xlu0 %1491
      %1493 = vrot.lane.b32.xlu0 %v1414, 24
      %v1494 = vpop.permute.xlu0 %1493
      %1495 = vrot.lane.b32.xlu0 %v1415, 24
      %v1496 = vpop.permute.xlu0 %1495
      %1497 = vrot.lane.b32.xlu0 %v1416, 24
      %v1498 = vpop.permute.xlu0 %1497
      %1499 = vrot.lane.b32.xlu0 %v1417, 24
      %v1500 = vpop.permute.xlu0 %1499
      %1501 = vrot.lane.b32.xlu0 %v1418, 24
      %v1502 = vpop.permute.xlu0 %1501
      %1503 = vrot.lane.b32.xlu0 %v1419, 24
      %v1504 = vpop.permute.xlu0 %1503
      %1505 = vrot.lane.b32.xlu0 %v1420, 24
      %v1506 = vpop.permute.xlu0 %1505
      %1507 = vrot.lane.b32.xlu0 %v1421, 24
      %v1508 = vpop.permute.xlu0 %1507
      %1509 = vrot.lane.b32.xlu0 %v1422, 24
      %v1510 = vpop.permute.xlu0 %1509
      %1511 = vrot.lane.b32.xlu0 %v1423, 24
      %v1512 = vpop.permute.xlu0 %1511
      %1513 = vrot.lane.b32.xlu0 %v1424, 24
      %v1514 = vpop.permute.xlu0 %1513
      %1515 = vrot.lane.b32.xlu0 %v1425, 24
      %v1516 = vpop.permute.xlu0 %1515
      %1517 = vrot.lane.b32.xlu0 %v1426, 24
      %v1518 = vpop.permute.xlu0 %1517
      %1519 = vrot.lane.b32.xlu0 %v1427, 24
      %v1520 = vpop.permute.xlu0 %1519
      %1521 = vrot.lane.b32.xlu0 %v1428, 24
      %v1522 = vpop.permute.xlu0 %1521
      %1523 = vrot.lane.b32.xlu0 %v1429, 24
      %v1524 = vpop.permute.xlu0 %1523
      %1525 = vrot.lane.b32.xlu0 %v1430, 24
      %v1526 = vpop.permute.xlu0 %1525
      %vm1559 = vcmask 228544
      %1560 = vst.msk [vmem:[#allocation3] sm:$0xff] %vm1559, %v1464
      %1561 = vst.msk [vmem:[#allocation3 + $0x8] sm:$0xff] %vm1559, %v1466
      %1562 = vst.msk [vmem:[#allocation3 + $0x10] sm:$0xff] %vm1559, %v1468
      %1563 = vst.msk [vmem:[#allocation3 + $0x18] sm:$0xff] %vm1559, %v1470
      %1564 = vst.msk [vmem:[#allocation3 + $0x20] sm:$0xff] %vm1559, %v1472
      %1565 = vst.msk [vmem:[#allocation3 + $0x28] sm:$0xff] %vm1559, %v1474
      %1566 = vst.msk [vmem:[#allocation3 + $0x30] sm:$0xff] %vm1559, %v1476
      %1567 = vst.msk [vmem:[#allocation3 + $0x38] sm:$0xff] %vm1559, %v1478
      %1568 = vst.msk [vmem:[#allocation3 + $0x40] sm:$0xff] %vm1559, %v1480
      %1569 = vst.msk [vmem:[#allocation3 + $0x48] sm:$0xff] %vm1559, %v1482
      %1570 = vst.msk [vmem:[#allocation3 + $0x50] sm:$0xff] %vm1559, %v1484
      %1571 = vst.msk [vmem:[#allocation3 + $0x58] sm:$0xff] %vm1559, %v1486
      %1572 = vst.msk [vmem:[#allocation3 + $0x60] sm:$0xff] %vm1559, %v1488
      %1573 = vst.msk [vmem:[#allocation3 + $0x68] sm:$0xff] %vm1559, %v1490
      %1574 = vst.msk [vmem:[#allocation3 + $0x70] sm:$0xff] %vm1559, %v1492
      %1575 = vst.msk [vmem:[#allocation3 + $0x78] sm:$0xff] %vm1559, %v1494
      %1576 = vst.msk [vmem:[#allocation3 + $0x80] sm:$0xff] %vm1559, %v1496
      %1577 = vst.msk [vmem:[#allocation3 + $0x88] sm:$0xff] %vm1559, %v1498
      %1578 = vst.msk [vmem:[#allocation3 + $0x90] sm:$0xff] %vm1559, %v1500
      %1579 = vst.msk [vmem:[#allocation3 + $0x98] sm:$0xff] %vm1559, %v1502
      %1580 = vst.msk [vmem:[#allocation3 + $0xa0] sm:$0xff] %vm1559, %v1504
      %1581 = vst.msk [vmem:[#allocation3 + $0xa8] sm:$0xff] %vm1559, %v1506
      %1582 = vst.msk [vmem:[#allocation3 + $0xb0] sm:$0xff] %vm1559, %v1508
      %1583 = vst.msk [vmem:[#allocation3 + $0xb8] sm:$0xff] %vm1559, %v1510
      %1584 = vst.msk [vmem:[#allocation3 + $0xc0] sm:$0xff] %vm1559, %v1512
      %1585 = vst.msk [vmem:[#allocation3 + $0xc8] sm:$0xff] %vm1559, %v1514
      %1586 = vst.msk [vmem:[#allocation3 + $0xd0] sm:$0xff] %vm1559, %v1516
      %1587 = vst.msk [vmem:[#allocation3 + $0xd8] sm:$0xff] %vm1559, %v1518
      %1588 = vst.msk [vmem:[#allocation3 + $0xe0] sm:$0xff] %vm1559, %v1520
      %1589 = vst.msk [vmem:[#allocation3 + $0xe8] sm:$0xff] %vm1559, %v1522
      %1590 = vst.msk [vmem:[#allocation3 + $0xf0] sm:$0xff] %vm1559, %v1524
      %1591 = vst.msk [vmem:[#allocation3 + $0xf8] sm:$0xff] %vm1559, %v1526
      %v1592 = vld [vmem:[%s1398 + $0x1] sm:$0xff]
      %v1593 = vld [vmem:[%s1398 + $0x9] sm:$0xff]
      %v1594 = vld [vmem:[%s1398 + $0x19] sm:$0xff]
      %v1595 = vld [vmem:[%s1398 + $0x21] sm:$0xff]
      %v1596 = vld [vmem:[%s1398 + $0x31] sm:$0xff]
      %v1597 = vld [vmem:[%s1398 + $0x39] sm:$0xff]
      %v1598 = vld [vmem:[%s1398 + $0x49] sm:$0xff]
      %v1599 = vld [vmem:[%s1398 + $0x51] sm:$0xff]
      %v1600 = vld [vmem:[%s1398 + $0x61] sm:$0xff]
      %v1601 = vld [vmem:[%s1398 + $0x69] sm:$0xff]
      %v1602 = vld [vmem:[%s1398 + $0x79] sm:$0xff]
      %v1603 = vld [vmem:[%s1398 + $0x81] sm:$0xff]
      %v1604 = vld [vmem:[%s1398 + $0x91] sm:$0xff]
      %v1605 = vld [vmem:[%s1398 + $0x99] sm:$0xff]
      %v1606 = vld [vmem:[%s1398 + $0xa9] sm:$0xff]
      %v1607 = vld [vmem:[%s1398 + $0xb1] sm:$0xff]
      %v1608 = vld [vmem:[%s1398 + $0xc1] sm:$0xff]
      %v1609 = vld [vmem:[%s1398 + $0xc9] sm:$0xff]
      %v1610 = vld [vmem:[%s1398 + $0xd9] sm:$0xff]
      %v1611 = vld [vmem:[%s1398 + $0xe1] sm:$0xff]
      %v1612 = vld [vmem:[%s1398 + $0xf1] sm:$0xff]
      %v1613 = vld [vmem:[%s1398 + $0xf9] sm:$0xff]
      %v1614 = vld [vmem:[%s1398 + $0x109] sm:$0xff]
      %v1615 = vld [vmem:[%s1398 + $0x111] sm:$0xff]
      %v1616 = vld [vmem:[%s1398 + $0x121] sm:$0xff]
      %v1617 = vld [vmem:[%s1398 + $0x129] sm:$0xff]
      %v1618 = vld [vmem:[%s1398 + $0x139] sm:$0xff]
      %v1619 = vld [vmem:[%s1398 + $0x141] sm:$0xff]
      %v1620 = vld [vmem:[%s1398 + $0x151] sm:$0xff]
      %v1621 = vld [vmem:[%s1398 + $0x159] sm:$0xff]
      %v1622 = vld [vmem:[%s1398 + $0x169] sm:$0xff]
      %v1623 = vld [vmem:[%s1398 + $0x171] sm:$0xff]
      %1656 = vrot.lane.b32.xlu0 %v1592, 28
      %v1657 = vpop.permute.xlu0 %1656
      %1658 = vrot.lane.b32.xlu0 %v1593, 28
      %v1659 = vpop.permute.xlu0 %1658
      %1660 = vrot.lane.b32.xlu0 %v1594, 28
      %v1661 = vpop.permute.xlu0 %1660
      %1662 = vrot.lane.b32.xlu0 %v1595, 28
      %v1663 = vpop.permute.xlu0 %1662
      %1664 = vrot.lane.b32.xlu0 %v1596, 28
      %v1665 = vpop.permute.xlu0 %1664
      %1666 = vrot.lane.b32.xlu0 %v1597, 28
      %v1667 = vpop.permute.xlu0 %1666
      %1668 = vrot.lane.b32.xlu0 %v1598, 28
      %v1669 = vpop.permute.xlu0 %1668
      %1670 = vrot.lane.b32.xlu0 %v1599, 28
      %v1671 = vpop.permute.xlu0 %1670
      %1672 = vrot.lane.b32.xlu0 %v1600, 28
      %v1673 = vpop.permute.xlu0 %1672
      %1674 = vrot.lane.b32.xlu0 %v1601, 28
      %v1675 = vpop.permute.xlu0 %1674
      %1676 = vrot.lane.b32.xlu0 %v1602, 28
      %v1677 = vpop.permute.xlu0 %1676
      %1678 = vrot.lane.b32.xlu0 %v1603, 28
      %v1679 = vpop.permute.xlu0 %1678
      %1680 = vrot.lane.b32.xlu0 %v1604, 28
      %v1681 = vpop.permute.xlu0 %1680
      %1682 = vrot.lane.b32.xlu0 %v1605, 28
      %v1683 = vpop.permute.xlu0 %1682
      %1684 = vrot.lane.b32.xlu0 %v1606, 28
      %v1685 = vpop.permute.xlu0 %1684
      %1686 = vrot.lane.b32.xlu0 %v1607, 28
      %v1687 = vpop.permute.xlu0 %1686
      %1688 = vrot.lane.b32.xlu0 %v1608, 28
      %v1689 = vpop.permute.xlu0 %1688
      %1690 = vrot.lane.b32.xlu0 %v1609, 28
      %v1691 = vpop.permute.xlu0 %1690
      %1692 = vrot.lane.b32.xlu0 %v1610, 28
      %v1693 = vpop.permute.xlu0 %1692
      %1694 = vrot.lane.b32.xlu0 %v1611, 28
      %v1695 = vpop.permute.xlu0 %1694
      %1696 = vrot.lane.b32.xlu0 %v1612, 28
      %v1697 = vpop.permute.xlu0 %1696
      %1698 = vrot.lane.b32.xlu0 %v1613, 28
      %v1699 = vpop.permute.xlu0 %1698
      %1700 = vrot.lane.b32.xlu0 %v1614, 28
      %v1701 = vpop.permute.xlu0 %1700
      %1702 = vrot.lane.b32.xlu0 %v1615, 28
      %v1703 = vpop.permute.xlu0 %1702
      %1704 = vrot.lane.b32.xlu0 %v1616, 28
      %v1705 = vpop.permute.xlu0 %1704
      %1706 = vrot.lane.b32.xlu0 %v1617, 28
      %v1707 = vpop.permute.xlu0 %1706
      %1708 = vrot.lane.b32.xlu0 %v1618, 28
      %v1709 = vpop.permute.xlu0 %1708
      %1710 = vrot.lane.b32.xlu0 %v1619, 28
      %v1711 = vpop.permute.xlu0 %1710
      %1712 = vrot.lane.b32.xlu0 %v1620, 28
      %v1713 = vpop.permute.xlu0 %1712
      %1714 = vrot.lane.b32.xlu0 %v1621, 28
      %v1715 = vpop.permute.xlu0 %1714
      %1716 = vrot.lane.b32.xlu0 %v1622, 28
      %v1717 = vpop.permute.xlu0 %1716
      %1718 = vrot.lane.b32.xlu0 %v1623, 28
      %v1719 = vpop.permute.xlu0 %1718
      %vm1752 = vcmask 261344
      %1753 = vst.msk [vmem:[#allocation3] sm:$0xff] %vm1752, %v1657
      %1754 = vst.msk [vmem:[#allocation3 + $0x8] sm:$0xff] %vm1752, %v1659
      %1755 = vst.msk [vmem:[#allocation3 + $0x10] sm:$0xff] %vm1752, %v1661
      %1756 = vst.msk [vmem:[#allocation3 + $0x18] sm:$0xff] %vm1752, %v1663
      %1757 = vst.msk [vmem:[#allocation3 + $0x20] sm:$0xff] %vm1752, %v1665
      %1758 = vst.msk [vmem:[#allocation3 + $0x28] sm:$0xff] %vm1752, %v1667
      %1759 = vst.msk [vmem:[#allocation3 + $0x30] sm:$0xff] %vm1752, %v1669
      %1760 = vst.msk [vmem:[#allocation3 + $0x38] sm:$0xff] %vm1752, %v1671
      %1761 = vst.msk [vmem:[#allocation3 + $0x40] sm:$0xff] %vm1752, %v1673
      %1762 = vst.msk [vmem:[#allocation3 + $0x48] sm:$0xff] %vm1752, %v1675
      %1763 = vst.msk [vmem:[#allocation3 + $0x50] sm:$0xff] %vm1752, %v1677
      %1764 = vst.msk [vmem:[#allocation3 + $0x58] sm:$0xff] %vm1752, %v1679
      %1765 = vst.msk [vmem:[#allocation3 + $0x60] sm:$0xff] %vm1752, %v1681
      %1766 = vst.msk [vmem:[#allocation3 + $0x68] sm:$0xff] %vm1752, %v1683
      %1767 = vst.msk [vmem:[#allocation3 + $0x70] sm:$0xff] %vm1752, %v1685
      %1768 = vst.msk [vmem:[#allocation3 + $0x78] sm:$0xff] %vm1752, %v1687
      %1769 = vst.msk [vmem:[#allocation3 + $0x80] sm:$0xff] %vm1752, %v1689
      %1770 = vst.msk [vmem:[#allocation3 + $0x88] sm:$0xff] %vm1752, %v1691
      %1771 = vst.msk [vmem:[#allocation3 + $0x90] sm:$0xff] %vm1752, %v1693
      %1772 = vst.msk [vmem:[#allocation3 + $0x98] sm:$0xff] %vm1752, %v1695
      %1773 = vst.msk [vmem:[#allocation3 + $0xa0] sm:$0xff] %vm1752, %v1697
      %1774 = vst.msk [vmem:[#allocation3 + $0xa8] sm:$0xff] %vm1752, %v1699
      %1775 = vst.msk [vmem:[#allocation3 + $0xb0] sm:$0xff] %vm1752, %v1701
      %1776 = vst.msk [vmem:[#allocation3 + $0xb8] sm:$0xff] %vm1752, %v1703
      %1777 = vst.msk [vmem:[#allocation3 + $0xc0] sm:$0xff] %vm1752, %v1705
      %1778 = vst.msk [vmem:[#allocation3 + $0xc8] sm:$0xff] %vm1752, %v1707
      %1779 = vst.msk [vmem:[#allocation3 + $0xd0] sm:$0xff] %vm1752, %v1709
      %1780 = vst.msk [vmem:[#allocation3 + $0xd8] sm:$0xff] %vm1752, %v1711
      %1781 = vst.msk [vmem:[#allocation3 + $0xe0] sm:$0xff] %vm1752, %v1713
      %1782 = vst.msk [vmem:[#allocation3 + $0xe8] sm:$0xff] %vm1752, %v1715
      %1783 = vst.msk [vmem:[#allocation3 + $0xf0] sm:$0xff] %vm1752, %v1717
      %1784 = vst.msk [vmem:[#allocation3 + $0xf8] sm:$0xff] %vm1752, %v1719
      %v1785 = vld [vmem:[%s1398 + $0x2] sm:$0xff]
      %v1786 = vld [vmem:[%s1398 + $0xa] sm:$0xff]
      %v1787 = vld [vmem:[%s1398 + $0x1a] sm:$0xff]
      %v1788 = vld [vmem:[%s1398 + $0x22] sm:$0xff]
      %v1789 = vld [vmem:[%s1398 + $0x32] sm:$0xff]
      %v1790 = vld [vmem:[%s1398 + $0x3a] sm:$0xff]
      %v1791 = vld [vmem:[%s1398 + $0x4a] sm:$0xff]
      %v1792 = vld [vmem:[%s1398 + $0x52] sm:$0xff]
      %v1793 = vld [vmem:[%s1398 + $0x62] sm:$0xff]
      %v1794 = vld [vmem:[%s1398 + $0x6a] sm:$0xff]
      %v1795 = vld [vmem:[%s1398 + $0x7a] sm:$0xff]
      %v1796 = vld [vmem:[%s1398 + $0x82] sm:$0xff]
      %v1797 = vld [vmem:[%s1398 + $0x92] sm:$0xff]
      %v1798 = vld [vmem:[%s1398 + $0x9a] sm:$0xff]
      %v1799 = vld [vmem:[%s1398 + $0xaa] sm:$0xff]
      %v1800 = vld [vmem:[%s1398 + $0xb2] sm:$0xff]
      %v1801 = vld [vmem:[%s1398 + $0xc2] sm:$0xff]
      %v1802 = vld [vmem:[%s1398 + $0xca] sm:$0xff]
      %v1803 = vld [vmem:[%s1398 + $0xda] sm:$0xff]
      %v1804 = vld [vmem:[%s1398 + $0xe2] sm:$0xff]
      %v1805 = vld [vmem:[%s1398 + $0xf2] sm:$0xff]
      %v1806 = vld [vmem:[%s1398 + $0xfa] sm:$0xff]
      %v1807 = vld [vmem:[%s1398 + $0x10a] sm:$0xff]
      %v1808 = vld [vmem:[%s1398 + $0x112] sm:$0xff]
      %v1809 = vld [vmem:[%s1398 + $0x122] sm:$0xff]
      %v1810 = vld [vmem:[%s1398 + $0x12a] sm:$0xff]
      %v1811 = vld [vmem:[%s1398 + $0x13a] sm:$0xff]
      %v1812 = vld [vmem:[%s1398 + $0x142] sm:$0xff]
      %v1813 = vld [vmem:[%s1398 + $0x152] sm:$0xff]
      %v1814 = vld [vmem:[%s1398 + $0x15a] sm:$0xff]
      %v1815 = vld [vmem:[%s1398 + $0x16a] sm:$0xff]
      %v1816 = vld [vmem:[%s1398 + $0x172] sm:$0xff]
      %1849 = vrot.lane.b32.xlu0 %v1785, 32
      %v1850 = vpop.permute.xlu0 %1849
      %1851 = vrot.lane.b32.xlu0 %v1786, 32
      %v1852 = vpop.permute.xlu0 %1851
      %1853 = vrot.lane.b32.xlu0 %v1787, 32
      %v1854 = vpop.permute.xlu0 %1853
      %1855 = vrot.lane.b32.xlu0 %v1788, 32
      %v1856 = vpop.permute.xlu0 %1855
      %1857 = vrot.lane.b32.xlu0 %v1789, 32
      %v1858 = vpop.permute.xlu0 %1857
      %1859 = vrot.lane.b32.xlu0 %v1790, 32
      %v1860 = vpop.permute.xlu0 %1859
      %1861 = vrot.lane.b32.xlu0 %v1791, 32
      %v1862 = vpop.permute.xlu0 %1861
      %1863 = vrot.lane.b32.xlu0 %v1792, 32
      %v1864 = vpop.permute.xlu0 %1863
      %1865 = vrot.lane.b32.xlu0 %v1793, 32
      %v1866 = vpop.permute.xlu0 %1865
      %1867 = vrot.lane.b32.xlu0 %v1794, 32
      %v1868 = vpop.permute.xlu0 %1867
      %1869 = vrot.lane.b32.xlu0 %v1795, 32
      %v1870 = vpop.permute.xlu0 %1869
      %1871 = vrot.lane.b32.xlu0 %v1796, 32
      %v1872 = vpop.permute.xlu0 %1871
      %1873 = vrot.lane.b32.xlu0 %v1797, 32
      %v1874 = vpop.permute.xlu0 %1873
      %1875 = vrot.lane.b32.xlu0 %v1798, 32
      %v1876 = vpop.permute.xlu0 %1875
      %1877 = vrot.lane.b32.xlu0 %v1799, 32
      %v1878 = vpop.permute.xlu0 %1877
      %1879 = vrot.lane.b32.xlu0 %v1800, 32
      %v1880 = vpop.permute.xlu0 %1879
      %1881 = vrot.lane.b32.xlu0 %v1801, 32
      %v1882 = vpop.permute.xlu0 %1881
      %1883 = vrot.lane.b32.xlu0 %v1802, 32
      %v1884 = vpop.permute.xlu0 %1883
      %1885 = vrot.lane.b32.xlu0 %v1803, 32
      %v1886 = vpop.permute.xlu0 %1885
      %1887 = vrot.lane.b32.xlu0 %v1804, 32
      %v1888 = vpop.permute.xlu0 %1887
      %1889 = vrot.lane.b32.xlu0 %v1805, 32
      %v1890 = vpop.permute.xlu0 %1889
      %1891 = vrot.lane.b32.xlu0 %v1806, 32
      %v1892 = vpop.permute.xlu0 %1891
      %1893 = vrot.lane.b32.xlu0 %v1807, 32
      %v1894 = vpop.permute.xlu0 %1893
      %1895 = vrot.lane.b32.xlu0 %v1808, 32
      %v1896 = vpop.permute.xlu0 %1895
      %1897 = vrot.lane.b32.xlu0 %v1809, 32
      %v1898 = vpop.permute.xlu0 %1897
      %1899 = vrot.lane.b32.xlu0 %v1810, 32
      %v1900 = vpop.permute.xlu0 %1899
      %1901 = vrot.lane.b32.xlu0 %v1811, 32
      %v1902 = vpop.permute.xlu0 %1901
      %1903 = vrot.lane.b32.xlu0 %v1812, 32
      %v1904 = vpop.permute.xlu0 %1903
      %1905 = vrot.lane.b32.xlu0 %v1813, 32
      %v1906 = vpop.permute.xlu0 %1905
      %1907 = vrot.lane.b32.xlu0 %v1814, 32
      %v1908 = vpop.permute.xlu0 %1907
      %1909 = vrot.lane.b32.xlu0 %v1815, 32
      %v1910 = vpop.permute.xlu0 %1909
      %1911 = vrot.lane.b32.xlu0 %v1816, 32
      %v1912 = vpop.permute.xlu0 %1911
      %vm1945 = vcmask 294144
      %1946 = vst.msk [vmem:[#allocation3] sm:$0xff] %vm1945, %v1850
      %1947 = vst.msk [vmem:[#allocation3 + $0x8] sm:$0xff] %vm1945, %v1852
      %1948 = vst.msk [vmem:[#allocation3 + $0x10] sm:$0xff] %vm1945, %v1854
      %1949 = vst.msk [vmem:[#allocation3 + $0x18] sm:$0xff] %vm1945, %v1856
      %1950 = vst.msk [vmem:[#allocation3 + $0x20] sm:$0xff] %vm1945, %v1858
      %1951 = vst.msk [vmem:[#allocation3 + $0x28] sm:$0xff] %vm1945, %v1860
      %1952 = vst.msk [vmem:[#allocation3 + $0x30] sm:$0xff] %vm1945, %v1862
      %1953 = vst.msk [vmem:[#allocation3 + $0x38] sm:$0xff] %vm1945, %v1864
      %1954 = vst.msk [vmem:[#allocation3 + $0x40] sm:$0xff] %vm1945, %v1866
      %1955 = vst.msk [vmem:[#allocation3 + $0x48] sm:$0xff] %vm1945, %v1868
      %1956 = vst.msk [vmem:[#allocation3 + $0x50] sm:$0xff] %vm1945, %v1870
      %1957 = vst.msk [vmem:[#allocation3 + $0x58] sm:$0xff] %vm1945, %v1872
      %1958 = vst.msk [vmem:[#allocation3 + $0x60] sm:$0xff] %vm1945, %v1874
      %1959 = vst.msk [vmem:[#allocation3 + $0x68] sm:$0xff] %vm1945, %v1876
      %1960 = vst.msk [vmem:[#allocation3 + $0x70] sm:$0xff] %vm1945, %v1878
      %1961 = vst.msk [vmem:[#allocation3 + $0x78] sm:$0xff] %vm1945, %v1880
      %1962 = vst.msk [vmem:[#allocation3 + $0x80] sm:$0xff] %vm1945, %v1882
      %1963 = vst.msk [vmem:[#allocation3 + $0x88] sm:$0xff] %vm1945, %v1884
      %1964 = vst.msk [vmem:[#allocation3 + $0x90] sm:$0xff] %vm1945, %v1886
      %1965 = vst.msk [vmem:[#allocation3 + $0x98] sm:$0xff] %vm1945, %v1888
      %1966 = vst.msk [vmem:[#allocation3 + $0xa0] sm:$0xff] %vm1945, %v1890
      %1967 = vst.msk [vmem:[#allocation3 + $0xa8] sm:$0xff] %vm1945, %v1892
      %1968 = vst.msk [vmem:[#allocation3 + $0xb0] sm:$0xff] %vm1945, %v1894
      %1969 = vst.msk [vmem:[#allocation3 + $0xb8] sm:$0xff] %vm1945, %v1896
      %1970 = vst.msk [vmem:[#allocation3 + $0xc0] sm:$0xff] %vm1945, %v1898
      %1971 = vst.msk [vmem:[#allocation3 + $0xc8] sm:$0xff] %vm1945, %v1900
      %1972 = vst.msk [vmem:[#allocation3 + $0xd0] sm:$0xff] %vm1945, %v1902
      %1973 = vst.msk [vmem:[#allocation3 + $0xd8] sm:$0xff] %vm1945, %v1904
      %1974 = vst.msk [vmem:[#allocation3 + $0xe0] sm:$0xff] %vm1945, %v1906
      %1975 = vst.msk [vmem:[#allocation3 + $0xe8] sm:$0xff] %vm1945, %v1908
      %1976 = vst.msk [vmem:[#allocation3 + $0xf0] sm:$0xff] %vm1945, %v1910
      %1977 = vst.msk [vmem:[#allocation3 + $0xf8] sm:$0xff] %vm1945, %v1912
      %v1978 = vld [vmem:[#allocation3] sm:$0xff]
      %v1979 = vld [vmem:[#allocation3 + $0x8] sm:$0xff]
      %v1980 = vld [vmem:[#allocation3 + $0x10] sm:$0xff]
      %v1981 = vld [vmem:[#allocation3 + $0x18] sm:$0xff]
      %v1982 = vld [vmem:[#allocation3 + $0x20] sm:$0xff]
      %v1983 = vld [vmem:[#allocation3 + $0x28] sm:$0xff]
      %v1984 = vld [vmem:[#allocation3 + $0x30] sm:$0xff]
      %v1985 = vld [vmem:[#allocation3 + $0x38] sm:$0xff]
      %v1986 = vld [vmem:[#allocation3 + $0x40] sm:$0xff]
      %v1987 = vld [vmem:[#allocation3 + $0x48] sm:$0xff]
      %v1988 = vld [vmem:[#allocation3 + $0x50] sm:$0xff]
      %v1989 = vld [vmem:[#allocation3 + $0x58] sm:$0xff]
      %v1990 = vld [vmem:[#allocation3 + $0x60] sm:$0xff]
      %v1991 = vld [vmem:[#allocation3 + $0x68] sm:$0xff]
      %v1992 = vld [vmem:[#allocation3 + $0x70] sm:$0xff]
      %v1993 = vld [vmem:[#allocation3 + $0x78] sm:$0xff]
      %v1994 = vld [vmem:[#allocation3 + $0x80] sm:$0xff]
      %v1995 = vld [vmem:[#allocation3 + $0x88] sm:$0xff]
      %v1996 = vld [vmem:[#allocation3 + $0x90] sm:$0xff]
      %v1997 = vld [vmem:[#allocation3 + $0x98] sm:$0xff]
      %v1998 = vld [vmem:[#allocation3 + $0xa0] sm:$0xff]
      %v1999 = vld [vmem:[#allocation3 + $0xa8] sm:$0xff]
      %v2000 = vld [vmem:[#allocation3 + $0xb0] sm:$0xff]
      %v2001 = vld [vmem:[#allocation3 + $0xb8] sm:$0xff]
      %v2002 = vld [vmem:[#allocation3 + $0xc0] sm:$0xff]
      %v2003 = vld [vmem:[#allocation3 + $0xc8] sm:$0xff]
      %v2004 = vld [vmem:[#allocation3 + $0xd0] sm:$0xff]
      %v2005 = vld [vmem:[#allocation3 + $0xd8] sm:$0xff]
      %v2006 = vld [vmem:[#allocation3 + $0xe0] sm:$0xff]
      %v2007 = vld [vmem:[#allocation3 + $0xe8] sm:$0xff]
      %v2008 = vld [vmem:[#allocation3 + $0xf0] sm:$0xff]
      %v2009 = vld [vmem:[#allocation3 + $0xf8] sm:$0xff]
      %v2010 = vld [vmem:[%s1] sm:$0xff]
      %v2011 = vld [vmem:[%s1 + $0x8] sm:$0xff]
      %v2012 = vld [vmem:[%s1 + $0x10] sm:$0xff]
      %v2013 = vld [vmem:[%s1 + $0x18] sm:$0xff]
      %v2014 = vld [vmem:[%s1 + $0x20] sm:$0xf]
      %v2015 = vld [vmem:[%s2] sm:$0x1]
      %v2017 = vlaneseq
      %v2018 = vshrl.u32 %v2017, 7
      %v2019 = vsub.s32 0, %v2018
      %v2020 = vrot.slane %v2015, %v2019
      %vm2022 = vcmask 293888
      %v2024 = vsel %vm2022, %v1978, 0
      %v2027 = vsel %vm2022, %v1979, 0
      %v2030 = vsel %vm2022, %v1980, 0
      %v2033 = vsel %vm2022, %v1981, 0
      %v2036 = vsel %vm2022, %v1982, 0
      %v2039 = vsel %vm2022, %v1983, 0
      %v2042 = vsel %vm2022, %v1984, 0
      %v2045 = vsel %vm2022, %v1985, 0
      %v2048 = vsel %vm2022, %v1986, 0
      %v2051 = vsel %vm2022, %v1987, 0
      %v2054 = vsel %vm2022, %v1988, 0
      %v2057 = vsel %vm2022, %v1989, 0
      %v2060 = vsel %vm2022, %v1990, 0
      %v2063 = vsel %vm2022, %v1991, 0
      %v2066 = vsel %vm2022, %v1992, 0
      %v2069 = vsel %vm2022, %v1993, 0
      %v2072 = vsel %vm2022, %v1994, 0
      %v2075 = vsel %vm2022, %v1995, 0
      %v2078 = vsel %vm2022, %v1996, 0
      %v2081 = vsel %vm2022, %v1997, 0
      %v2084 = vsel %vm2022, %v1998, 0
      %v2087 = vsel %vm2022, %v1999, 0
      %v2090 = vsel %vm2022, %v2000, 0
      %v2093 = vsel %vm2022, %v2001, 0
      %v2096 = vsel %vm2022, %v2002, 0
      %v2099 = vsel %vm2022, %v2003, 0
      %v2102 = vsel %vm2022, %v2004, 0
      %v2105 = vsel %vm2022, %v2005, 0
      %v2108 = vsel %vm2022, %v2006, 0
      %v2111 = vsel %vm2022, %v2007, 0
      %v2114 = vsel %vm2022, %v2008, 0
      %v2117 = vsel %vm2022, %v2009, 0
      %vm2119 = vcmask 1043456
      %v2121 = vsel %vm2119, %v2014, 0
      %2123 = vmatprep.subr.mxu0 0.0
      %2124 = vmatpush1.msra.mxu0 0.0
      %2125 = vmatprep.subr.mxu0 0.0
      %2126 = vmatpush1.msra.mxu0 0.0
      %2127 = vmatprep.subr.mxu0 0.0
      %2128 = vmatpush1.msra.mxu0 0.0
      %2129 = vmatprep.subr.mxu0 0.0
      %2130 = vmatpush1.msra.mxu0 0.0
      %2131 = vmatprep.subr.mxu0 0.0
      %2132 = vmatpush1.msra.mxu0 0.0
      %2133 = vmatprep.subr.mxu0 0.0
      %2134 = vmatpush1.msra.mxu0 0.0
      %2135 = vmatprep.subr.mxu0 0.0
      %2136 = vmatpush1.msra.mxu0 0.0
      %2137 = vmatprep.subr.mxu0 0.0
      %2138 = vmatpush1.msra.mxu0 0.0
      %2139 = vmatprep.subr.mxu0 0.0
      %2140 = vmatpush1.msra.mxu0 0.0
      %2141 = vmatprep.subr.mxu0 0.0
      %2142 = vmatpush1.msra.mxu0 0.0
      %2143 = vmatprep.subr.mxu0 0.0
      %2144 = vmatpush1.msra.mxu0 0.0
      %2145 = vmatprep.subr.mxu0 0.0
      %2146 = vmatpush1.msra.mxu0 %v2121
      %2147 = vmatprep.subr.mxu0 0.0
      %2148 = vmatpush1.msra.mxu0 %v2013
      %2149 = vmatprep.subr.mxu0 0.0
      %2150 = vmatpush1.msra.mxu0 %v2012
      %2151 = vmatprep.subr.mxu0 0.0
      %2152 = vmatpush1.msra.mxu0 %v2011
      %2153 = vmatprep.subr.mxu0 0.0
      %2154 = vmatpush1.msra.mxu0 %v2010
      %2155 = vmatprep.subr.mxu0 0.0
      %2156 = vmatpush2.msra.mxu0 0.0
      %2157 = vmatprep.subr.mxu0 0.0
      %2158 = vmatpush2.msra.mxu0 0.0
      %2159 = vmatprep.subr.mxu0 0.0
      %2160 = vmatpush2.msra.mxu0 0.0
      %2161 = vmatprep.subr.mxu0 0.0
      %2162 = vmatpush2.msra.mxu0 0.0
      %2163 = vmatprep.subr.mxu0 0.0
      %2164 = vmatpush2.msra.mxu0 0.0
      %2165 = vmatprep.subr.mxu0 0.0
      %2166 = vmatpush2.msra.mxu0 0.0
      %2167 = vmatprep.subr.mxu0 0.0
      %2168 = vmatpush2.msra.mxu0 0.0
      %2169 = vmatprep.subr.mxu0 0.0
      %2170 = vmatpush2.msra.mxu0 0.0
      %2171 = vmatprep.subr.mxu0 0.0
      %2172 = vmatpush2.msra.mxu0 0.0
      %2173 = vmatprep.subr.mxu0 0.0
      %2174 = vmatpush2.msra.mxu0 0.0
      %2175 = vmatprep.subr.mxu0 0.0
      %2176 = vmatpush2.msra.mxu0 0.0
      %2177 = vmatprep.subr.mxu0 0.0
      %2178 = vmatpush2.msra.mxu0 0.0
      %2179 = vmatprep.subr.mxu0 0.0
      %2180 = vmatpush2.msra.mxu0 0.0
      %2181 = vmatprep.subr.mxu0 0.0
      %2182 = vmatpush2.msra.mxu0 0.0
      %2183 = vmatprep.subr.mxu0 0.0
      %2184 = vmatpush2.msra.mxu0 0.0
      %2185 = vmatprep.subr.mxu0 0.0
      %2186 = vmatpush2.msra.mxu0 0.0
      %2187 = vmatprep.mubr.f32.mxu0 0.0
      %2188 = vmatmul.mubr.f32.gmra.mxu0 %v2024
      %v2189 = vpop.f32.mrf.mxu0
      %v2190 = vadd.f32 %v2020, %v2189
      %v2191 = vpop.f32.mrf.mxu0
      %2192 = vmatprep.mubr.f32.mxu0 0.0
      %2193 = vmatmul.mubr.f32.gmra.mxu0 %v2027
      %v2194 = vpop.f32.mrf.mxu0
      %v2195 = vadd.f32 %v2020, %v2194
      %v2196 = vpop.f32.mrf.mxu0
      %2197 = vmatprep.mubr.f32.mxu0 0.0
      %2198 = vmatmul.mubr.f32.gmra.mxu0 %v2030
      %v2199 = vpop.f32.mrf.mxu0
      %v2200 = vadd.f32 %v2020, %v2199
      %v2201 = vpop.f32.mrf.mxu0
      %2202 = vmatprep.mubr.f32.mxu0 0.0
      %2203 = vmatmul.mubr.f32.gmra.mxu0 %v2033
      %v2204 = vpop.f32.mrf.mxu0
      %v2205 = vadd.f32 %v2020, %v2204
      %v2206 = vpop.f32.mrf.mxu0
      %2207 = vmatprep.mubr.f32.mxu0 0.0
      %2208 = vmatmul.mubr.f32.gmra.mxu0 %v2036
      %v2209 = vpop.f32.mrf.mxu0
      %v2210 = vadd.f32 %v2020, %v2209
      %v2211 = vpop.f32.mrf.mxu0
      %2212 = vmatprep.mubr.f32.mxu0 0.0
      %2213 = vmatmul.mubr.f32.gmra.mxu0 %v2039
      %v2214 = vpop.f32.mrf.mxu0
      %v2215 = vadd.f32 %v2020, %v2214
      %v2216 = vpop.f32.mrf.mxu0
      %2217 = vmatprep.mubr.f32.mxu0 0.0
      %2218 = vmatmul.mubr.f32.gmra.mxu0 %v2042
      %v2219 = vpop.f32.mrf.mxu0
      %v2220 = vadd.f32 %v2020, %v2219
      %v2221 = vpop.f32.mrf.mxu0
      %2222 = vmatprep.mubr.f32.mxu0 0.0
      %2223 = vmatmul.mubr.f32.gmra.mxu0 %v2045
      %v2224 = vpop.f32.mrf.mxu0
      %v2225 = vadd.f32 %v2020, %v2224
      %v2226 = vpop.f32.mrf.mxu0
      %2227 = vmatprep.mubr.f32.mxu0 0.0
      %2228 = vmatmul.mubr.f32.gmra.mxu0 %v2048
      %v2229 = vpop.f32.mrf.mxu0
      %v2230 = vadd.f32 %v2020, %v2229
      %v2231 = vpop.f32.mrf.mxu0
      %2232 = vmatprep.mubr.f32.mxu0 0.0
      %2233 = vmatmul.mubr.f32.gmra.mxu0 %v2051
      %v2234 = vpop.f32.mrf.mxu0
      %v2235 = vadd.f32 %v2020, %v2234
      %v2236 = vpop.f32.mrf.mxu0
      %2237 = vmatprep.mubr.f32.mxu0 0.0
      %2238 = vmatmul.mubr.f32.gmra.mxu0 %v2054
      %v2239 = vpop.f32.mrf.mxu0
      %v2240 = vadd.f32 %v2020, %v2239
      %v2241 = vpop.f32.mrf.mxu0
      %2242 = vmatprep.mubr.f32.mxu0 0.0
      %2243 = vmatmul.mubr.f32.gmra.mxu0 %v2057
      %v2244 = vpop.f32.mrf.mxu0
      %v2245 = vadd.f32 %v2020, %v2244
      %v2246 = vpop.f32.mrf.mxu0
      %2247 = vmatprep.mubr.f32.mxu0 0.0
      %2248 = vmatmul.mubr.f32.gmra.mxu0 %v2060
      %v2249 = vpop.f32.mrf.mxu0
      %v2250 = vadd.f32 %v2020, %v2249
      %v2251 = vpop.f32.mrf.mxu0
      %2252 = vmatprep.mubr.f32.mxu0 0.0
      %2253 = vmatmul.mubr.f32.gmra.mxu0 %v2063
      %v2254 = vpop.f32.mrf.mxu0
      %v2255 = vadd.f32 %v2020, %v2254
      %v2256 = vpop.f32.mrf.mxu0
      %2257 = vmatprep.mubr.f32.mxu0 0.0
      %2258 = vmatmul.mubr.f32.gmra.mxu0 %v2066
      %v2259 = vpop.f32.mrf.mxu0
      %v2260 = vadd.f32 %v2020, %v2259
      %v2261 = vpop.f32.mrf.mxu0
      %2262 = vmatprep.mubr.f32.mxu0 0.0
      %2263 = vmatmul.mubr.f32.gmra.mxu0 %v2069
      %v2264 = vpop.f32.mrf.mxu0
      %v2265 = vadd.f32 %v2020, %v2264
      %v2266 = vpop.f32.mrf.mxu0
      %2267 = vmatprep.mubr.f32.mxu0 0.0
      %2268 = vmatmul.mubr.f32.gmra.mxu0 %v2072
      %v2269 = vpop.f32.mrf.mxu0
      %v2270 = vadd.f32 %v2020, %v2269
      %v2271 = vpop.f32.mrf.mxu0
      %2272 = vmatprep.mubr.f32.mxu0 0.0
      %2273 = vmatmul.mubr.f32.gmra.mxu0 %v2075
      %v2274 = vpop.f32.mrf.mxu0
      %v2275 = vadd.f32 %v2020, %v2274
      %v2276 = vpop.f32.mrf.mxu0
      %2277 = vmatprep.mubr.f32.mxu0 0.0
      %2278 = vmatmul.mubr.f32.gmra.mxu0 %v2078
      %v2279 = vpop.f32.mrf.mxu0
      %v2280 = vadd.f32 %v2020, %v2279
      %v2281 = vpop.f32.mrf.mxu0
      %2282 = vmatprep.mubr.f32.mxu0 0.0
      %2283 = vmatmul.mubr.f32.gmra.mxu0 %v2081
      %v2284 = vpop.f32.mrf.mxu0
      %v2285 = vadd.f32 %v2020, %v2284
      %v2286 = vpop.f32.mrf.mxu0
      %2287 = vmatprep.mubr.f32.mxu0 0.0
      %2288 = vmatmul.mubr.f32.gmra.mxu0 %v2084
      %v2289 = vpop.f32.mrf.mxu0
      %v2290 = vadd.f32 %v2020, %v2289
      %v2291 = vpop.f32.mrf.mxu0
      %2292 = vmatprep.mubr.f32.mxu0 0.0
      %2293 = vmatmul.mubr.f32.gmra.mxu0 %v2087
      %v2294 = vpop.f32.mrf.mxu0
      %v2295 = vadd.f32 %v2020, %v2294
      %v2296 = vpop.f32.mrf.mxu0
      %2297 = vmatprep.mubr.f32.mxu0 0.0
      %2298 = vmatmul.mubr.f32.gmra.mxu0 %v2090
      %v2299 = vpop.f32.mrf.mxu0
      %v2300 = vadd.f32 %v2020, %v2299
      %v2301 = vpop.f32.mrf.mxu0
      %2302 = vmatprep.mubr.f32.mxu0 0.0
      %2303 = vmatmul.mubr.f32.gmra.mxu0 %v2093
      %v2304 = vpop.f32.mrf.mxu0
      %v2305 = vadd.f32 %v2020, %v2304
      %v2306 = vpop.f32.mrf.mxu0
      %2307 = vmatprep.mubr.f32.mxu0 0.0
      %2308 = vmatmul.mubr.f32.gmra.mxu0 %v2096
      %v2309 = vpop.f32.mrf.mxu0
      %v2310 = vadd.f32 %v2020, %v2309
      %v2311 = vpop.f32.mrf.mxu0
      %2312 = vmatprep.mubr.f32.mxu0 0.0
      %2313 = vmatmul.mubr.f32.gmra.mxu0 %v2099
      %v2314 = vpop.f32.mrf.mxu0
      %v2315 = vadd.f32 %v2020, %v2314
      %v2316 = vpop.f32.mrf.mxu0
      %2317 = vmatprep.mubr.f32.mxu0 0.0
      %2318 = vmatmul.mubr.f32.gmra.mxu0 %v2102
      %v2319 = vpop.f32.mrf.mxu0
      %v2320 = vadd.f32 %v2020, %v2319
      %v2321 = vpop.f32.mrf.mxu0
      %2322 = vmatprep.mubr.f32.mxu0 0.0
      %2323 = vmatmul.mubr.f32.gmra.mxu0 %v2105
      %v2324 = vpop.f32.mrf.mxu0
      %v2325 = vadd.f32 %v2020, %v2324
      %v2326 = vpop.f32.mrf.mxu0
      %2327 = vmatprep.mubr.f32.mxu0 0.0
      %2328 = vmatmul.mubr.f32.gmra.mxu0 %v2108
      %v2329 = vpop.f32.mrf.mxu0
      %v2330 = vadd.f32 %v2020, %v2329
      %v2331 = vpop.f32.mrf.mxu0
      %2332 = vmatprep.mubr.f32.mxu0 0.0
      %2333 = vmatmul.mubr.f32.gmra.mxu0 %v2111
      %v2334 = vpop.f32.mrf.mxu0
      %v2335 = vadd.f32 %v2020, %v2334
      %v2336 = vpop.f32.mrf.mxu0
      %2337 = vmatprep.mubr.f32.mxu0 0.0
      %2338 = vmatmul.mubr.f32.gmra.mxu0 %v2114
      %v2339 = vpop.f32.mrf.mxu0
      %v2340 = vadd.f32 %v2020, %v2339
      %v2341 = vpop.f32.mrf.mxu0
      %2342 = vmatprep.mubr.f32.mxu0 0.0
      %2343 = vmatmul.mubr.f32.gmra.mxu0 %v2117
      %v2344 = vpop.f32.mrf.mxu0
      %v2345 = vadd.f32 %v2020, %v2344
      %v2346 = vpop.f32.mrf.mxu0
      %2347 = vdwg.mxu0
      %v2348 = vsel %vm258, %v2190, 0.0
      %v2349 = vsel %vm258, %v2195, 0.0
      %v2350 = vadd.f32 %v2348, %v2349
      %v2351 = vsel %vm258, %v2200, 0.0
      %v2352 = vadd.f32 %v2350, %v2351
      %v2353 = vsel %vm258, %v2205, 0.0
      %v2354 = vadd.f32 %v2352, %v2353
      %v2355 = vsel %vm258, %v2210, 0.0
      %v2356 = vadd.f32 %v2354, %v2355
      %v2357 = vsel %vm258, %v2215, 0.0
      %v2358 = vadd.f32 %v2356, %v2357
      %v2359 = vsel %vm258, %v2220, 0.0
      %v2360 = vadd.f32 %v2358, %v2359
      %v2361 = vsel %vm258, %v2225, 0.0
      %v2362 = vadd.f32 %v2360, %v2361
      %v2363 = vsel %vm258, %v2230, 0.0
      %v2364 = vadd.f32 %v2362, %v2363
      %v2365 = vsel %vm258, %v2235, 0.0
      %v2366 = vadd.f32 %v2364, %v2365
      %v2367 = vsel %vm258, %v2240, 0.0
      %v2368 = vadd.f32 %v2366, %v2367
      %v2369 = vsel %vm258, %v2245, 0.0
      %v2370 = vadd.f32 %v2368, %v2369
      %v2371 = vsel %vm258, %v2250, 0.0
      %v2372 = vadd.f32 %v2370, %v2371
      %v2373 = vsel %vm258, %v2255, 0.0
      %v2374 = vadd.f32 %v2372, %v2373
      %v2375 = vsel %vm258, %v2260, 0.0
      %v2376 = vadd.f32 %v2374, %v2375
      %v2377 = vsel %vm258, %v2265, 0.0
      %v2378 = vadd.f32 %v2376, %v2377
      %v2379 = vsel %vm258, %v2270, 0.0
      %v2380 = vadd.f32 %v2378, %v2379
      %v2381 = vsel %vm258, %v2275, 0.0
      %v2382 = vadd.f32 %v2380, %v2381
      %v2383 = vsel %vm258, %v2280, 0.0
      %v2384 = vadd.f32 %v2382, %v2383
      %v2385 = vsel %vm258, %v2285, 0.0
      %v2386 = vadd.f32 %v2384, %v2385
      %v2387 = vsel %vm258, %v2290, 0.0
      %v2388 = vadd.f32 %v2386, %v2387
      %v2389 = vsel %vm258, %v2295, 0.0
      %v2390 = vadd.f32 %v2388, %v2389
      %v2391 = vsel %vm258, %v2300, 0.0
      %v2392 = vadd.f32 %v2390, %v2391
      %v2393 = vsel %vm258, %v2305, 0.0
      %v2394 = vadd.f32 %v2392, %v2393
      %v2395 = vsel %vm258, %v2310, 0.0
      %v2396 = vadd.f32 %v2394, %v2395
      %v2397 = vsel %vm258, %v2315, 0.0
      %v2398 = vadd.f32 %v2396, %v2397
      %v2399 = vsel %vm258, %v2320, 0.0
      %v2400 = vadd.f32 %v2398, %v2399
      %v2401 = vsel %vm258, %v2325, 0.0
      %v2402 = vadd.f32 %v2400, %v2401
      %v2403 = vsel %vm258, %v2330, 0.0
      %v2404 = vadd.f32 %v2402, %v2403
      %v2405 = vsel %vm258, %v2335, 0.0
      %v2406 = vadd.f32 %v2404, %v2405
      %v2407 = vsel %vm258, %v2340, 0.0
      %v2408 = vadd.f32 %v2406, %v2407
      %v2409 = vsel %vm258, %v2345, 0.0
      %v2410 = vadd.f32 %v2408, %v2409
      %v2411 = vrot.slane %v2410, 4
      %v2412 = vadd.f32 %v2410, %v2411
      %v2413 = vrot.slane %v2412, 2
      %v2414 = vadd.f32 %v2412, %v2413
      %v2415 = vrot.slane %v2414, 1
      %v2416 = vadd.f32 %v2414, %v2415
      %v2417 = vmul.f32 %v2416, 0.00390625
      %v2418 = vmul.f32 %v2190, %v2190
      %v2419 = vmul.f32 %v2195, %v2195
      %v2420 = vmul.f32 %v2200, %v2200
      %v2421 = vmul.f32 %v2205, %v2205
      %v2422 = vmul.f32 %v2210, %v2210
      %v2423 = vmul.f32 %v2215, %v2215
      %v2424 = vmul.f32 %v2220, %v2220
      %v2425 = vmul.f32 %v2225, %v2225
      %v2426 = vmul.f32 %v2230, %v2230
      %v2427 = vmul.f32 %v2235, %v2235
      %v2428 = vmul.f32 %v2240, %v2240
      %v2429 = vmul.f32 %v2245, %v2245
      %v2430 = vmul.f32 %v2250, %v2250
      %v2431 = vmul.f32 %v2255, %v2255
      %v2432 = vmul.f32 %v2260, %v2260
      %v2433 = vmul.f32 %v2265, %v2265
      %v2434 = vmul.f32 %v2270, %v2270
      %v2435 = vmul.f32 %v2275, %v2275
      %v2436 = vmul.f32 %v2280, %v2280
      %v2437 = vmul.f32 %v2285, %v2285
      %v2438 = vmul.f32 %v2290, %v2290
      %v2439 = vmul.f32 %v2295, %v2295
      %v2440 = vmul.f32 %v2300, %v2300
      %v2441 = vmul.f32 %v2305, %v2305
      %v2442 = vmul.f32 %v2310, %v2310
      %v2443 = vmul.f32 %v2315, %v2315
      %v2444 = vmul.f32 %v2320, %v2320
      %v2445 = vmul.f32 %v2325, %v2325
      %v2446 = vmul.f32 %v2330, %v2330
      %v2447 = vmul.f32 %v2335, %v2335
      %v2448 = vmul.f32 %v2340, %v2340
      %v2449 = vmul.f32 %v2345, %v2345
      %v2450 = vsel %vm258, %v2418, 0.0
      %v2451 = vsel %vm258, %v2419, 0.0
      %v2452 = vadd.f32 %v2450, %v2451
      %v2453 = vsel %vm258, %v2420, 0.0
      %v2454 = vadd.f32 %v2452, %v2453
      %v2455 = vsel %vm258, %v2421, 0.0
      %v2456 = vadd.f32 %v2454, %v2455
      %v2457 = vsel %vm258, %v2422, 0.0
      %v2458 = vadd.f32 %v2456, %v2457
      %v2459 = vsel %vm258, %v2423, 0.0
      %v2460 = vadd.f32 %v2458, %v2459
      %v2461 = vsel %vm258, %v2424, 0.0
      %v2462 = vadd.f32 %v2460, %v2461
      %v2463 = vsel %vm258, %v2425, 0.0
      %v2464 = vadd.f32 %v2462, %v2463
      %v2465 = vsel %vm258, %v2426, 0.0
      %v2466 = vadd.f32 %v2464, %v2465
      %v2467 = vsel %vm258, %v2427, 0.0
      %v2468 = vadd.f32 %v2466, %v2467
      %v2469 = vsel %vm258, %v2428, 0.0
      %v2470 = vadd.f32 %v2468, %v2469
      %v2471 = vsel %vm258, %v2429, 0.0
      %v2472 = vadd.f32 %v2470, %v2471
      %v2473 = vsel %vm258, %v2430, 0.0
      %v2474 = vadd.f32 %v2472, %v2473
      %v2475 = vsel %vm258, %v2431, 0.0
      %v2476 = vadd.f32 %v2474, %v2475
      %v2477 = vsel %vm258, %v2432, 0.0
      %v2478 = vadd.f32 %v2476, %v2477
      %v2479 = vsel %vm258, %v2433, 0.0
      %v2480 = vadd.f32 %v2478, %v2479
      %v2481 = vsel %vm258, %v2434, 0.0
      %v2482 = vadd.f32 %v2480, %v2481
      %v2483 = vsel %vm258, %v2435, 0.0
      %v2484 = vadd.f32 %v2482, %v2483
      %v2485 = vsel %vm258, %v2436, 0.0
      %v2486 = vadd.f32 %v2484, %v2485
      %v2487 = vsel %vm258, %v2437, 0.0
      %v2488 = vadd.f32 %v2486, %v2487
      %v2489 = vsel %vm258, %v2438, 0.0
      %v2490 = vadd.f32 %v2488, %v2489
      %v2491 = vsel %vm258, %v2439, 0.0
      %v2492 = vadd.f32 %v2490, %v2491
      %v2493 = vsel %vm258, %v2440, 0.0
      %v2494 = vadd.f32 %v2492, %v2493
      %v2495 = vsel %vm258, %v2441, 0.0
      %v2496 = vadd.f32 %v2494, %v2495
      %v2497 = vsel %vm258, %v2442, 0.0
      %v2498 = vadd.f32 %v2496, %v2497
      %v2499 = vsel %vm258, %v2443, 0.0
      %v2500 = vadd.f32 %v2498, %v2499
      %v2501 = vsel %vm258, %v2444, 0.0
      %v2502 = vadd.f32 %v2500, %v2501
      %v2503 = vsel %vm258, %v2445, 0.0
      %v2504 = vadd.f32 %v2502, %v2503
      %v2505 = vsel %vm258, %v2446, 0.0
      %v2506 = vadd.f32 %v2504, %v2505
      %v2507 = vsel %vm258, %v2447, 0.0
      %v2508 = vadd.f32 %v2506, %v2507
      %v2509 = vsel %vm258, %v2448, 0.0
      %v2510 = vadd.f32 %v2508, %v2509
      %v2511 = vsel %vm258, %v2449, 0.0
      %v2512 = vadd.f32 %v2510, %v2511
      %v2513 = vrot.slane %v2512, 4
      %v2514 = vadd.f32 %v2512, %v2513
      %v2515 = vrot.slane %v2514, 2
      %v2516 = vadd.f32 %v2514, %v2515
      %v2517 = vrot.slane %v2516, 1
      %v2518 = vadd.f32 %v2516, %v2517
      %v2519 = vmul.f32 %v2518, 0.00390625
      %v2520 = vmul.f32 %v2417, %v2417
      %v2521 = vsub.f32 %v2519, %v2520
      %v2522 = vsub.f32 %v2190, %v2417
      %v2523 = vsub.f32 %v2195, %v2417
      %v2524 = vsub.f32 %v2200, %v2417
      %v2525 = vsub.f32 %v2205, %v2417
      %v2526 = vsub.f32 %v2210, %v2417
      %v2527 = vsub.f32 %v2215, %v2417
      %v2528 = vsub.f32 %v2220, %v2417
      %v2529 = vsub.f32 %v2225, %v2417
      %v2530 = vsub.f32 %v2230, %v2417
      %v2531 = vsub.f32 %v2235, %v2417
      %v2532 = vsub.f32 %v2240, %v2417
      %v2533 = vsub.f32 %v2245, %v2417
      %v2534 = vsub.f32 %v2250, %v2417
      %v2535 = vsub.f32 %v2255, %v2417
      %v2536 = vsub.f32 %v2260, %v2417
      %v2537 = vsub.f32 %v2265, %v2417
      %v2538 = vsub.f32 %v2270, %v2417
      %v2539 = vsub.f32 %v2275, %v2417
      %v2540 = vsub.f32 %v2280, %v2417
      %v2541 = vsub.f32 %v2285, %v2417
      %v2542 = vsub.f32 %v2290, %v2417
      %v2543 = vsub.f32 %v2295, %v2417
      %v2544 = vsub.f32 %v2300, %v2417
      %v2545 = vsub.f32 %v2305, %v2417
      %v2546 = vsub.f32 %v2310, %v2417
      %v2547 = vsub.f32 %v2315, %v2417
      %v2548 = vsub.f32 %v2320, %v2417
      %v2549 = vsub.f32 %v2325, %v2417
      %v2550 = vsub.f32 %v2330, %v2417
      %v2551 = vsub.f32 %v2335, %v2417
      %v2552 = vsub.f32 %v2340, %v2417
      %v2553 = vsub.f32 %v2345, %v2417
      %v2554 = vadd.f32 %v2521, 1e-05
      %v2555 = vrsqrt.pop %v2554
      %v2556 = vmul.f32 %v2522, %v2555
      %v2557 = vmul.f32 %v2523, %v2555
      %v2558 = vmul.f32 %v2524, %v2555
      %v2559 = vmul.f32 %v2525, %v2555
      %v2560 = vmul.f32 %v2526, %v2555
      %v2561 = vmul.f32 %v2527, %v2555
      %v2562 = vmul.f32 %v2528, %v2555
      %v2563 = vmul.f32 %v2529, %v2555
      %v2564 = vmul.f32 %v2530, %v2555
      %v2565 = vmul.f32 %v2531, %v2555
      %v2566 = vmul.f32 %v2532, %v2555
      %v2567 = vmul.f32 %v2533, %v2555
      %v2568 = vmul.f32 %v2534, %v2555
      %v2569 = vmul.f32 %v2535, %v2555
      %v2570 = vmul.f32 %v2536, %v2555
      %v2571 = vmul.f32 %v2537, %v2555
      %v2572 = vmul.f32 %v2538, %v2555
      %v2573 = vmul.f32 %v2539, %v2555
      %v2574 = vmul.f32 %v2540, %v2555
      %v2575 = vmul.f32 %v2541, %v2555
      %v2576 = vmul.f32 %v2542, %v2555
      %v2577 = vmul.f32 %v2543, %v2555
      %v2578 = vmul.f32 %v2544, %v2555
      %v2579 = vmul.f32 %v2545, %v2555
      %v2580 = vmul.f32 %v2546, %v2555
      %v2581 = vmul.f32 %v2547, %v2555
      %v2582 = vmul.f32 %v2548, %v2555
      %v2583 = vmul.f32 %v2549, %v2555
      %v2584 = vmul.f32 %v2550, %v2555
      %v2585 = vmul.f32 %v2551, %v2555
      %v2586 = vmul.f32 %v2552, %v2555
      %v2587 = vmul.f32 %v2553, %v2555
      %v2588 = vmax.f32 %v2556, 0.0
      %v2589 = vmax.f32 %v2557, 0.0
      %v2590 = vmax.f32 %v2558, 0.0
      %v2591 = vmax.f32 %v2559, 0.0
      %v2592 = vmax.f32 %v2560, 0.0
      %v2593 = vmax.f32 %v2561, 0.0
      %v2594 = vmax.f32 %v2562, 0.0
      %v2595 = vmax.f32 %v2563, 0.0
      %v2596 = vmax.f32 %v2564, 0.0
      %v2597 = vmax.f32 %v2565, 0.0
      %v2598 = vmax.f32 %v2566, 0.0
      %v2599 = vmax.f32 %v2567, 0.0
      %v2600 = vmax.f32 %v2568, 0.0
      %v2601 = vmax.f32 %v2569, 0.0
      %v2602 = vmax.f32 %v2570, 0.0
      %v2603 = vmax.f32 %v2571, 0.0
      %v2604 = vmax.f32 %v2572, 0.0
      %v2605 = vmax.f32 %v2573, 0.0
      %v2606 = vmax.f32 %v2574, 0.0
      %v2607 = vmax.f32 %v2575, 0.0
      %v2608 = vmax.f32 %v2576, 0.0
      %v2609 = vmax.f32 %v2577, 0.0
      %v2610 = vmax.f32 %v2578, 0.0
      %v2611 = vmax.f32 %v2579, 0.0
      %v2612 = vmax.f32 %v2580, 0.0
      %v2613 = vmax.f32 %v2581, 0.0
      %v2614 = vmax.f32 %v2582, 0.0
      %v2615 = vmax.f32 %v2583, 0.0
      %v2616 = vmax.f32 %v2584, 0.0
      %v2617 = vmax.f32 %v2585, 0.0
      %v2618 = vmax.f32 %v2586, 0.0
      %v2619 = vmax.f32 %v2587, 0.0
      %2620 = vst.msk [vmem:[%s257 + $0x1] sm:$0xff] %vm258, %v2588
      %2621 = vst.msk [vmem:[%s257 + $0x9] sm:$0xff] %vm258, %v2589
      %2622 = vst.msk [vmem:[%s257 + $0x19] sm:$0xff] %vm258, %v2590
      %2623 = vst.msk [vmem:[%s257 + $0x21] sm:$0xff] %vm258, %v2591
      %2624 = vst.msk [vmem:[%s257 + $0x31] sm:$0xff] %vm258, %v2592
      %2625 = vst.msk [vmem:[%s257 + $0x39] sm:$0xff] %vm258, %v2593
      %2626 = vst.msk [vmem:[%s257 + $0x49] sm:$0xff] %vm258, %v2594
      %2627 = vst.msk [vmem:[%s257 + $0x51] sm:$0xff] %vm258, %v2595
      %2628 = vst.msk [vmem:[%s257 + $0x61] sm:$0xff] %vm258, %v2596
      %2629 = vst.msk [vmem:[%s257 + $0x69] sm:$0xff] %vm258, %v2597
      %2630 = vst.msk [vmem:[%s257 + $0x79] sm:$0xff] %vm258, %v2598
      %2631 = vst.msk [vmem:[%s257 + $0x81] sm:$0xff] %vm258, %v2599
      %2632 = vst.msk [vmem:[%s257 + $0x91] sm:$0xff] %vm258, %v2600
      %2633 = vst.msk [vmem:[%s257 + $0x99] sm:$0xff] %vm258, %v2601
      %2634 = vst.msk [vmem:[%s257 + $0xa9] sm:$0xff] %vm258, %v2602
      %2635 = vst.msk [vmem:[%s257 + $0xb1] sm:$0xff] %vm258, %v2603
      %2636 = vst.msk [vmem:[%s257 + $0xc1] sm:$0xff] %vm258, %v2604
      %2637 = vst.msk [vmem:[%s257 + $0xc9] sm:$0xff] %vm258, %v2605
      %2638 = vst.msk [vmem:[%s257 + $0xd9] sm:$0xff] %vm258, %v2606
      %2639 = vst.msk [vmem:[%s257 + $0xe1] sm:$0xff] %vm258, %v2607
      %2640 = vst.msk [vmem:[%s257 + $0xf1] sm:$0xff] %vm258, %v2608
      %2641 = vst.msk [vmem:[%s257 + $0xf9] sm:$0xff] %vm258, %v2609
      %2642 = vst.msk [vmem:[%s257 + $0x109] sm:$0xff] %vm258, %v2610
      %2643 = vst.msk [vmem:[%s257 + $0x111] sm:$0xff] %vm258, %v2611
      %2644 = vst.msk [vmem:[%s257 + $0x121] sm:$0xff] %vm258, %v2612
      %2645 = vst.msk [vmem:[%s257 + $0x129] sm:$0xff] %vm258, %v2613
      %2646 = vst.msk [vmem:[%s257 + $0x139] sm:$0xff] %vm258, %v2614
      %2647 = vst.msk [vmem:[%s257 + $0x141] sm:$0xff] %vm258, %v2615
      %2648 = vst.msk [vmem:[%s257 + $0x151] sm:$0xff] %vm258, %v2616
      %2649 = vst.msk [vmem:[%s257 + $0x159] sm:$0xff] %vm258, %v2617
      %2650 = vst.msk [vmem:[%s257 + $0x169] sm:$0xff] %vm258, %v2618
      %2651 = vst.msk [vmem:[%s257 + $0x171] sm:$0xff] %vm258, %v2619
      %2652 = vst.msk [vmem:[#allocation2 + $0x1] sm:$0xff] %vm258, %v2590
      %2653 = vst.msk [vmem:[#allocation2 + $0x9] sm:$0xff] %vm258, %v2591
      %2654 = vst.msk [vmem:[%s293 + $0x1] sm:$0xff] %vm258, %v2616
      %2655 = vst.msk [vmem:[%s293 + $0x9] sm:$0xff] %vm258, %v2617
      %v2656 = vld [vmem:[#allocation2 + $0x2] sm:$0x1]
      %v2657 = vld [vmem:[#allocation2 + $0x1a] sm:$0x1]
      %v2658 = vld [vmem:[#allocation2 + $0x32] sm:$0x1]
      %v2659 = vld [vmem:[#allocation2 + $0x4a] sm:$0x1]
      %v2660 = vld [vmem:[#allocation2 + $0x62] sm:$0x1]
      %v2661 = vld [vmem:[#allocation2 + $0x7a] sm:$0x1]
      %v2662 = vld [vmem:[#allocation2 + $0x92] sm:$0x1]
      %v2663 = vld [vmem:[#allocation2 + $0xaa] sm:$0x1]
      %v2664 = vld [vmem:[#allocation2 + $0xc2] sm:$0x1]
      %v2665 = vld [vmem:[#allocation2 + $0xda] sm:$0x1]
      %v2666 = vld [vmem:[#allocation2 + $0xf2] sm:$0x1]
      %v2667 = vld [vmem:[#allocation2 + $0x10a] sm:$0x1]
      %v2668 = vld [vmem:[#allocation2 + $0x122] sm:$0x1]
      %v2669 = vld [vmem:[#allocation2 + $0x13a] sm:$0x1]
      %v2670 = vld [vmem:[#allocation2 + $0x152] sm:$0x1]
      %v2671 = vld [vmem:[#allocation2 + $0x16a] sm:$0x1]
      %v2672 = vld [vmem:[#allocation2 + $0x182] sm:$0x1]
      %v2673 = vld [vmem:[#allocation2 + $0x19a] sm:$0x1]
      %2674 = vst.msk [vmem:[#allocation2] sm:$0x1] %vm314, %v2656
      %2675 = vst.msk [vmem:[#allocation2 + $0x18] sm:$0x1] %vm314, %v2657
      %2676 = vst.msk [vmem:[#allocation2 + $0x30] sm:$0x1] %vm314, %v2658
      %2677 = vst.msk [vmem:[#allocation2 + $0x48] sm:$0x1] %vm314, %v2659
      %2678 = vst.msk [vmem:[#allocation2 + $0x60] sm:$0x1] %vm314, %v2660
      %2679 = vst.msk [vmem:[#allocation2 + $0x78] sm:$0x1] %vm314, %v2661
      %2680 = vst.msk [vmem:[#allocation2 + $0x90] sm:$0x1] %vm314, %v2662
      %2681 = vst.msk [vmem:[#allocation2 + $0xa8] sm:$0x1] %vm314, %v2663
      %2682 = vst.msk [vmem:[#allocation2 + $0xc0] sm:$0x1] %vm314, %v2664
      %2683 = vst.msk [vmem:[#allocation2 + $0xd8] sm:$0x1] %vm314, %v2665
      %2684 = vst.msk [vmem:[#allocation2 + $0xf0] sm:$0x1] %vm314, %v2666
      %2685 = vst.msk [vmem:[#allocation2 + $0x108] sm:$0x1] %vm314, %v2667
      %2686 = vst.msk [vmem:[#allocation2 + $0x120] sm:$0x1] %vm314, %v2668
      %2687 = vst.msk [vmem:[#allocation2 + $0x138] sm:$0x1] %vm314, %v2669
      %2688 = vst.msk [vmem:[#allocation2 + $0x150] sm:$0x1] %vm314, %v2670
      %2689 = vst.msk [vmem:[#allocation2 + $0x168] sm:$0x1] %vm314, %v2671
      %2690 = vst.msk [vmem:[#allocation2 + $0x180] sm:$0x1] %vm314, %v2672
      %2691 = vst.msk [vmem:[#allocation2 + $0x198] sm:$0x1] %vm314, %v2673
      %v2692 = vld [vmem:[#allocation2 + $0xf] sm:$0x1]
      %v2693 = vld [vmem:[#allocation2 + $0x27] sm:$0x1]
      %v2694 = vld [vmem:[#allocation2 + $0x3f] sm:$0x1]
      %v2695 = vld [vmem:[#allocation2 + $0x57] sm:$0x1]
      %v2696 = vld [vmem:[#allocation2 + $0x6f] sm:$0x1]
      %v2697 = vld [vmem:[#allocation2 + $0x87] sm:$0x1]
      %v2698 = vld [vmem:[#allocation2 + $0x9f] sm:$0x1]
      %v2699 = vld [vmem:[#allocation2 + $0xb7] sm:$0x1]
      %v2700 = vld [vmem:[#allocation2 + $0xcf] sm:$0x1]
      %v2701 = vld [vmem:[#allocation2 + $0xe7] sm:$0x1]
      %v2702 = vld [vmem:[#allocation2 + $0xff] sm:$0x1]
      %v2703 = vld [vmem:[#allocation2 + $0x117] sm:$0x1]
      %v2704 = vld [vmem:[#allocation2 + $0x12f] sm:$0x1]
      %v2705 = vld [vmem:[#allocation2 + $0x147] sm:$0x1]
      %v2706 = vld [vmem:[#allocation2 + $0x15f] sm:$0x1]
      %v2707 = vld [vmem:[#allocation2 + $0x177] sm:$0x1]
      %v2708 = vld [vmem:[#allocation2 + $0x18f] sm:$0x1]
      %v2709 = vld [vmem:[#allocation2 + $0x1a7] sm:$0x1]
      %2710 = vst.msk [vmem:[#allocation2 + $0x11] sm:$0x1] %vm314, %v2692
      %2711 = vst.msk [vmem:[#allocation2 + $0x29] sm:$0x1] %vm314, %v2693
      %2712 = vst.msk [vmem:[#allocation2 + $0x41] sm:$0x1] %vm314, %v2694
      %2713 = vst.msk [vmem:[#allocation2 + $0x59] sm:$0x1] %vm314, %v2695
      %2714 = vst.msk [vmem:[#allocation2 + $0x71] sm:$0x1] %vm314, %v2696
      %2715 = vst.msk [vmem:[#allocation2 + $0x89] sm:$0x1] %vm314, %v2697
      %2716 = vst.msk [vmem:[#allocation2 + $0xa1] sm:$0x1] %vm314, %v2698
      %2717 = vst.msk [vmem:[#allocation2 + $0xb9] sm:$0x1] %vm314, %v2699
      %2718 = vst.msk [vmem:[#allocation2 + $0xd1] sm:$0x1] %vm314, %v2700
      %2719 = vst.msk [vmem:[#allocation2 + $0xe9] sm:$0x1] %vm314, %v2701
      %2720 = vst.msk [vmem:[#allocation2 + $0x101] sm:$0x1] %vm314, %v2702
      %2721 = vst.msk [vmem:[#allocation2 + $0x119] sm:$0x1] %vm314, %v2703
      %2722 = vst.msk [vmem:[#allocation2 + $0x131] sm:$0x1] %vm314, %v2704
      %2723 = vst.msk [vmem:[#allocation2 + $0x149] sm:$0x1] %vm314, %v2705
      %2724 = vst.msk [vmem:[#allocation2 + $0x161] sm:$0x1] %vm314, %v2706
      %2725 = vst.msk [vmem:[#allocation2 + $0x179] sm:$0x1] %vm314, %v2707
      %2726 = vst.msk [vmem:[#allocation2 + $0x191] sm:$0x1] %vm314, %v2708
      %2727 = vst.msk [vmem:[#allocation2 + $0x1a9] sm:$0x1] %vm314, %v2709
      %v2728 = vld [vmem:[#allocation2] sm:$0xff]
      %v2729 = vld [vmem:[#allocation2 + $0x8] sm:$0xff]
      %v2730 = vld [vmem:[#allocation2 + $0x18] sm:$0xff]
      %v2731 = vld [vmem:[#allocation2 + $0x20] sm:$0xff]
      %v2732 = vld [vmem:[#allocation2 + $0x30] sm:$0xff]
      %v2733 = vld [vmem:[#allocation2 + $0x38] sm:$0xff]
      %v2734 = vld [vmem:[#allocation2 + $0x48] sm:$0xff]
      %v2735 = vld [vmem:[#allocation2 + $0x50] sm:$0xff]
      %v2736 = vld [vmem:[#allocation2 + $0x60] sm:$0xff]
      %v2737 = vld [vmem:[#allocation2 + $0x68] sm:$0xff]
      %v2738 = vld [vmem:[#allocation2 + $0x78] sm:$0xff]
      %v2739 = vld [vmem:[#allocation2 + $0x80] sm:$0xff]
      %v2740 = vld [vmem:[#allocation2 + $0x90] sm:$0xff]
      %v2741 = vld [vmem:[#allocation2 + $0x98] sm:$0xff]
      %v2742 = vld [vmem:[#allocation2 + $0xa8] sm:$0xff]
      %v2743 = vld [vmem:[#allocation2 + $0xb0] sm:$0xff]
      %v2744 = vld [vmem:[#allocation2 + $0xc0] sm:$0xff]
      %v2745 = vld [vmem:[#allocation2 + $0xc8] sm:$0xff]
      %v2746 = vld [vmem:[#allocation2 + $0xd8] sm:$0xff]
      %v2747 = vld [vmem:[#allocation2 + $0xe0] sm:$0xff]
      %v2748 = vld [vmem:[#allocation2 + $0xf0] sm:$0xff]
      %v2749 = vld [vmem:[#allocation2 + $0xf8] sm:$0xff]
      %v2750 = vld [vmem:[#allocation2 + $0x108] sm:$0xff]
      %v2751 = vld [vmem:[#allocation2 + $0x110] sm:$0xff]
      %v2752 = vld [vmem:[#allocation2 + $0x120] sm:$0xff]
      %v2753 = vld [vmem:[#allocation2 + $0x128] sm:$0xff]
      %v2754 = vld [vmem:[#allocation2 + $0x138] sm:$0xff]
      %v2755 = vld [vmem:[#allocation2 + $0x140] sm:$0xff]
      %v2756 = vld [vmem:[#allocation2 + $0x150] sm:$0xff]
      %v2757 = vld [vmem:[#allocation2 + $0x158] sm:$0xff]
      %v2758 = vld [vmem:[#allocation2 + $0x168] sm:$0xff]
      %v2759 = vld [vmem:[#allocation2 + $0x170] sm:$0xff]
      %2760 = vst.msk [vmem:[#allocation3] sm:$0xff] %vm258, %v2728
      %2761 = vst.msk [vmem:[#allocation3 + $0x8] sm:$0xff] %vm258, %v2729
      %2762 = vst.msk [vmem:[#allocation3 + $0x10] sm:$0xff] %vm258, %v2730
      %2763 = vst.msk [vmem:[#allocation3 + $0x18] sm:$0xff] %vm258, %v2731
      %2764 = vst.msk [vmem:[#allocation3 + $0x20] sm:$0xff] %vm258, %v2732
      %2765 = vst.msk [vmem:[#allocation3 + $0x28] sm:$0xff] %vm258, %v2733
      %2766 = vst.msk [vmem:[#allocation3 + $0x30] sm:$0xff] %vm258, %v2734
      %2767 = vst.msk [vmem:[#allocation3 + $0x38] sm:$0xff] %vm258, %v2735
      %2768 = vst.msk [vmem:[#allocation3 + $0x40] sm:$0xff] %vm258, %v2736
      %2769 = vst.msk [vmem:[#allocation3 + $0x48] sm:$0xff] %vm258, %v2737
      %2770 = vst.msk [vmem:[#allocation3 + $0x50] sm:$0xff] %vm258, %v2738
      %2771 = vst.msk [vmem:[#allocation3 + $0x58] sm:$0xff] %vm258, %v2739
      %2772 = vst.msk [vmem:[#allocation3 + $0x60] sm:$0xff] %vm258, %v2740
      %2773 = vst.msk [vmem:[#allocation3 + $0x68] sm:$0xff] %vm258, %v2741
      %2774 = vst.msk [vmem:[#allocation3 + $0x70] sm:$0xff] %vm258, %v2742
      %2775 = vst.msk [vmem:[#allocation3 + $0x78] sm:$0xff] %vm258, %v2743
      %2776 = vst.msk [vmem:[#allocation3 + $0x80] sm:$0xff] %vm258, %v2744
      %2777 = vst.msk [vmem:[#allocation3 + $0x88] sm:$0xff] %vm258, %v2745
      %2778 = vst.msk [vmem:[#allocation3 + $0x90] sm:$0xff] %vm258, %v2746
      %2779 = vst.msk [vmem:[#allocation3 + $0x98] sm:$0xff] %vm258, %v2747
      %2780 = vst.msk [vmem:[#allocation3 + $0xa0] sm:$0xff] %vm258, %v2748
      %2781 = vst.msk [vmem:[#allocation3 + $0xa8] sm:$0xff] %vm258, %v2749
      %2782 = vst.msk [vmem:[#allocation3 + $0xb0] sm:$0xff] %vm258, %v2750
      %2783 = vst.msk [vmem:[#allocation3 + $0xb8] sm:$0xff] %vm258, %v2751
      %2784 = vst.msk [vmem:[#allocation3 + $0xc0] sm:$0xff] %vm258, %v2752
      %2785 = vst.msk [vmem:[#allocation3 + $0xc8] sm:$0xff] %vm258, %v2753
      %2786 = vst.msk [vmem:[#allocation3 + $0xd0] sm:$0xff] %vm258, %v2754
      %2787 = vst.msk [vmem:[#allocation3 + $0xd8] sm:$0xff] %vm258, %v2755
      %2788 = vst.msk [vmem:[#allocation3 + $0xe0] sm:$0xff] %vm258, %v2756
      %2789 = vst.msk [vmem:[#allocation3 + $0xe8] sm:$0xff] %vm258, %v2757
      %2790 = vst.msk [vmem:[#allocation3 + $0xf0] sm:$0xff] %vm258, %v2758
      %2791 = vst.msk [vmem:[#allocation3 + $0xf8] sm:$0xff] %vm258, %v2759
      %v2792 = vld [vmem:[#allocation2 + $0x1] sm:$0xff]
      %v2793 = vld [vmem:[#allocation2 + $0x9] sm:$0xff]
      %v2794 = vld [vmem:[#allocation2 + $0x19] sm:$0xff]
      %v2795 = vld [vmem:[#allocation2 + $0x21] sm:$0xff]
      %v2796 = vld [vmem:[#allocation2 + $0x31] sm:$0xff]
      %v2797 = vld [vmem:[#allocation2 + $0x39] sm:$0xff]
      %v2798 = vld [vmem:[#allocation2 + $0x49] sm:$0xff]
      %v2799 = vld [vmem:[#allocation2 + $0x51] sm:$0xff]
      %v2800 = vld [vmem:[#allocation2 + $0x61] sm:$0xff]
      %v2801 = vld [vmem:[#allocation2 + $0x69] sm:$0xff]
      %v2802 = vld [vmem:[#allocation2 + $0x79] sm:$0xff]
      %v2803 = vld [vmem:[#allocation2 + $0x81] sm:$0xff]
      %v2804 = vld [vmem:[#allocation2 + $0x91] sm:$0xff]
      %v2805 = vld [vmem:[#allocation2 + $0x99] sm:$0xff]
      %v2806 = vld [vmem:[#allocation2 + $0xa9] sm:$0xff]
      %v2807 = vld [vmem:[#allocation2 + $0xb1] sm:$0xff]
      %v2808 = vld [vmem:[#allocation2 + $0xc1] sm:$0xff]
      %v2809 = vld [vmem:[#allocation2 + $0xc9] sm:$0xff]
      %v2810 = vld [vmem:[#allocation2 + $0xd9] sm:$0xff]
      %v2811 = vld [vmem:[#allocation2 + $0xe1] sm:$0xff]
      %v2812 = vld [vmem:[#allocation2 + $0xf1] sm:$0xff]
      %v2813 = vld [vmem:[#allocation2 + $0xf9] sm:$0xff]
      %v2814 = vld [vmem:[#allocation2 + $0x109] sm:$0xff]
      %v2815 = vld [vmem:[#allocation2 + $0x111] sm:$0xff]
      %v2816 = vld [vmem:[#allocation2 + $0x121] sm:$0xff]
      %v2817 = vld [vmem:[#allocation2 + $0x129] sm:$0xff]
      %v2818 = vld [vmem:[#allocation2 + $0x139] sm:$0xff]
      %v2819 = vld [vmem:[#allocation2 + $0x141] sm:$0xff]
      %v2820 = vld [vmem:[#allocation2 + $0x151] sm:$0xff]
      %v2821 = vld [vmem:[#allocation2 + $0x159] sm:$0xff]
      %v2822 = vld [vmem:[#allocation2 + $0x169] sm:$0xff]
      %v2823 = vld [vmem:[#allocation2 + $0x171] sm:$0xff]
      %2856 = vrot.lane.b32.xlu0 %v2792, 4
      %v2857 = vpop.permute.xlu0 %2856
      %2858 = vrot.lane.b32.xlu0 %v2793, 4
      %v2859 = vpop.permute.xlu0 %2858
      %2860 = vrot.lane.b32.xlu0 %v2794, 4
      %v2861 = vpop.permute.xlu0 %2860
      %2862 = vrot.lane.b32.xlu0 %v2795, 4
      %v2863 = vpop.permute.xlu0 %2862
      %2864 = vrot.lane.b32.xlu0 %v2796, 4
      %v2865 = vpop.permute.xlu0 %2864
      %2866 = vrot.lane.b32.xlu0 %v2797, 4
      %v2867 = vpop.permute.xlu0 %2866
      %2868 = vrot.lane.b32.xlu0 %v2798, 4
      %v2869 = vpop.permute.xlu0 %2868
      %2870 = vrot.lane.b32.xlu0 %v2799, 4
      %v2871 = vpop.permute.xlu0 %2870
      %2872 = vrot.lane.b32.xlu0 %v2800, 4
      %v2873 = vpop.permute.xlu0 %2872
      %2874 = vrot.lane.b32.xlu0 %v2801, 4
      %v2875 = vpop.permute.xlu0 %2874
      %2876 = vrot.lane.b32.xlu0 %v2802, 4
      %v2877 = vpop.permute.xlu0 %2876
      %2878 = vrot.lane.b32.xlu0 %v2803, 4
      %v2879 = vpop.permute.xlu0 %2878
      %2880 = vrot.lane.b32.xlu0 %v2804, 4
      %v2881 = vpop.permute.xlu0 %2880
      %2882 = vrot.lane.b32.xlu0 %v2805, 4
      %v2883 = vpop.permute.xlu0 %2882
      %2884 = vrot.lane.b32.xlu0 %v2806, 4
      %v2885 = vpop.permute.xlu0 %2884
      %2886 = vrot.lane.b32.xlu0 %v2807, 4
      %v2887 = vpop.permute.xlu0 %2886
      %2888 = vrot.lane.b32.xlu0 %v2808, 4
      %v2889 = vpop.permute.xlu0 %2888
      %2890 = vrot.lane.b32.xlu0 %v2809, 4
      %v2891 = vpop.permute.xlu0 %2890
      %2892 = vrot.lane.b32.xlu0 %v2810, 4
      %v2893 = vpop.permute.xlu0 %2892
      %2894 = vrot.lane.b32.xlu0 %v2811, 4
      %v2895 = vpop.permute.xlu0 %2894
      %2896 = vrot.lane.b32.xlu0 %v2812, 4
      %v2897 = vpop.permute.xlu0 %2896
      %2898 = vrot.lane.b32.xlu0 %v2813, 4
      %v2899 = vpop.permute.xlu0 %2898
      %2900 = vrot.lane.b32.xlu0 %v2814, 4
      %v2901 = vpop.permute.xlu0 %2900
      %2902 = vrot.lane.b32.xlu0 %v2815, 4
      %v2903 = vpop.permute.xlu0 %2902
      %2904 = vrot.lane.b32.xlu0 %v2816, 4
      %v2905 = vpop.permute.xlu0 %2904
      %2906 = vrot.lane.b32.xlu0 %v2817, 4
      %v2907 = vpop.permute.xlu0 %2906
      %2908 = vrot.lane.b32.xlu0 %v2818, 4
      %v2909 = vpop.permute.xlu0 %2908
      %2910 = vrot.lane.b32.xlu0 %v2819, 4
      %v2911 = vpop.permute.xlu0 %2910
      %2912 = vrot.lane.b32.xlu0 %v2820, 4
      %v2913 = vpop.permute.xlu0 %2912
      %2914 = vrot.lane.b32.xlu0 %v2821, 4
      %v2915 = vpop.permute.xlu0 %2914
      %2916 = vrot.lane.b32.xlu0 %v2822, 4
      %v2917 = vpop.permute.xlu0 %2916
      %2918 = vrot.lane.b32.xlu0 %v2823, 4
      %v2919 = vpop.permute.xlu0 %2918
      %2952 = vst.msk [vmem:[#allocation3] sm:$0xff] %vm593, %v2857
      %2953 = vst.msk [vmem:[#allocation3 + $0x8] sm:$0xff] %vm593, %v2859
      %2954 = vst.msk [vmem:[#allocation3 + $0x10] sm:$0xff] %vm593, %v2861
      %2955 = vst.msk [vmem:[#allocation3 + $0x18] sm:$0xff] %vm593, %v2863
      %2956 = vst.msk [vmem:[#allocation3 + $0x20] sm:$0xff] %vm593, %v2865
      %2957 = vst.msk [vmem:[#allocation3 + $0x28] sm:$0xff] %vm593, %v2867
      %2958 = vst.msk [vmem:[#allocation3 + $0x30] sm:$0xff] %vm593, %v2869
      %2959 = vst.msk [vmem:[#allocation3 + $0x38] sm:$0xff] %vm593, %v2871
      %2960 = vst.msk [vmem:[#allocation3 + $0x40] sm:$0xff] %vm593, %v2873
      %2961 = vst.msk [vmem:[#allocation3 + $0x48] sm:$0xff] %vm593, %v2875
      %2962 = vst.msk [vmem:[#allocation3 + $0x50] sm:$0xff] %vm593, %v2877
      %2963 = vst.msk [vmem:[#allocation3 + $0x58] sm:$0xff] %vm593, %v2879
      %2964 = vst.msk [vmem:[#allocation3 + $0x60] sm:$0xff] %vm593, %v2881
      %2965 = vst.msk [vmem:[#allocation3 + $0x68] sm:$0xff] %vm593, %v2883
      %2966 = vst.msk [vmem:[#allocation3 + $0x70] sm:$0xff] %vm593, %v2885
      %2967 = vst.msk [vmem:[#allocation3 + $0x78] sm:$0xff] %vm593, %v2887
      %2968 = vst.msk [vmem:[#allocation3 + $0x80] sm:$0xff] %vm593, %v2889
      %2969 = vst.msk [vmem:[#allocation3 + $0x88] sm:$0xff] %vm593, %v2891
      %2970 = vst.msk [vmem:[#allocation3 + $0x90] sm:$0xff] %vm593, %v2893
      %2971 = vst.msk [vmem:[#allocation3 + $0x98] sm:$0xff] %vm593, %v2895
      %2972 = vst.msk [vmem:[#allocation3 + $0xa0] sm:$0xff] %vm593, %v2897
      %2973 = vst.msk [vmem:[#allocation3 + $0xa8] sm:$0xff] %vm593, %v2899
      %2974 = vst.msk [vmem:[#allocation3 + $0xb0] sm:$0xff] %vm593, %v2901
      %2975 = vst.msk [vmem:[#allocation3 + $0xb8] sm:$0xff] %vm593, %v2903
      %2976 = vst.msk [vmem:[#allocation3 + $0xc0] sm:$0xff] %vm593, %v2905
      %2977 = vst.msk [vmem:[#allocation3 + $0xc8] sm:$0xff] %vm593, %v2907
      %2978 = vst.msk [vmem:[#allocation3 + $0xd0] sm:$0xff] %vm593, %v2909
      %2979 = vst.msk [vmem:[#allocation3 + $0xd8] sm:$0xff] %vm593, %v2911
      %2980 = vst.msk [vmem:[#allocation3 + $0xe0] sm:$0xff] %vm593, %v2913
      %2981 = vst.msk [vmem:[#allocation3 + $0xe8] sm:$0xff] %vm593, %v2915
      %2982 = vst.msk [vmem:[#allocation3 + $0xf0] sm:$0xff] %vm593, %v2917
      %2983 = vst.msk [vmem:[#allocation3 + $0xf8] sm:$0xff] %vm593, %v2919
      %v2984 = vld [vmem:[#allocation2 + $0x2] sm:$0xff]
      %v2985 = vld [vmem:[#allocation2 + $0xa] sm:$0xff]
      %v2986 = vld [vmem:[#allocation2 + $0x1a] sm:$0xff]
      %v2987 = vld [vmem:[#allocation2 + $0x22] sm:$0xff]
      %v2988 = vld [vmem:[#allocation2 + $0x32] sm:$0xff]
      %v2989 = vld [vmem:[#allocation2 + $0x3a] sm:$0xff]
      %v2990 = vld [vmem:[#allocation2 + $0x4a] sm:$0xff]
      %v2991 = vld [vmem:[#allocation2 + $0x52] sm:$0xff]
      %v2992 = vld [vmem:[#allocation2 + $0x62] sm:$0xff]
      %v2993 = vld [vmem:[#allocation2 + $0x6a] sm:$0xff]
      %v2994 = vld [vmem:[#allocation2 + $0x7a] sm:$0xff]
      %v2995 = vld [vmem:[#allocation2 + $0x82] sm:$0xff]
      %v2996 = vld [vmem:[#allocation2 + $0x92] sm:$0xff]
      %v2997 = vld [vmem:[#allocation2 + $0x9a] sm:$0xff]
      %v2998 = vld [vmem:[#allocation2 + $0xaa] sm:$0xff]
      %v2999 = vld [vmem:[#allocation2 + $0xb2] sm:$0xff]
      %v3000 = vld [vmem:[#allocation2 + $0xc2] sm:$0xff]
      %v3001 = vld [vmem:[#allocation2 + $0xca] sm:$0xff]
      %v3002 = vld [vmem:[#allocation2 + $0xda] sm:$0xff]
      %v3003 = vld [vmem:[#allocation2 + $0xe2] sm:$0xff]
      %v3004 = vld [vmem:[#allocation2 + $0xf2] sm:$0xff]
      %v3005 = vld [vmem:[#allocation2 + $0xfa] sm:$0xff]
      %v3006 = vld [vmem:[#allocation2 + $0x10a] sm:$0xff]
      %v3007 = vld [vmem:[#allocation2 + $0x112] sm:$0xff]
      %v3008 = vld [vmem:[#allocation2 + $0x122] sm:$0xff]
      %v3009 = vld [vmem:[#allocation2 + $0x12a] sm:$0xff]
      %v3010 = vld [vmem:[#allocation2 + $0x13a] sm:$0xff]
      %v3011 = vld [vmem:[#allocation2 + $0x142] sm:$0xff]
      %v3012 = vld [vmem:[#allocation2 + $0x152] sm:$0xff]
      %v3013 = vld [vmem:[#allocation2 + $0x15a] sm:$0xff]
      %v3014 = vld [vmem:[#allocation2 + $0x16a] sm:$0xff]
      %v3015 = vld [vmem:[#allocation2 + $0x172] sm:$0xff]
      %3048 = vrot.lane.b32.xlu0 %v2984, 8
      %v3049 = vpop.permute.xlu0 %3048
      %3050 = vrot.lane.b32.xlu0 %v2985, 8
      %v3051 = vpop.permute.xlu0 %3050
      %3052 = vrot.lane.b32.xlu0 %v2986, 8
      %v3053 = vpop.permute.xlu0 %3052
      %3054 = vrot.lane.b32.xlu0 %v2987, 8
      %v3055 = vpop.permute.xlu0 %3054
      %3056 = vrot.lane.b32.xlu0 %v2988, 8
      %v3057 = vpop.permute.xlu0 %3056
      %3058 = vrot.lane.b32.xlu0 %v2989, 8
      %v3059 = vpop.permute.xlu0 %3058
      %3060 = vrot.lane.b32.xlu0 %v2990, 8
      %v3061 = vpop.permute.xlu0 %3060
      %3062 = vrot.lane.b32.xlu0 %v2991, 8
      %v3063 = vpop.permute.xlu0 %3062
      %3064 = vrot.lane.b32.xlu0 %v2992, 8
      %v3065 = vpop.permute.xlu0 %3064
      %3066 = vrot.lane.b32.xlu0 %v2993, 8
      %v3067 = vpop.permute.xlu0 %3066
      %3068 = vrot.lane.b32.xlu0 %v2994, 8
      %v3069 = vpop.permute.xlu0 %3068
      %3070 = vrot.lane.b32.xlu0 %v2995, 8
      %v3071 = vpop.permute.xlu0 %3070
      %3072 = vrot.lane.b32.xlu0 %v2996, 8
      %v3073 = vpop.permute.xlu0 %3072
      %3074 = vrot.lane.b32.xlu0 %v2997, 8
      %v3075 = vpop.permute.xlu0 %3074
      %3076 = vrot.lane.b32.xlu0 %v2998, 8
      %v3077 = vpop.permute.xlu0 %3076
      %3078 = vrot.lane.b32.xlu0 %v2999, 8
      %v3079 = vpop.permute.xlu0 %3078
      %3080 = vrot.lane.b32.xlu0 %v3000, 8
      %v3081 = vpop.permute.xlu0 %3080
      %3082 = vrot.lane.b32.xlu0 %v3001, 8
      %v3083 = vpop.permute.xlu0 %3082
      %3084 = vrot.lane.b32.xlu0 %v3002, 8
      %v3085 = vpop.permute.xlu0 %3084
      %3086 = vrot.lane.b32.xlu0 %v3003, 8
      %v3087 = vpop.permute.xlu0 %3086
      %3088 = vrot.lane.b32.xlu0 %v3004, 8
      %v3089 = vpop.permute.xlu0 %3088
      %3090 = vrot.lane.b32.xlu0 %v3005, 8
      %v3091 = vpop.permute.xlu0 %3090
      %3092 = vrot.lane.b32.xlu0 %v3006, 8
      %v3093 = vpop.permute.xlu0 %3092
      %3094 = vrot.lane.b32.xlu0 %v3007, 8
      %v3095 = vpop.permute.xlu0 %3094
      %3096 = vrot.lane.b32.xlu0 %v3008, 8
      %v3097 = vpop.permute.xlu0 %3096
      %3098 = vrot.lane.b32.xlu0 %v3009, 8
      %v3099 = vpop.permute.xlu0 %3098
      %3100 = vrot.lane.b32.xlu0 %v3010, 8
      %v3101 = vpop.permute.xlu0 %3100
      %3102 = vrot.lane.b32.xlu0 %v3011, 8
      %v3103 = vpop.permute.xlu0 %3102
      %3104 = vrot.lane.b32.xlu0 %v3012, 8
      %v3105 = vpop.permute.xlu0 %3104
      %3106 = vrot.lane.b32.xlu0 %v3013, 8
      %v3107 = vpop.permute.xlu0 %3106
      %3108 = vrot.lane.b32.xlu0 %v3014, 8
      %v3109 = vpop.permute.xlu0 %3108
      %3110 = vrot.lane.b32.xlu0 %v3015, 8
      %v3111 = vpop.permute.xlu0 %3110
      %3144 = vst.msk [vmem:[#allocation3] sm:$0xff] %vm786, %v3049
      %3145 = vst.msk [vmem:[#allocation3 + $0x8] sm:$0xff] %vm786, %v3051
      %3146 = vst.msk [vmem:[#allocation3 + $0x10] sm:$0xff] %vm786, %v3053
      %3147 = vst.msk [vmem:[#allocation3 + $0x18] sm:$0xff] %vm786, %v3055
      %3148 = vst.msk [vmem:[#allocation3 + $0x20] sm:$0xff] %vm786, %v3057
      %3149 = vst.msk [vmem:[#allocation3 + $0x28] sm:$0xff] %vm786, %v3059
      %3150 = vst.msk [vmem:[#allocation3 + $0x30] sm:$0xff] %vm786, %v3061
      %3151 = vst.msk [vmem:[#allocation3 + $0x38] sm:$0xff] %vm786, %v3063
      %3152 = vst.msk [vmem:[#allocation3 + $0x40] sm:$0xff] %vm786, %v3065
      %3153 = vst.msk [vmem:[#allocation3 + $0x48] sm:$0xff] %vm786, %v3067
      %3154 = vst.msk [vmem:[#allocation3 + $0x50] sm:$0xff] %vm786, %v3069
      %3155 = vst.msk [vmem:[#allocation3 + $0x58] sm:$0xff] %vm786, %v3071
      %3156 = vst.msk [vmem:[#allocation3 + $0x60] sm:$0xff] %vm786, %v3073
      %3157 = vst.msk [vmem:[#allocation3 + $0x68] sm:$0xff] %vm786, %v3075
      %3158 = vst.msk [vmem:[#allocation3 + $0x70] sm:$0xff] %vm786, %v3077
      %3159 = vst.msk [vmem:[#allocation3 + $0x78] sm:$0xff] %vm786, %v3079
      %3160 = vst.msk [vmem:[#allocation3 + $0x80] sm:$0xff] %vm786, %v3081
      %3161 = vst.msk [vmem:[#allocation3 + $0x88] sm:$0xff] %vm786, %v3083
      %3162 = vst.msk [vmem:[#allocation3 + $0x90] sm:$0xff] %vm786, %v3085
      %3163 = vst.msk [vmem:[#allocation3 + $0x98] sm:$0xff] %vm786, %v3087
      %3164 = vst.msk [vmem:[#allocation3 + $0xa0] sm:$0xff] %vm786, %v3089
      %3165 = vst.msk [vmem:[#allocation3 + $0xa8] sm:$0xff] %vm786, %v3091
      %3166 = vst.msk [vmem:[#allocation3 + $0xb0] sm:$0xff] %vm786, %v3093
      %3167 = vst.msk [vmem:[#allocation3 + $0xb8] sm:$0xff] %vm786, %v3095
      %3168 = vst.msk [vmem:[#allocation3 + $0xc0] sm:$0xff] %vm786, %v3097
      %3169 = vst.msk [vmem:[#allocation3 + $0xc8] sm:$0xff] %vm786, %v3099
      %3170 = vst.msk [vmem:[#allocation3 + $0xd0] sm:$0xff] %vm786, %v3101
      %3171 = vst.msk [vmem:[#allocation3 + $0xd8] sm:$0xff] %vm786, %v3103
      %3172 = vst.msk [vmem:[#allocation3 + $0xe0] sm:$0xff] %vm786, %v3105
      %3173 = vst.msk [vmem:[#allocation3 + $0xe8] sm:$0xff] %vm786, %v3107
      %3174 = vst.msk [vmem:[#allocation3 + $0xf0] sm:$0xff] %vm786, %v3109
      %3175 = vst.msk [vmem:[#allocation3 + $0xf8] sm:$0xff] %vm786, %v3111
      %v3176 = vld [vmem:[%s257] sm:$0xff]
      %v3177 = vld [vmem:[%s257 + $0x8] sm:$0xff]
      %v3178 = vld [vmem:[%s257 + $0x18] sm:$0xff]
      %v3179 = vld [vmem:[%s257 + $0x20] sm:$0xff]
      %v3180 = vld [vmem:[%s257 + $0x30] sm:$0xff]
      %v3181 = vld [vmem:[%s257 + $0x38] sm:$0xff]
      %v3182 = vld [vmem:[%s257 + $0x48] sm:$0xff]
      %v3183 = vld [vmem:[%s257 + $0x50] sm:$0xff]
      %v3184 = vld [vmem:[%s257 + $0x60] sm:$0xff]
      %v3185 = vld [vmem:[%s257 + $0x68] sm:$0xff]
      %v3186 = vld [vmem:[%s257 + $0x78] sm:$0xff]
      %v3187 = vld [vmem:[%s257 + $0x80] sm:$0xff]
      %v3188 = vld [vmem:[%s257 + $0x90] sm:$0xff]
      %v3189 = vld [vmem:[%s257 + $0x98] sm:$0xff]
      %v3190 = vld [vmem:[%s257 + $0xa8] sm:$0xff]
      %v3191 = vld [vmem:[%s257 + $0xb0] sm:$0xff]
      %v3192 = vld [vmem:[%s257 + $0xc0] sm:$0xff]
      %v3193 = vld [vmem:[%s257 + $0xc8] sm:$0xff]
      %v3194 = vld [vmem:[%s257 + $0xd8] sm:$0xff]
      %v3195 = vld [vmem:[%s257 + $0xe0] sm:$0xff]
      %v3196 = vld [vmem:[%s257 + $0xf0] sm:$0xff]
      %v3197 = vld [vmem:[%s257 + $0xf8] sm:$0xff]
      %v3198 = vld [vmem:[%s257 + $0x108] sm:$0xff]
      %v3199 = vld [vmem:[%s257 + $0x110] sm:$0xff]
      %v3200 = vld [vmem:[%s257 + $0x120] sm:$0xff]
      %v3201 = vld [vmem:[%s257 + $0x128] sm:$0xff]
      %v3202 = vld [vmem:[%s257 + $0x138] sm:$0xff]
      %v3203 = vld [vmem:[%s257 + $0x140] sm:$0xff]
      %v3204 = vld [vmem:[%s257 + $0x150] sm:$0xff]
      %v3205 = vld [vmem:[%s257 + $0x158] sm:$0xff]
      %v3206 = vld [vmem:[%s257 + $0x168] sm:$0xff]
      %v3207 = vld [vmem:[%s257 + $0x170] sm:$0xff]
      %3240 = vrot.lane.b32.xlu0 %v3176, 12
      %v3241 = vpop.permute.xlu0 %3240
      %3242 = vrot.lane.b32.xlu0 %v3177, 12
      %v3243 = vpop.permute.xlu0 %3242
      %3244 = vrot.lane.b32.xlu0 %v3178, 12
      %v3245 = vpop.permute.xlu0 %3244
      %3246 = vrot.lane.b32.xlu0 %v3179, 12
      %v3247 = vpop.permute.xlu0 %3246
      %3248 = vrot.lane.b32.xlu0 %v3180, 12
      %v3249 = vpop.permute.xlu0 %3248
      %3250 = vrot.lane.b32.xlu0 %v3181, 12
      %v3251 = vpop.permute.xlu0 %3250
      %3252 = vrot.lane.b32.xlu0 %v3182, 12
      %v3253 = vpop.permute.xlu0 %3252
      %3254 = vrot.lane.b32.xlu0 %v3183, 12
      %v3255 = vpop.permute.xlu0 %3254
      %3256 = vrot.lane.b32.xlu0 %v3184, 12
      %v3257 = vpop.permute.xlu0 %3256
      %3258 = vrot.lane.b32.xlu0 %v3185, 12
      %v3259 = vpop.permute.xlu0 %3258
      %3260 = vrot.lane.b32.xlu0 %v3186, 12
      %v3261 = vpop.permute.xlu0 %3260
      %3262 = vrot.lane.b32.xlu0 %v3187, 12
      %v3263 = vpop.permute.xlu0 %3262
      %3264 = vrot.lane.b32.xlu0 %v3188, 12
      %v3265 = vpop.permute.xlu0 %3264
      %3266 = vrot.lane.b32.xlu0 %v3189, 12
      %v3267 = vpop.permute.xlu0 %3266
      %3268 = vrot.lane.b32.xlu0 %v3190, 12
      %v3269 = vpop.permute.xlu0 %3268
      %3270 = vrot.lane.b32.xlu0 %v3191, 12
      %v3271 = vpop.permute.xlu0 %3270
      %3272 = vrot.lane.b32.xlu0 %v3192, 12
      %v3273 = vpop.permute.xlu0 %3272
      %3274 = vrot.lane.b32.xlu0 %v3193, 12
      %v3275 = vpop.permute.xlu0 %3274
      %3276 = vrot.lane.b32.xlu0 %v3194, 12
      %v3277 = vpop.permute.xlu0 %3276
      %3278 = vrot.lane.b32.xlu0 %v3195, 12
      %v3279 = vpop.permute.xlu0 %3278
      %3280 = vrot.lane.b32.xlu0 %v3196, 12
      %v3281 = vpop.permute.xlu0 %3280
      %3282 = vrot.lane.b32.xlu0 %v3197, 12
      %v3283 = vpop.permute.xlu0 %3282
      %3284 = vrot.lane.b32.xlu0 %v3198, 12
      %v3285 = vpop.permute.xlu0 %3284
      %3286 = vrot.lane.b32.xlu0 %v3199, 12
      %v3287 = vpop.permute.xlu0 %3286
      %3288 = vrot.lane.b32.xlu0 %v3200, 12
      %v3289 = vpop.permute.xlu0 %3288
      %3290 = vrot.lane.b32.xlu0 %v3201, 12
      %v3291 = vpop.permute.xlu0 %3290
      %3292 = vrot.lane.b32.xlu0 %v3202, 12
      %v3293 = vpop.permute.xlu0 %3292
      %3294 = vrot.lane.b32.xlu0 %v3203, 12
      %v3295 = vpop.permute.xlu0 %3294
      %3296 = vrot.lane.b32.xlu0 %v3204, 12
      %v3297 = vpop.permute.xlu0 %3296
      %3298 = vrot.lane.b32.xlu0 %v3205, 12
      %v3299 = vpop.permute.xlu0 %3298
      %3300 = vrot.lane.b32.xlu0 %v3206, 12
      %v3301 = vpop.permute.xlu0 %3300
      %3302 = vrot.lane.b32.xlu0 %v3207, 12
      %v3303 = vpop.permute.xlu0 %3302
      %3336 = vst.msk [vmem:[#allocation3] sm:$0xff] %vm979, %v3241
      %3337 = vst.msk [vmem:[#allocation3 + $0x8] sm:$0xff] %vm979, %v3243
      %3338 = vst.msk [vmem:[#allocation3 + $0x10] sm:$0xff] %vm979, %v3245
      %3339 = vst.msk [vmem:[#allocation3 + $0x18] sm:$0xff] %vm979, %v3247
      %3340 = vst.msk [vmem:[#allocation3 + $0x20] sm:$0xff] %vm979, %v3249
      %3341 = vst.msk [vmem:[#allocation3 + $0x28] sm:$0xff] %vm979, %v3251
      %3342 = vst.msk [vmem:[#allocation3 + $0x30] sm:$0xff] %vm979, %v3253
      %3343 = vst.msk [vmem:[#allocation3 + $0x38] sm:$0xff] %vm979, %v3255
      %3344 = vst.msk [vmem:[#allocation3 + $0x40] sm:$0xff] %vm979, %v3257
      %3345 = vst.msk [vmem:[#allocation3 + $0x48] sm:$0xff] %vm979, %v3259
      %3346 = vst.msk [vmem:[#allocation3 + $0x50] sm:$0xff] %vm979, %v3261
      %3347 = vst.msk [vmem:[#allocation3 + $0x58] sm:$0xff] %vm979, %v3263
      %3348 = vst.msk [vmem:[#allocation3 + $0x60] sm:$0xff] %vm979, %v3265
      %3349 = vst.msk [vmem:[#allocation3 + $0x68] sm:$0xff] %vm979, %v3267
      %3350 = vst.msk [vmem:[#allocation3 + $0x70] sm:$0xff] %vm979, %v3269
      %3351 = vst.msk [vmem:[#allocation3 + $0x78] sm:$0xff] %vm979, %v3271
      %3352 = vst.msk [vmem:[#allocation3 + $0x80] sm:$0xff] %vm979, %v3273
      %3353 = vst.msk [vmem:[#allocation3 + $0x88] sm:$0xff] %vm979, %v3275
      %3354 = vst.msk [vmem:[#allocation3 + $0x90] sm:$0xff] %vm979, %v3277
      %3355 = vst.msk [vmem:[#allocation3 + $0x98] sm:$0xff] %vm979, %v3279
      %3356 = vst.msk [vmem:[#allocation3 + $0xa0] sm:$0xff] %vm979, %v3281
      %3357 = vst.msk [vmem:[#allocation3 + $0xa8] sm:$0xff] %vm979, %v3283
      %3358 = vst.msk [vmem:[#allocation3 + $0xb0] sm:$0xff] %vm979, %v3285
      %3359 = vst.msk [vmem:[#allocation3 + $0xb8] sm:$0xff] %vm979, %v3287
      %3360 = vst.msk [vmem:[#allocation3 + $0xc0] sm:$0xff] %vm979, %v3289
      %3361 = vst.msk [vmem:[#allocation3 + $0xc8] sm:$0xff] %vm979, %v3291
      %3362 = vst.msk [vmem:[#allocation3 + $0xd0] sm:$0xff] %vm979, %v3293
      %3363 = vst.msk [vmem:[#allocation3 + $0xd8] sm:$0xff] %vm979, %v3295
      %3364 = vst.msk [vmem:[#allocation3 + $0xe0] sm:$0xff] %vm979, %v3297
      %3365 = vst.msk [vmem:[#allocation3 + $0xe8] sm:$0xff] %vm979, %v3299
      %3366 = vst.msk [vmem:[#allocation3 + $0xf0] sm:$0xff] %vm979, %v3301
      %3367 = vst.msk [vmem:[#allocation3 + $0xf8] sm:$0xff] %vm979, %v3303
      %v3368 = vld [vmem:[%s257 + $0x1] sm:$0xff]
      %v3369 = vld [vmem:[%s257 + $0x9] sm:$0xff]
      %v3370 = vld [vmem:[%s257 + $0x19] sm:$0xff]
      %v3371 = vld [vmem:[%s257 + $0x21] sm:$0xff]
      %v3372 = vld [vmem:[%s257 + $0x31] sm:$0xff]
      %v3373 = vld [vmem:[%s257 + $0x39] sm:$0xff]
      %v3374 = vld [vmem:[%s257 + $0x49] sm:$0xff]
      %v3375 = vld [vmem:[%s257 + $0x51] sm:$0xff]
      %v3376 = vld [vmem:[%s257 + $0x61] sm:$0xff]
      %v3377 = vld [vmem:[%s257 + $0x69] sm:$0xff]
      %v3378 = vld [vmem:[%s257 + $0x79] sm:$0xff]
      %v3379 = vld [vmem:[%s257 + $0x81] sm:$0xff]
      %v3380 = vld [vmem:[%s257 + $0x91] sm:$0xff]
      %v3381 = vld [vmem:[%s257 + $0x99] sm:$0xff]
      %v3382 = vld [vmem:[%s257 + $0xa9] sm:$0xff]
      %v3383 = vld [vmem:[%s257 + $0xb1] sm:$0xff]
      %v3384 = vld [vmem:[%s257 + $0xc1] sm:$0xff]
      %v3385 = vld [vmem:[%s257 + $0xc9] sm:$0xff]
      %v3386 = vld [vmem:[%s257 + $0xd9] sm:$0xff]
      %v3387 = vld [vmem:[%s257 + $0xe1] sm:$0xff]
      %v3388 = vld [vmem:[%s257 + $0xf1] sm:$0xff]
      %v3389 = vld [vmem:[%s257 + $0xf9] sm:$0xff]
      %v3390 = vld [vmem:[%s257 + $0x109] sm:$0xff]
      %v3391 = vld [vmem:[%s257 + $0x111] sm:$0xff]
      %v3392 = vld [vmem:[%s257 + $0x121] sm:$0xff]
      %v3393 = vld [vmem:[%s257 + $0x129] sm:$0xff]
      %v3394 = vld [vmem:[%s257 + $0x139] sm:$0xff]
      %v3395 = vld [vmem:[%s257 + $0x141] sm:$0xff]
      %v3396 = vld [vmem:[%s257 + $0x151] sm:$0xff]
      %v3397 = vld [vmem:[%s257 + $0x159] sm:$0xff]
      %v3398 = vld [vmem:[%s257 + $0x169] sm:$0xff]
      %v3399 = vld [vmem:[%s257 + $0x171] sm:$0xff]
      %3432 = vrot.lane.b32.xlu0 %v3368, 16
      %v3433 = vpop.permute.xlu0 %3432
      %3434 = vrot.lane.b32.xlu0 %v3369, 16
      %v3435 = vpop.permute.xlu0 %3434
      %3436 = vrot.lane.b32.xlu0 %v3370, 16
      %v3437 = vpop.permute.xlu0 %3436
      %3438 = vrot.lane.b32.xlu0 %v3371, 16
      %v3439 = vpop.permute.xlu0 %3438
      %3440 = vrot.lane.b32.xlu0 %v3372, 16
      %v3441 = vpop.permute.xlu0 %3440
      %3442 = vrot.lane.b32.xlu0 %v3373, 16
      %v3443 = vpop.permute.xlu0 %3442
      %3444 = vrot.lane.b32.xlu0 %v3374, 16
      %v3445 = vpop.permute.xlu0 %3444
      %3446 = vrot.lane.b32.xlu0 %v3375, 16
      %v3447 = vpop.permute.xlu0 %3446
      %3448 = vrot.lane.b32.xlu0 %v3376, 16
      %v3449 = vpop.permute.xlu0 %3448
      %3450 = vrot.lane.b32.xlu0 %v3377, 16
      %v3451 = vpop.permute.xlu0 %3450
      %3452 = vrot.lane.b32.xlu0 %v3378, 16
      %v3453 = vpop.permute.xlu0 %3452
      %3454 = vrot.lane.b32.xlu0 %v3379, 16
      %v3455 = vpop.permute.xlu0 %3454
      %3456 = vrot.lane.b32.xlu0 %v3380, 16
      %v3457 = vpop.permute.xlu0 %3456
      %3458 = vrot.lane.b32.xlu0 %v3381, 16
      %v3459 = vpop.permute.xlu0 %3458
      %3460 = vrot.lane.b32.xlu0 %v3382, 16
      %v3461 = vpop.permute.xlu0 %3460
      %3462 = vrot.lane.b32.xlu0 %v3383, 16
      %v3463 = vpop.permute.xlu0 %3462
      %3464 = vrot.lane.b32.xlu0 %v3384, 16
      %v3465 = vpop.permute.xlu0 %3464
      %3466 = vrot.lane.b32.xlu0 %v3385, 16
      %v3467 = vpop.permute.xlu0 %3466
      %3468 = vrot.lane.b32.xlu0 %v3386, 16
      %v3469 = vpop.permute.xlu0 %3468
      %3470 = vrot.lane.b32.xlu0 %v3387, 16
      %v3471 = vpop.permute.xlu0 %3470
      %3472 = vrot.lane.b32.xlu0 %v3388, 16
      %v3473 = vpop.permute.xlu0 %3472
      %3474 = vrot.lane.b32.xlu0 %v3389, 16
      %v3475 = vpop.permute.xlu0 %3474
      %3476 = vrot.lane.b32.xlu0 %v3390, 16
      %v3477 = vpop.permute.xlu0 %3476
      %3478 = vrot.lane.b32.xlu0 %v3391, 16
      %v3479 = vpop.permute.xlu0 %3478
      %3480 = vrot.lane.b32.xlu0 %v3392, 16
      %v3481 = vpop.permute.xlu0 %3480
      %3482 = vrot.lane.b32.xlu0 %v3393, 16
      %v3483 = vpop.permute.xlu0 %3482
      %3484 = vrot.lane.b32.xlu0 %v3394, 16
      %v3485 = vpop.permute.xlu0 %3484
      %3486 = vrot.lane.b32.xlu0 %v3395, 16
      %v3487 = vpop.permute.xlu0 %3486
      %3488 = vrot.lane.b32.xlu0 %v3396, 16
      %v3489 = vpop.permute.xlu0 %3488
      %3490 = vrot.lane.b32.xlu0 %v3397, 16
      %v3491 = vpop.permute.xlu0 %3490
      %3492 = vrot.lane.b32.xlu0 %v3398, 16
      %v3493 = vpop.permute.xlu0 %3492
      %3494 = vrot.lane.b32.xlu0 %v3399, 16
      %v3495 = vpop.permute.xlu0 %3494
      %3528 = vst.msk [vmem:[#allocation3] sm:$0xff] %vm1172, %v3433
      %3529 = vst.msk [vmem:[#allocation3 + $0x8] sm:$0xff] %vm1172, %v3435
      %3530 = vst.msk [vmem:[#allocation3 + $0x10] sm:$0xff] %vm1172, %v3437
      %3531 = vst.msk [vmem:[#allocation3 + $0x18] sm:$0xff] %vm1172, %v3439
      %3532 = vst.msk [vmem:[#allocation3 + $0x20] sm:$0xff] %vm1172, %v3441
      %3533 = vst.msk [vmem:[#allocation3 + $0x28] sm:$0xff] %vm1172, %v3443
      %3534 = vst.msk [vmem:[#allocation3 + $0x30] sm:$0xff] %vm1172, %v3445
      %3535 = vst.msk [vmem:[#allocation3 + $0x38] sm:$0xff] %vm1172, %v3447
      %3536 = vst.msk [vmem:[#allocation3 + $0x40] sm:$0xff] %vm1172, %v3449
      %3537 = vst.msk [vmem:[#allocation3 + $0x48] sm:$0xff] %vm1172, %v3451
      %3538 = vst.msk [vmem:[#allocation3 + $0x50] sm:$0xff] %vm1172, %v3453
      %3539 = vst.msk [vmem:[#allocation3 + $0x58] sm:$0xff] %vm1172, %v3455
      %3540 = vst.msk [vmem:[#allocation3 + $0x60] sm:$0xff] %vm1172, %v3457
      %3541 = vst.msk [vmem:[#allocation3 + $0x68] sm:$0xff] %vm1172, %v3459
      %3542 = vst.msk [vmem:[#allocation3 + $0x70] sm:$0xff] %vm1172, %v3461
      %3543 = vst.msk [vmem:[#allocation3 + $0x78] sm:$0xff] %vm1172, %v3463
      %3544 = vst.msk [vmem:[#allocation3 + $0x80] sm:$0xff] %vm1172, %v3465
      %3545 = vst.msk [vmem:[#allocation3 + $0x88] sm:$0xff] %vm1172, %v3467
      %3546 = vst.msk [vmem:[#allocation3 + $0x90] sm:$0xff] %vm1172, %v3469
      %3547 = vst.msk [vmem:[#allocation3 + $0x98] sm:$0xff] %vm1172, %v3471
      %3548 = vst.msk [vmem:[#allocation3 + $0xa0] sm:$0xff] %vm1172, %v3473
      %3549 = vst.msk [vmem:[#allocation3 + $0xa8] sm:$0xff] %vm1172, %v3475
      %3550 = vst.msk [vmem:[#allocation3 + $0xb0] sm:$0xff] %vm1172, %v3477
      %3551 = vst.msk [vmem:[#allocation3 + $0xb8] sm:$0xff] %vm1172, %v3479
      %3552 = vst.msk [vmem:[#allocation3 + $0xc0] sm:$0xff] %vm1172, %v3481
      %3553 = vst.msk [vmem:[#allocation3 + $0xc8] sm:$0xff] %vm1172, %v3483
      %3554 = vst.msk [vmem:[#allocation3 + $0xd0] sm:$0xff] %vm1172, %v3485
      %3555 = vst.msk [vmem:[#allocation3 + $0xd8] sm:$0xff] %vm1172, %v3487
      %3556 = vst.msk [vmem:[#allocation3 + $0xe0] sm:$0xff] %vm1172, %v3489
      %3557 = vst.msk [vmem:[#allocation3 + $0xe8] sm:$0xff] %vm1172, %v3491
      %3558 = vst.msk [vmem:[#allocation3 + $0xf0] sm:$0xff] %vm1172, %v3493
      %3559 = vst.msk [vmem:[#allocation3 + $0xf8] sm:$0xff] %vm1172, %v3495
      %v3560 = vld [vmem:[%s257 + $0x2] sm:$0xff]
      %v3561 = vld [vmem:[%s257 + $0xa] sm:$0xff]
      %v3562 = vld [vmem:[%s257 + $0x1a] sm:$0xff]
      %v3563 = vld [vmem:[%s257 + $0x22] sm:$0xff]
      %v3564 = vld [vmem:[%s257 + $0x32] sm:$0xff]
      %v3565 = vld [vmem:[%s257 + $0x3a] sm:$0xff]
      %v3566 = vld [vmem:[%s257 + $0x4a] sm:$0xff]
      %v3567 = vld [vmem:[%s257 + $0x52] sm:$0xff]
      %v3568 = vld [vmem:[%s257 + $0x62] sm:$0xff]
      %v3569 = vld [vmem:[%s257 + $0x6a] sm:$0xff]
      %v3570 = vld [vmem:[%s257 + $0x7a] sm:$0xff]
      %v3571 = vld [vmem:[%s257 + $0x82] sm:$0xff]
      %v3572 = vld [vmem:[%s257 + $0x92] sm:$0xff]
      %v3573 = vld [vmem:[%s257 + $0x9a] sm:$0xff]
      %v3574 = vld [vmem:[%s257 + $0xaa] sm:$0xff]
      %v3575 = vld [vmem:[%s257 + $0xb2] sm:$0xff]
      %v3576 = vld [vmem:[%s257 + $0xc2] sm:$0xff]
      %v3577 = vld [vmem:[%s257 + $0xca] sm:$0xff]
      %v3578 = vld [vmem:[%s257 + $0xda] sm:$0xff]
      %v3579 = vld [vmem:[%s257 + $0xe2] sm:$0xff]
      %v3580 = vld [vmem:[%s257 + $0xf2] sm:$0xff]
      %v3581 = vld [vmem:[%s257 + $0xfa] sm:$0xff]
      %v3582 = vld [vmem:[%s257 + $0x10a] sm:$0xff]
      %v3583 = vld [vmem:[%s257 + $0x112] sm:$0xff]
      %v3584 = vld [vmem:[%s257 + $0x122] sm:$0xff]
      %v3585 = vld [vmem:[%s257 + $0x12a] sm:$0xff]
      %v3586 = vld [vmem:[%s257 + $0x13a] sm:$0xff]
      %v3587 = vld [vmem:[%s257 + $0x142] sm:$0xff]
      %v3588 = vld [vmem:[%s257 + $0x152] sm:$0xff]
      %v3589 = vld [vmem:[%s257 + $0x15a] sm:$0xff]
      %v3590 = vld [vmem:[%s257 + $0x16a] sm:$0xff]
      %v3591 = vld [vmem:[%s257 + $0x172] sm:$0xff]
      %3624 = vrot.lane.b32.xlu0 %v3560, 20
      %v3625 = vpop.permute.xlu0 %3624
      %3626 = vrot.lane.b32.xlu0 %v3561, 20
      %v3627 = vpop.permute.xlu0 %3626
      %3628 = vrot.lane.b32.xlu0 %v3562, 20
      %v3629 = vpop.permute.xlu0 %3628
      %3630 = vrot.lane.b32.xlu0 %v3563, 20
      %v3631 = vpop.permute.xlu0 %3630
      %3632 = vrot.lane.b32.xlu0 %v3564, 20
      %v3633 = vpop.permute.xlu0 %3632
      %3634 = vrot.lane.b32.xlu0 %v3565, 20
      %v3635 = vpop.permute.xlu0 %3634
      %3636 = vrot.lane.b32.xlu0 %v3566, 20
      %v3637 = vpop.permute.xlu0 %3636
      %3638 = vrot.lane.b32.xlu0 %v3567, 20
      %v3639 = vpop.permute.xlu0 %3638
      %3640 = vrot.lane.b32.xlu0 %v3568, 20
      %v3641 = vpop.permute.xlu0 %3640
      %3642 = vrot.lane.b32.xlu0 %v3569, 20
      %v3643 = vpop.permute.xlu0 %3642
      %3644 = vrot.lane.b32.xlu0 %v3570, 20
      %v3645 = vpop.permute.xlu0 %3644
      %3646 = vrot.lane.b32.xlu0 %v3571, 20
      %v3647 = vpop.permute.xlu0 %3646
      %3648 = vrot.lane.b32.xlu0 %v3572, 20
      %v3649 = vpop.permute.xlu0 %3648
      %3650 = vrot.lane.b32.xlu0 %v3573, 20
      %v3651 = vpop.permute.xlu0 %3650
      %3652 = vrot.lane.b32.xlu0 %v3574, 20
      %v3653 = vpop.permute.xlu0 %3652
      %3654 = vrot.lane.b32.xlu0 %v3575, 20
      %v3655 = vpop.permute.xlu0 %3654
      %3656 = vrot.lane.b32.xlu0 %v3576, 20
      %v3657 = vpop.permute.xlu0 %3656
      %3658 = vrot.lane.b32.xlu0 %v3577, 20
      %v3659 = vpop.permute.xlu0 %3658
      %3660 = vrot.lane.b32.xlu0 %v3578, 20
      %v3661 = vpop.permute.xlu0 %3660
      %3662 = vrot.lane.b32.xlu0 %v3579, 20
      %v3663 = vpop.permute.xlu0 %3662
      %3664 = vrot.lane.b32.xlu0 %v3580, 20
      %v3665 = vpop.permute.xlu0 %3664
      %3666 = vrot.lane.b32.xlu0 %v3581, 20
      %v3667 = vpop.permute.xlu0 %3666
      %3668 = vrot.lane.b32.xlu0 %v3582, 20
      %v3669 = vpop.permute.xlu0 %3668
      %3670 = vrot.lane.b32.xlu0 %v3583, 20
      %v3671 = vpop.permute.xlu0 %3670
      %3672 = vrot.lane.b32.xlu0 %v3584, 20
      %v3673 = vpop.permute.xlu0 %3672
      %3674 = vrot.lane.b32.xlu0 %v3585, 20
      %v3675 = vpop.permute.xlu0 %3674
      %3676 = vrot.lane.b32.xlu0 %v3586, 20
      %v3677 = vpop.permute.xlu0 %3676
      %3678 = vrot.lane.b32.xlu0 %v3587, 20
      %v3679 = vpop.permute.xlu0 %3678
      %3680 = vrot.lane.b32.xlu0 %v3588, 20
      %v3681 = vpop.permute.xlu0 %3680
      %3682 = vrot.lane.b32.xlu0 %v3589, 20
      %v3683 = vpop.permute.xlu0 %3682
      %3684 = vrot.lane.b32.xlu0 %v3590, 20
      %v3685 = vpop.permute.xlu0 %3684
      %3686 = vrot.lane.b32.xlu0 %v3591, 20
      %v3687 = vpop.permute.xlu0 %3686
      %3720 = vst.msk [vmem:[#allocation3] sm:$0xff] %vm1365, %v3625
      %3721 = vst.msk [vmem:[#allocation3 + $0x8] sm:$0xff] %vm1365, %v3627
      %3722 = vst.msk [vmem:[#allocation3 + $0x10] sm:$0xff] %vm1365, %v3629
      %3723 = vst.msk [vmem:[#allocation3 + $0x18] sm:$0xff] %vm1365, %v3631
      %3724 = vst.msk [vmem:[#allocation3 + $0x20] sm:$0xff] %vm1365, %v3633
      %3725 = vst.msk [vmem:[#allocation3 + $0x28] sm:$0xff] %vm1365, %v3635
      %3726 = vst.msk [vmem:[#allocation3 + $0x30] sm:$0xff] %vm1365, %v3637
      %3727 = vst.msk [vmem:[#allocation3 + $0x38] sm:$0xff] %vm1365, %v3639
      %3728 = vst.msk [vmem:[#allocation3 + $0x40] sm:$0xff] %vm1365, %v3641
      %3729 = vst.msk [vmem:[#allocation3 + $0x48] sm:$0xff] %vm1365, %v3643
      %3730 = vst.msk [vmem:[#allocation3 + $0x50] sm:$0xff] %vm1365, %v3645
      %3731 = vst.msk [vmem:[#allocation3 + $0x58] sm:$0xff] %vm1365, %v3647
      %3732 = vst.msk [vmem:[#allocation3 + $0x60] sm:$0xff] %vm1365, %v3649
      %3733 = vst.msk [vmem:[#allocation3 + $0x68] sm:$0xff] %vm1365, %v3651
      %3734 = vst.msk [vmem:[#allocation3 + $0x70] sm:$0xff] %vm1365, %v3653
      %3735 = vst.msk [vmem:[#allocation3 + $0x78] sm:$0xff] %vm1365, %v3655
      %3736 = vst.msk [vmem:[#allocation3 + $0x80] sm:$0xff] %vm1365, %v3657
      %3737 = vst.msk [vmem:[#allocation3 + $0x88] sm:$0xff] %vm1365, %v3659
      %3738 = vst.msk [vmem:[#allocation3 + $0x90] sm:$0xff] %vm1365, %v3661
      %3739 = vst.msk [vmem:[#allocation3 + $0x98] sm:$0xff] %vm1365, %v3663
      %3740 = vst.msk [vmem:[#allocation3 + $0xa0] sm:$0xff] %vm1365, %v3665
      %3741 = vst.msk [vmem:[#allocation3 + $0xa8] sm:$0xff] %vm1365, %v3667
      %3742 = vst.msk [vmem:[#allocation3 + $0xb0] sm:$0xff] %vm1365, %v3669
      %3743 = vst.msk [vmem:[#allocation3 + $0xb8] sm:$0xff] %vm1365, %v3671
      %3744 = vst.msk [vmem:[#allocation3 + $0xc0] sm:$0xff] %vm1365, %v3673
      %3745 = vst.msk [vmem:[#allocation3 + $0xc8] sm:$0xff] %vm1365, %v3675
      %3746 = vst.msk [vmem:[#allocation3 + $0xd0] sm:$0xff] %vm1365, %v3677
      %3747 = vst.msk [vmem:[#allocation3 + $0xd8] sm:$0xff] %vm1365, %v3679
      %3748 = vst.msk [vmem:[#allocation3 + $0xe0] sm:$0xff] %vm1365, %v3681
      %3749 = vst.msk [vmem:[#allocation3 + $0xe8] sm:$0xff] %vm1365, %v3683
      %3750 = vst.msk [vmem:[#allocation3 + $0xf0] sm:$0xff] %vm1365, %v3685
      %3751 = vst.msk [vmem:[#allocation3 + $0xf8] sm:$0xff] %vm1365, %v3687
      %v3752 = vld [vmem:[%s1398] sm:$0xff]
      %v3753 = vld [vmem:[%s1398 + $0x8] sm:$0xff]
      %v3754 = vld [vmem:[%s1398 + $0x18] sm:$0xff]
      %v3755 = vld [vmem:[%s1398 + $0x20] sm:$0xff]
      %v3756 = vld [vmem:[%s1398 + $0x30] sm:$0xff]
      %v3757 = vld [vmem:[%s1398 + $0x38] sm:$0xff]
      %v3758 = vld [vmem:[%s1398 + $0x48] sm:$0xff]
      %v3759 = vld [vmem:[%s1398 + $0x50] sm:$0xff]
      %v3760 = vld [vmem:[%s1398 + $0x60] sm:$0xff]
      %v3761 = vld [vmem:[%s1398 + $0x68] sm:$0xff]
      %v3762 = vld [vmem:[%s1398 + $0x78] sm:$0xff]
      %v3763 = vld [vmem:[%s1398 + $0x80] sm:$0xff]
      %v3764 = vld [vmem:[%s1398 + $0x90] sm:$0xff]
      %v3765 = vld [vmem:[%s1398 + $0x98] sm:$0xff]
      %v3766 = vld [vmem:[%s1398 + $0xa8] sm:$0xff]
      %v3767 = vld [vmem:[%s1398 + $0xb0] sm:$0xff]
      %v3768 = vld [vmem:[%s1398 + $0xc0] sm:$0xff]
      %v3769 = vld [vmem:[%s1398 + $0xc8] sm:$0xff]
      %v3770 = vld [vmem:[%s1398 + $0xd8] sm:$0xff]
      %v3771 = vld [vmem:[%s1398 + $0xe0] sm:$0xff]
      %v3772 = vld [vmem:[%s1398 + $0xf0] sm:$0xff]
      %v3773 = vld [vmem:[%s1398 + $0xf8] sm:$0xff]
      %v3774 = vld [vmem:[%s1398 + $0x108] sm:$0xff]
      %v3775 = vld [vmem:[%s1398 + $0x110] sm:$0xff]
      %v3776 = vld [vmem:[%s1398 + $0x120] sm:$0xff]
      %v3777 = vld [vmem:[%s1398 + $0x128] sm:$0xff]
      %v3778 = vld [vmem:[%s1398 + $0x138] sm:$0xff]
      %v3779 = vld [vmem:[%s1398 + $0x140] sm:$0xff]
      %v3780 = vld [vmem:[%s1398 + $0x150] sm:$0xff]
      %v3781 = vld [vmem:[%s1398 + $0x158] sm:$0xff]
      %v3782 = vld [vmem:[%s1398 + $0x168] sm:$0xff]
      %v3783 = vld [vmem:[%s1398 + $0x170] sm:$0xff]
      %3816 = vrot.lane.b32.xlu0 %v3752, 24
      %v3817 = vpop.permute.xlu0 %3816
      %3818 = vrot.lane.b32.xlu0 %v3753, 24
      %v3819 = vpop.permute.xlu0 %3818
      %3820 = vrot.lane.b32.xlu0 %v3754, 24
      %v3821 = vpop.permute.xlu0 %3820
      %3822 = vrot.lane.b32.xlu0 %v3755, 24
      %v3823 = vpop.permute.xlu0 %3822
      %3824 = vrot.lane.b32.xlu0 %v3756, 24
      %v3825 = vpop.permute.xlu0 %3824
      %3826 = vrot.lane.b32.xlu0 %v3757, 24
      %v3827 = vpop.permute.xlu0 %3826
      %3828 = vrot.lane.b32.xlu0 %v3758, 24
      %v3829 = vpop.permute.xlu0 %3828
      %3830 = vrot.lane.b32.xlu0 %v3759, 24
      %v3831 = vpop.permute.xlu0 %3830
      %3832 = vrot.lane.b32.xlu0 %v3760, 24
      %v3833 = vpop.permute.xlu0 %3832
      %3834 = vrot.lane.b32.xlu0 %v3761, 24
      %v3835 = vpop.permute.xlu0 %3834
      %3836 = vrot.lane.b32.xlu0 %v3762, 24
      %v3837 = vpop.permute.xlu0 %3836
      %3838 = vrot.lane.b32.xlu0 %v3763, 24
      %v3839 = vpop.permute.xlu0 %3838
      %3840 = vrot.lane.b32.xlu0 %v3764, 24
      %v3841 = vpop.permute.xlu0 %3840
      %3842 = vrot.lane.b32.xlu0 %v3765, 24
      %v3843 = vpop.permute.xlu0 %3842
      %3844 = vrot.lane.b32.xlu0 %v3766, 24
      %v3845 = vpop.permute.xlu0 %3844
      %3846 = vrot.lane.b32.xlu0 %v3767, 24
      %v3847 = vpop.permute.xlu0 %3846
      %3848 = vrot.lane.b32.xlu0 %v3768, 24
      %v3849 = vpop.permute.xlu0 %3848
      %3850 = vrot.lane.b32.xlu0 %v3769, 24
      %v3851 = vpop.permute.xlu0 %3850
      %3852 = vrot.lane.b32.xlu0 %v3770, 24
      %v3853 = vpop.permute.xlu0 %3852
      %3854 = vrot.lane.b32.xlu0 %v3771, 24
      %v3855 = vpop.permute.xlu0 %3854
      %3856 = vrot.lane.b32.xlu0 %v3772, 24
      %v3857 = vpop.permute.xlu0 %3856
      %3858 = vrot.lane.b32.xlu0 %v3773, 24
      %v3859 = vpop.permute.xlu0 %3858
      %3860 = vrot.lane.b32.xlu0 %v3774, 24
      %v3861 = vpop.permute.xlu0 %3860
      %3862 = vrot.lane.b32.xlu0 %v3775, 24
      %v3863 = vpop.permute.xlu0 %3862
      %3864 = vrot.lane.b32.xlu0 %v3776, 24
      %v3865 = vpop.permute.xlu0 %3864
      %3866 = vrot.lane.b32.xlu0 %v3777, 24
      %v3867 = vpop.permute.xlu0 %3866
      %3868 = vrot.lane.b32.xlu0 %v3778, 24
      %v3869 = vpop.permute.xlu0 %3868
      %3870 = vrot.lane.b32.xlu0 %v3779, 24
      %v3871 = vpop.permute.xlu0 %3870
      %3872 = vrot.lane.b32.xlu0 %v3780, 24
      %v3873 = vpop.permute.xlu0 %3872
      %3874 = vrot.lane.b32.xlu0 %v3781, 24
      %v3875 = vpop.permute.xlu0 %3874
      %3876 = vrot.lane.b32.xlu0 %v3782, 24
      %v3877 = vpop.permute.xlu0 %3876
      %3878 = vrot.lane.b32.xlu0 %v3783, 24
      %v3879 = vpop.permute.xlu0 %3878
      %3912 = vst.msk [vmem:[#allocation3] sm:$0xff] %vm1559, %v3817
      %3913 = vst.msk [vmem:[#allocation3 + $0x8] sm:$0xff] %vm1559, %v3819
      %3914 = vst.msk [vmem:[#allocation3 + $0x10] sm:$0xff] %vm1559, %v3821
      %3915 = vst.msk [vmem:[#allocation3 + $0x18] sm:$0xff] %vm1559, %v3823
      %3916 = vst.msk [vmem:[#allocation3 + $0x20] sm:$0xff] %vm1559, %v3825
      %3917 = vst.msk [vmem:[#allocation3 + $0x28] sm:$0xff] %vm1559, %v3827
      %3918 = vst.msk [vmem:[#allocation3 + $0x30] sm:$0xff] %vm1559, %v3829
      %3919 = vst.msk [vmem:[#allocation3 + $0x38] sm:$0xff] %vm1559, %v3831
      %3920 = vst.msk [vmem:[#allocation3 + $0x40] sm:$0xff] %vm1559, %v3833
      %3921 = vst.msk [vmem:[#allocation3 + $0x48] sm:$0xff] %vm1559, %v3835
      %3922 = vst.msk [vmem:[#allocation3 + $0x50] sm:$0xff] %vm1559, %v3837
      %3923 = vst.msk [vmem:[#allocation3 + $0x58] sm:$0xff] %vm1559, %v3839
      %3924 = vst.msk [vmem:[#allocation3 + $0x60] sm:$0xff] %vm1559, %v3841
      %3925 = vst.msk [vmem:[#allocation3 + $0x68] sm:$0xff] %vm1559, %v3843
      %3926 = vst.msk [vmem:[#allocation3 + $0x70] sm:$0xff] %vm1559, %v3845
      %3927 = vst.msk [vmem:[#allocation3 + $0x78] sm:$0xff] %vm1559, %v3847
      %3928 = vst.msk [vmem:[#allocation3 + $0x80] sm:$0xff] %vm1559, %v3849
      %3929 = vst.msk [vmem:[#allocation3 + $0x88] sm:$0xff] %vm1559, %v3851
      %3930 = vst.msk [vmem:[#allocation3 + $0x90] sm:$0xff] %vm1559, %v3853
      %3931 = vst.msk [vmem:[#allocation3 + $0x98] sm:$0xff] %vm1559, %v3855
      %3932 = vst.msk [vmem:[#allocation3 + $0xa0] sm:$0xff] %vm1559, %v3857
      %3933 = vst.msk [vmem:[#allocation3 + $0xa8] sm:$0xff] %vm1559, %v3859
      %3934 = vst.msk [vmem:[#allocation3 + $0xb0] sm:$0xff] %vm1559, %v3861
      %3935 = vst.msk [vmem:[#allocation3 + $0xb8] sm:$0xff] %vm1559, %v3863
      %3936 = vst.msk [vmem:[#allocation3 + $0xc0] sm:$0xff] %vm1559, %v3865
      %3937 = vst.msk [vmem:[#allocation3 + $0xc8] sm:$0xff] %vm1559, %v3867
      %3938 = vst.msk [vmem:[#allocation3 + $0xd0] sm:$0xff] %vm1559, %v3869
      %3939 = vst.msk [vmem:[#allocation3 + $0xd8] sm:$0xff] %vm1559, %v3871
      %3940 = vst.msk [vmem:[#allocation3 + $0xe0] sm:$0xff] %vm1559, %v3873
      %3941 = vst.msk [vmem:[#allocation3 + $0xe8] sm:$0xff] %vm1559, %v3875
      %3942 = vst.msk [vmem:[#allocation3 + $0xf0] sm:$0xff] %vm1559, %v3877
      %3943 = vst.msk [vmem:[#allocation3 + $0xf8] sm:$0xff] %vm1559, %v3879
      %v3944 = vld [vmem:[%s1398 + $0x1] sm:$0xff]
      %v3945 = vld [vmem:[%s1398 + $0x9] sm:$0xff]
      %v3946 = vld [vmem:[%s1398 + $0x19] sm:$0xff]
      %v3947 = vld [vmem:[%s1398 + $0x21] sm:$0xff]
      %v3948 = vld [vmem:[%s1398 + $0x31] sm:$0xff]
      %v3949 = vld [vmem:[%s1398 + $0x39] sm:$0xff]
      %v3950 = vld [vmem:[%s1398 + $0x49] sm:$0xff]
      %v3951 = vld [vmem:[%s1398 + $0x51] sm:$0xff]
      %v3952 = vld [vmem:[%s1398 + $0x61] sm:$0xff]
      %v3953 = vld [vmem:[%s1398 + $0x69] sm:$0xff]
      %v3954 = vld [vmem:[%s1398 + $0x79] sm:$0xff]
      %v3955 = vld [vmem:[%s1398 + $0x81] sm:$0xff]
      %v3956 = vld [vmem:[%s1398 + $0x91] sm:$0xff]
      %v3957 = vld [vmem:[%s1398 + $0x99] sm:$0xff]
      %v3958 = vld [vmem:[%s1398 + $0xa9] sm:$0xff]
      %v3959 = vld [vmem:[%s1398 + $0xb1] sm:$0xff]
      %v3960 = vld [vmem:[%s1398 + $0xc1] sm:$0xff]
      %v3961 = vld [vmem:[%s1398 + $0xc9] sm:$0xff]
      %v3962 = vld [vmem:[%s1398 + $0xd9] sm:$0xff]
      %v3963 = vld [vmem:[%s1398 + $0xe1] sm:$0xff]
      %v3964 = vld [vmem:[%s1398 + $0xf1] sm:$0xff]
      %v3965 = vld [vmem:[%s1398 + $0xf9] sm:$0xff]
      %v3966 = vld [vmem:[%s1398 + $0x109] sm:$0xff]
      %v3967 = vld [vmem:[%s1398 + $0x111] sm:$0xff]
      %v3968 = vld [vmem:[%s1398 + $0x121] sm:$0xff]
      %v3969 = vld [vmem:[%s1398 + $0x129] sm:$0xff]
      %v3970 = vld [vmem:[%s1398 + $0x139] sm:$0xff]
      %v3971 = vld [vmem:[%s1398 + $0x141] sm:$0xff]
      %v3972 = vld [vmem:[%s1398 + $0x151] sm:$0xff]
      %v3973 = vld [vmem:[%s1398 + $0x159] sm:$0xff]
      %v3974 = vld [vmem:[%s1398 + $0x169] sm:$0xff]
      %v3975 = vld [vmem:[%s1398 + $0x171] sm:$0xff]
      %4008 = vrot.lane.b32.xlu0 %v3944, 28
      %v4009 = vpop.permute.xlu0 %4008
      %4010 = vrot.lane.b32.xlu0 %v3945, 28
      %v4011 = vpop.permute.xlu0 %4010
      %4012 = vrot.lane.b32.xlu0 %v3946, 28
      %v4013 = vpop.permute.xlu0 %4012
      %4014 = vrot.lane.b32.xlu0 %v3947, 28
      %v4015 = vpop.permute.xlu0 %4014
      %4016 = vrot.lane.b32.xlu0 %v3948, 28
      %v4017 = vpop.permute.xlu0 %4016
      %4018 = vrot.lane.b32.xlu0 %v3949, 28
      %v4019 = vpop.permute.xlu0 %4018
      %4020 = vrot.lane.b32.xlu0 %v3950, 28
      %v4021 = vpop.permute.xlu0 %4020
      %4022 = vrot.lane.b32.xlu0 %v3951, 28
      %v4023 = vpop.permute.xlu0 %4022
      %4024 = vrot.lane.b32.xlu0 %v3952, 28
      %v4025 = vpop.permute.xlu0 %4024
      %4026 = vrot.lane.b32.xlu0 %v3953, 28
      %v4027 = vpop.permute.xlu0 %4026
      %4028 = vrot.lane.b32.xlu0 %v3954, 28
      %v4029 = vpop.permute.xlu0 %4028
      %4030 = vrot.lane.b32.xlu0 %v3955, 28
      %v4031 = vpop.permute.xlu0 %4030
      %4032 = vrot.lane.b32.xlu0 %v3956, 28
      %v4033 = vpop.permute.xlu0 %4032
      %4034 = vrot.lane.b32.xlu0 %v3957, 28
      %v4035 = vpop.permute.xlu0 %4034
      %4036 = vrot.lane.b32.xlu0 %v3958, 28
      %v4037 = vpop.permute.xlu0 %4036
      %4038 = vrot.lane.b32.xlu0 %v3959, 28
      %v4039 = vpop.permute.xlu0 %4038
      %4040 = vrot.lane.b32.xlu0 %v3960, 28
      %v4041 = vpop.permute.xlu0 %4040
      %4042 = vrot.lane.b32.xlu0 %v3961, 28
      %v4043 = vpop.permute.xlu0 %4042
      %4044 = vrot.lane.b32.xlu0 %v3962, 28
      %v4045 = vpop.permute.xlu0 %4044
      %4046 = vrot.lane.b32.xlu0 %v3963, 28
      %v4047 = vpop.permute.xlu0 %4046
      %4048 = vrot.lane.b32.xlu0 %v3964, 28
      %v4049 = vpop.permute.xlu0 %4048
      %4050 = vrot.lane.b32.xlu0 %v3965, 28
      %v4051 = vpop.permute.xlu0 %4050
      %4052 = vrot.lane.b32.xlu0 %v3966, 28
      %v4053 = vpop.permute.xlu0 %4052
      %4054 = vrot.lane.b32.xlu0 %v3967, 28
      %v4055 = vpop.permute.xlu0 %4054
      %4056 = vrot.lane.b32.xlu0 %v3968, 28
      %v4057 = vpop.permute.xlu0 %4056
      %4058 = vrot.lane.b32.xlu0 %v3969, 28
      %v4059 = vpop.permute.xlu0 %4058
      %4060 = vrot.lane.b32.xlu0 %v3970, 28
      %v4061 = vpop.permute.xlu0 %4060
      %4062 = vrot.lane.b32.xlu0 %v3971, 28
      %v4063 = vpop.permute.xlu0 %4062
      %4064 = vrot.lane.b32.xlu0 %v3972, 28
      %v4065 = vpop.permute.xlu0 %4064
      %4066 = vrot.lane.b32.xlu0 %v3973, 28
      %v4067 = vpop.permute.xlu0 %4066
      %4068 = vrot.lane.b32.xlu0 %v3974, 28
      %v4069 = vpop.permute.xlu0 %4068
      %4070 = vrot.lane.b32.xlu0 %v3975, 28
      %v4071 = vpop.permute.xlu0 %4070
      %4104 = vst.msk [vmem:[#allocation3] sm:$0xff] %vm1752, %v4009
      %4105 = vst.msk [vmem:[#allocation3 + $0x8] sm:$0xff] %vm1752, %v4011
      %4106 = vst.msk [vmem:[#allocation3 + $0x10] sm:$0xff] %vm1752, %v4013
      %4107 = vst.msk [vmem:[#allocation3 + $0x18] sm:$0xff] %vm1752, %v4015
      %4108 = vst.msk [vmem:[#allocation3 + $0x20] sm:$0xff] %vm1752, %v4017
      %4109 = vst.msk [vmem:[#allocation3 + $0x28] sm:$0xff] %vm1752, %v4019
      %4110 = vst.msk [vmem:[#allocation3 + $0x30] sm:$0xff] %vm1752, %v4021
      %4111 = vst.msk [vmem:[#allocation3 + $0x38] sm:$0xff] %vm1752, %v4023
      %4112 = vst.msk [vmem:[#allocation3 + $0x40] sm:$0xff] %vm1752, %v4025
      %4113 = vst.msk [vmem:[#allocation3 + $0x48] sm:$0xff] %vm1752, %v4027
      %4114 = vst.msk [vmem:[#allocation3 + $0x50] sm:$0xff] %vm1752, %v4029
      %4115 = vst.msk [vmem:[#allocation3 + $0x58] sm:$0xff] %vm1752, %v4031
      %4116 = vst.msk [vmem:[#allocation3 + $0x60] sm:$0xff] %vm1752, %v4033
      %4117 = vst.msk [vmem:[#allocation3 + $0x68] sm:$0xff] %vm1752, %v4035
      %4118 = vst.msk [vmem:[#allocation3 + $0x70] sm:$0xff] %vm1752, %v4037
      %4119 = vst.msk [vmem:[#allocation3 + $0x78] sm:$0xff] %vm1752, %v4039
      %4120 = vst.msk [vmem:[#allocation3 + $0x80] sm:$0xff] %vm1752, %v4041
      %4121 = vst.msk [vmem:[#allocation3 + $0x88] sm:$0xff] %vm1752, %v4043
      %4122 = vst.msk [vmem:[#allocation3 + $0x90] sm:$0xff] %vm1752, %v4045
      %4123 = vst.msk [vmem:[#allocation3 + $0x98] sm:$0xff] %vm1752, %v4047
      %4124 = vst.msk [vmem:[#allocation3 + $0xa0] sm:$0xff] %vm1752, %v4049
      %4125 = vst.msk [vmem:[#allocation3 + $0xa8] sm:$0xff] %vm1752, %v4051
      %4126 = vst.msk [vmem:[#allocation3 + $0xb0] sm:$0xff] %vm1752, %v4053
      %4127 = vst.msk [vmem:[#allocation3 + $0xb8] sm:$0xff] %vm1752, %v4055
      %4128 = vst.msk [vmem:[#allocation3 + $0xc0] sm:$0xff] %vm1752, %v4057
      %4129 = vst.msk [vmem:[#allocation3 + $0xc8] sm:$0xff] %vm1752, %v4059
      %4130 = vst.msk [vmem:[#allocation3 + $0xd0] sm:$0xff] %vm1752, %v4061
      %4131 = vst.msk [vmem:[#allocation3 + $0xd8] sm:$0xff] %vm1752, %v4063
      %4132 = vst.msk [vmem:[#allocation3 + $0xe0] sm:$0xff] %vm1752, %v4065
      %4133 = vst.msk [vmem:[#allocation3 + $0xe8] sm:$0xff] %vm1752, %v4067
      %4134 = vst.msk [vmem:[#allocation3 + $0xf0] sm:$0xff] %vm1752, %v4069
      %4135 = vst.msk [vmem:[#allocation3 + $0xf8] sm:$0xff] %vm1752, %v4071
      %v4136 = vld [vmem:[%s1398 + $0x2] sm:$0xff]
      %v4137 = vld [vmem:[%s1398 + $0xa] sm:$0xff]
      %v4138 = vld [vmem:[%s1398 + $0x1a] sm:$0xff]
      %v4139 = vld [vmem:[%s1398 + $0x22] sm:$0xff]
      %v4140 = vld [vmem:[%s1398 + $0x32] sm:$0xff]
      %v4141 = vld [vmem:[%s1398 + $0x3a] sm:$0xff]
      %v4142 = vld [vmem:[%s1398 + $0x4a] sm:$0xff]
      %v4143 = vld [vmem:[%s1398 + $0x52] sm:$0xff]
      %v4144 = vld [vmem:[%s1398 + $0x62] sm:$0xff]
      %v4145 = vld [vmem:[%s1398 + $0x6a] sm:$0xff]
      %v4146 = vld [vmem:[%s1398 + $0x7a] sm:$0xff]
      %v4147 = vld [vmem:[%s1398 + $0x82] sm:$0xff]
      %v4148 = vld [vmem:[%s1398 + $0x92] sm:$0xff]
      %v4149 = vld [vmem:[%s1398 + $0x9a] sm:$0xff]
      %v4150 = vld [vmem:[%s1398 + $0xaa] sm:$0xff]
      %v4151 = vld [vmem:[%s1398 + $0xb2] sm:$0xff]
      %v4152 = vld [vmem:[%s1398 + $0xc2] sm:$0xff]
      %v4153 = vld [vmem:[%s1398 + $0xca] sm:$0xff]
      %v4154 = vld [vmem:[%s1398 + $0xda] sm:$0xff]
      %v4155 = vld [vmem:[%s1398 + $0xe2] sm:$0xff]
      %v4156 = vld [vmem:[%s1398 + $0xf2] sm:$0xff]
      %v4157 = vld [vmem:[%s1398 + $0xfa] sm:$0xff]
      %v4158 = vld [vmem:[%s1398 + $0x10a] sm:$0xff]
      %v4159 = vld [vmem:[%s1398 + $0x112] sm:$0xff]
      %v4160 = vld [vmem:[%s1398 + $0x122] sm:$0xff]
      %v4161 = vld [vmem:[%s1398 + $0x12a] sm:$0xff]
      %v4162 = vld [vmem:[%s1398 + $0x13a] sm:$0xff]
      %v4163 = vld [vmem:[%s1398 + $0x142] sm:$0xff]
      %v4164 = vld [vmem:[%s1398 + $0x152] sm:$0xff]
      %v4165 = vld [vmem:[%s1398 + $0x15a] sm:$0xff]
      %v4166 = vld [vmem:[%s1398 + $0x16a] sm:$0xff]
      %v4167 = vld [vmem:[%s1398 + $0x172] sm:$0xff]
      %4200 = vrot.lane.b32.xlu0 %v4136, 32
      %v4201 = vpop.permute.xlu0 %4200
      %4202 = vrot.lane.b32.xlu0 %v4137, 32
      %v4203 = vpop.permute.xlu0 %4202
      %4204 = vrot.lane.b32.xlu0 %v4138, 32
      %v4205 = vpop.permute.xlu0 %4204
      %4206 = vrot.lane.b32.xlu0 %v4139, 32
      %v4207 = vpop.permute.xlu0 %4206
      %4208 = vrot.lane.b32.xlu0 %v4140, 32
      %v4209 = vpop.permute.xlu0 %4208
      %4210 = vrot.lane.b32.xlu0 %v4141, 32
      %v4211 = vpop.permute.xlu0 %4210
      %4212 = vrot.lane.b32.xlu0 %v4142, 32
      %v4213 = vpop.permute.xlu0 %4212
      %4214 = vrot.lane.b32.xlu0 %v4143, 32
      %v4215 = vpop.permute.xlu0 %4214
      %4216 = vrot.lane.b32.xlu0 %v4144, 32
      %v4217 = vpop.permute.xlu0 %4216
      %4218 = vrot.lane.b32.xlu0 %v4145, 32
      %v4219 = vpop.permute.xlu0 %4218
      %4220 = vrot.lane.b32.xlu0 %v4146, 32
      %v4221 = vpop.permute.xlu0 %4220
      %4222 = vrot.lane.b32.xlu0 %v4147, 32
      %v4223 = vpop.permute.xlu0 %4222
      %4224 = vrot.lane.b32.xlu0 %v4148, 32
      %v4225 = vpop.permute.xlu0 %4224
      %4226 = vrot.lane.b32.xlu0 %v4149, 32
      %v4227 = vpop.permute.xlu0 %4226
      %4228 = vrot.lane.b32.xlu0 %v4150, 32
      %v4229 = vpop.permute.xlu0 %4228
      %4230 = vrot.lane.b32.xlu0 %v4151, 32
      %v4231 = vpop.permute.xlu0 %4230
      %4232 = vrot.lane.b32.xlu0 %v4152, 32
      %v4233 = vpop.permute.xlu0 %4232
      %4234 = vrot.lane.b32.xlu0 %v4153, 32
      %v4235 = vpop.permute.xlu0 %4234
      %4236 = vrot.lane.b32.xlu0 %v4154, 32
      %v4237 = vpop.permute.xlu0 %4236
      %4238 = vrot.lane.b32.xlu0 %v4155, 32
      %v4239 = vpop.permute.xlu0 %4238
      %4240 = vrot.lane.b32.xlu0 %v4156, 32
      %v4241 = vpop.permute.xlu0 %4240
      %4242 = vrot.lane.b32.xlu0 %v4157, 32
      %v4243 = vpop.permute.xlu0 %4242
      %4244 = vrot.lane.b32.xlu0 %v4158, 32
      %v4245 = vpop.permute.xlu0 %4244
      %4246 = vrot.lane.b32.xlu0 %v4159, 32
      %v4247 = vpop.permute.xlu0 %4246
      %4248 = vrot.lane.b32.xlu0 %v4160, 32
      %v4249 = vpop.permute.xlu0 %4248
      %4250 = vrot.lane.b32.xlu0 %v4161, 32
      %v4251 = vpop.permute.xlu0 %4250
      %4252 = vrot.lane.b32.xlu0 %v4162, 32
      %v4253 = vpop.permute.xlu0 %4252
      %4254 = vrot.lane.b32.xlu0 %v4163, 32
      %v4255 = vpop.permute.xlu0 %4254
      %4256 = vrot.lane.b32.xlu0 %v4164, 32
      %v4257 = vpop.permute.xlu0 %4256
      %4258 = vrot.lane.b32.xlu0 %v4165, 32
      %v4259 = vpop.permute.xlu0 %4258
      %4260 = vrot.lane.b32.xlu0 %v4166, 32
      %v4261 = vpop.permute.xlu0 %4260
      %4262 = vrot.lane.b32.xlu0 %v4167, 32
      %v4263 = vpop.permute.xlu0 %4262
      %4296 = vst.msk [vmem:[#allocation3] sm:$0xff] %vm1945, %v4201
      %4297 = vst.msk [vmem:[#allocation3 + $0x8] sm:$0xff] %vm1945, %v4203
      %4298 = vst.msk [vmem:[#allocation3 + $0x10] sm:$0xff] %vm1945, %v4205
      %4299 = vst.msk [vmem:[#allocation3 + $0x18] sm:$0xff] %vm1945, %v4207
      %4300 = vst.msk [vmem:[#allocation3 + $0x20] sm:$0xff] %vm1945, %v4209
      %4301 = vst.msk [vmem:[#allocation3 + $0x28] sm:$0xff] %vm1945, %v4211
      %4302 = vst.msk [vmem:[#allocation3 + $0x30] sm:$0xff] %vm1945, %v4213
      %4303 = vst.msk [vmem:[#allocation3 + $0x38] sm:$0xff] %vm1945, %v4215
      %4304 = vst.msk [vmem:[#allocation3 + $0x40] sm:$0xff] %vm1945, %v4217
      %4305 = vst.msk [vmem:[#allocation3 + $0x48] sm:$0xff] %vm1945, %v4219
      %4306 = vst.msk [vmem:[#allocation3 + $0x50] sm:$0xff] %vm1945, %v4221
      %4307 = vst.msk [vmem:[#allocation3 + $0x58] sm:$0xff] %vm1945, %v4223
      %4308 = vst.msk [vmem:[#allocation3 + $0x60] sm:$0xff] %vm1945, %v4225
      %4309 = vst.msk [vmem:[#allocation3 + $0x68] sm:$0xff] %vm1945, %v4227
      %4310 = vst.msk [vmem:[#allocation3 + $0x70] sm:$0xff] %vm1945, %v4229
      %4311 = vst.msk [vmem:[#allocation3 + $0x78] sm:$0xff] %vm1945, %v4231
      %4312 = vst.msk [vmem:[#allocation3 + $0x80] sm:$0xff] %vm1945, %v4233
      %4313 = vst.msk [vmem:[#allocation3 + $0x88] sm:$0xff] %vm1945, %v4235
      %4314 = vst.msk [vmem:[#allocation3 + $0x90] sm:$0xff] %vm1945, %v4237
      %4315 = vst.msk [vmem:[#allocation3 + $0x98] sm:$0xff] %vm1945, %v4239
      %4316 = vst.msk [vmem:[#allocation3 + $0xa0] sm:$0xff] %vm1945, %v4241
      %4317 = vst.msk [vmem:[#allocation3 + $0xa8] sm:$0xff] %vm1945, %v4243
      %4318 = vst.msk [vmem:[#allocation3 + $0xb0] sm:$0xff] %vm1945, %v4245
      %4319 = vst.msk [vmem:[#allocation3 + $0xb8] sm:$0xff] %vm1945, %v4247
      %4320 = vst.msk [vmem:[#allocation3 + $0xc0] sm:$0xff] %vm1945, %v4249
      %4321 = vst.msk [vmem:[#allocation3 + $0xc8] sm:$0xff] %vm1945, %v4251
      %4322 = vst.msk [vmem:[#allocation3 + $0xd0] sm:$0xff] %vm1945, %v4253
      %4323 = vst.msk [vmem:[#allocation3 + $0xd8] sm:$0xff] %vm1945, %v4255
      %4324 = vst.msk [vmem:[#allocation3 + $0xe0] sm:$0xff] %vm1945, %v4257
      %4325 = vst.msk [vmem:[#allocation3 + $0xe8] sm:$0xff] %vm1945, %v4259
      %4326 = vst.msk [vmem:[#allocation3 + $0xf0] sm:$0xff] %vm1945, %v4261
      %4327 = vst.msk [vmem:[#allocation3 + $0xf8] sm:$0xff] %vm1945, %v4263
      %v4328 = vld [vmem:[#allocation3] sm:$0xff]
      %v4329 = vld [vmem:[#allocation3 + $0x8] sm:$0xff]
      %v4330 = vld [vmem:[#allocation3 + $0x10] sm:$0xff]
      %v4331 = vld [vmem:[#allocation3 + $0x18] sm:$0xff]
      %v4332 = vld [vmem:[#allocation3 + $0x20] sm:$0xff]
      %v4333 = vld [vmem:[#allocation3 + $0x28] sm:$0xff]
      %v4334 = vld [vmem:[#allocation3 + $0x30] sm:$0xff]
      %v4335 = vld [vmem:[#allocation3 + $0x38] sm:$0xff]
      %v4336 = vld [vmem:[#allocation3 + $0x40] sm:$0xff]
      %v4337 = vld [vmem:[#allocation3 + $0x48] sm:$0xff]
      %v4338 = vld [vmem:[#allocation3 + $0x50] sm:$0xff]
      %v4339 = vld [vmem:[#allocation3 + $0x58] sm:$0xff]
      %v4340 = vld [vmem:[#allocation3 + $0x60] sm:$0xff]
      %v4341 = vld [vmem:[#allocation3 + $0x68] sm:$0xff]
      %v4342 = vld [vmem:[#allocation3 + $0x70] sm:$0xff]
      %v4343 = vld [vmem:[#allocation3 + $0x78] sm:$0xff]
      %v4344 = vld [vmem:[#allocation3 + $0x80] sm:$0xff]
      %v4345 = vld [vmem:[#allocation3 + $0x88] sm:$0xff]
      %v4346 = vld [vmem:[#allocation3 + $0x90] sm:$0xff]
      %v4347 = vld [vmem:[#allocation3 + $0x98] sm:$0xff]
      %v4348 = vld [vmem:[#allocation3 + $0xa0] sm:$0xff]
      %v4349 = vld [vmem:[#allocation3 + $0xa8] sm:$0xff]
      %v4350 = vld [vmem:[#allocation3 + $0xb0] sm:$0xff]
      %v4351 = vld [vmem:[#allocation3 + $0xb8] sm:$0xff]
      %v4352 = vld [vmem:[#allocation3 + $0xc0] sm:$0xff]
      %v4353 = vld [vmem:[#allocation3 + $0xc8] sm:$0xff]
      %v4354 = vld [vmem:[#allocation3 + $0xd0] sm:$0xff]
      %v4355 = vld [vmem:[#allocation3 + $0xd8] sm:$0xff]
      %v4356 = vld [vmem:[#allocation3 + $0xe0] sm:$0xff]
      %v4357 = vld [vmem:[#allocation3 + $0xe8] sm:$0xff]
      %v4358 = vld [vmem:[#allocation3 + $0xf0] sm:$0xff]
      %v4359 = vld [vmem:[#allocation3 + $0xf8] sm:$0xff]
      %v4360 = vld [vmem:[%s3] sm:$0xff]
      %v4361 = vld [vmem:[%s3 + $0x8] sm:$0xff]
      %v4362 = vld [vmem:[%s3 + $0x10] sm:$0xff]
      %v4363 = vld [vmem:[%s3 + $0x18] sm:$0xff]
      %v4364 = vld [vmem:[%s3 + $0x20] sm:$0xf]
      %v4365 = vld [vmem:[%s4] sm:$0x1]
      %v4367 = vlaneseq
      %v4368 = vshrl.u32 %v4367, 7
      %v4369 = vsub.s32 0, %v4368
      %v4370 = vrot.slane %v4365, %v4369
      %v4373 = vsel %vm2022, %v4328, 0
      %v4376 = vsel %vm2022, %v4329, 0
      %v4379 = vsel %vm2022, %v4330, 0
      %v4382 = vsel %vm2022, %v4331, 0
      %v4385 = vsel %vm2022, %v4332, 0
      %v4388 = vsel %vm2022, %v4333, 0
      %v4391 = vsel %vm2022, %v4334, 0
      %v4394 = vsel %vm2022, %v4335, 0
      %v4397 = vsel %vm2022, %v4336, 0
      %v4400 = vsel %vm2022, %v4337, 0
      %v4403 = vsel %vm2022, %v4338, 0
      %v4406 = vsel %vm2022, %v4339, 0
      %v4409 = vsel %vm2022, %v4340, 0
      %v4412 = vsel %vm2022, %v4341, 0
      %v4415 = vsel %vm2022, %v4342, 0
      %v4418 = vsel %vm2022, %v4343, 0
      %v4421 = vsel %vm2022, %v4344, 0
      %v4424 = vsel %vm2022, %v4345, 0
      %v4427 = vsel %vm2022, %v4346, 0
      %v4430 = vsel %vm2022, %v4347, 0
      %v4433 = vsel %vm2022, %v4348, 0
      %v4436 = vsel %vm2022, %v4349, 0
      %v4439 = vsel %vm2022, %v4350, 0
      %v4442 = vsel %vm2022, %v4351, 0
      %v4445 = vsel %vm2022, %v4352, 0
      %v4448 = vsel %vm2022, %v4353, 0
      %v4451 = vsel %vm2022, %v4354, 0
      %v4454 = vsel %vm2022, %v4355, 0
      %v4457 = vsel %vm2022, %v4356, 0
      %v4460 = vsel %vm2022, %v4357, 0
      %v4463 = vsel %vm2022, %v4358, 0
      %v4466 = vsel %vm2022, %v4359, 0
      %v4469 = vsel %vm2119, %v4364, 0
      %4471 = vmatprep.subr.mxu0 0.0
      %4472 = vmatpush1.msra.mxu0 0.0
      %4473 = vmatprep.subr.mxu0 0.0
      %4474 = vmatpush1.msra.mxu0 0.0
      %4475 = vmatprep.subr.mxu0 0.0
      %4476 = vmatpush1.msra.mxu0 0.0
      %4477 = vmatprep.subr.mxu0 0.0
      %4478 = vmatpush1.msra.mxu0 0.0
      %4479 = vmatprep.subr.mxu0 0.0
      %4480 = vmatpush1.msra.mxu0 0.0
      %4481 = vmatprep.subr.mxu0 0.0
      %4482 = vmatpush1.msra.mxu0 0.0
      %4483 = vmatprep.subr.mxu0 0.0
      %4484 = vmatpush1.msra.mxu0 0.0
      %4485 = vmatprep.subr.mxu0 0.0
      %4486 = vmatpush1.msra.mxu0 0.0
      %4487 = vmatprep.subr.mxu0 0.0
      %4488 = vmatpush1.msra.mxu0 0.0
      %4489 = vmatprep.subr.mxu0 0.0
      %4490 = vmatpush1.msra.mxu0 0.0
      %4491 = vmatprep.subr.mxu0 0.0
      %4492 = vmatpush1.msra.mxu0 0.0
      %4493 = vmatprep.subr.mxu0 0.0
      %4494 = vmatpush1.msra.mxu0 %v4469
      %4495 = vmatprep.subr.mxu0 0.0
      %4496 = vmatpush1.msra.mxu0 %v4363
      %4497 = vmatprep.subr.mxu0 0.0
      %4498 = vmatpush1.msra.mxu0 %v4362
      %4499 = vmatprep.subr.mxu0 0.0
      %4500 = vmatpush1.msra.mxu0 %v4361
      %4501 = vmatprep.subr.mxu0 0.0
      %4502 = vmatpush1.msra.mxu0 %v4360
      %4503 = vmatprep.subr.mxu0 0.0
      %4504 = vmatpush2.msra.mxu0 0.0
      %4505 = vmatprep.subr.mxu0 0.0
      %4506 = vmatpush2.msra.mxu0 0.0
      %4507 = vmatprep.subr.mxu0 0.0
      %4508 = vmatpush2.msra.mxu0 0.0
      %4509 = vmatprep.subr.mxu0 0.0
      %4510 = vmatpush2.msra.mxu0 0.0
      %4511 = vmatprep.subr.mxu0 0.0
      %4512 = vmatpush2.msra.mxu0 0.0
      %4513 = vmatprep.subr.mxu0 0.0
      %4514 = vmatpush2.msra.mxu0 0.0
      %4515 = vmatprep.subr.mxu0 0.0
      %4516 = vmatpush2.msra.mxu0 0.0
      %4517 = vmatprep.subr.mxu0 0.0
      %4518 = vmatpush2.msra.mxu0 0.0
      %4519 = vmatprep.subr.mxu0 0.0
      %4520 = vmatpush2.msra.mxu0 0.0
      %4521 = vmatprep.subr.mxu0 0.0
      %4522 = vmatpush2.msra.mxu0 0.0
      %4523 = vmatprep.subr.mxu0 0.0
      %4524 = vmatpush2.msra.mxu0 0.0
      %4525 = vmatprep.subr.mxu0 0.0
      %4526 = vmatpush2.msra.mxu0 0.0
      %4527 = vmatprep.subr.mxu0 0.0
      %4528 = vmatpush2.msra.mxu0 0.0
      %4529 = vmatprep.subr.mxu0 0.0
      %4530 = vmatpush2.msra.mxu0 0.0
      %4531 = vmatprep.subr.mxu0 0.0
      %4532 = vmatpush2.msra.mxu0 0.0
      %4533 = vmatprep.subr.mxu0 0.0
      %4534 = vmatpush2.msra.mxu0 0.0
      %4535 = vmatprep.mubr.f32.mxu0 0.0
      %4536 = vmatmul.mubr.f32.gmra.mxu0 %v4373
      %v4537 = vpop.f32.mrf.mxu0
      %v4538 = vadd.f32 %v4370, %v4537
      %v4539 = vpop.f32.mrf.mxu0
      %4540 = vmatprep.mubr.f32.mxu0 0.0
      %4541 = vmatmul.mubr.f32.gmra.mxu0 %v4376
      %v4542 = vpop.f32.mrf.mxu0
      %v4543 = vadd.f32 %v4370, %v4542
      %v4544 = vpop.f32.mrf.mxu0
      %4545 = vmatprep.mubr.f32.mxu0 0.0
      %4546 = vmatmul.mubr.f32.gmra.mxu0 %v4379
      %v4547 = vpop.f32.mrf.mxu0
      %v4548 = vadd.f32 %v4370, %v4547
      %v4549 = vpop.f32.mrf.mxu0
      %4550 = vmatprep.mubr.f32.mxu0 0.0
      %4551 = vmatmul.mubr.f32.gmra.mxu0 %v4382
      %v4552 = vpop.f32.mrf.mxu0
      %v4553 = vadd.f32 %v4370, %v4552
      %v4554 = vpop.f32.mrf.mxu0
      %4555 = vmatprep.mubr.f32.mxu0 0.0
      %4556 = vmatmul.mubr.f32.gmra.mxu0 %v4385
      %v4557 = vpop.f32.mrf.mxu0
      %v4558 = vadd.f32 %v4370, %v4557
      %v4559 = vpop.f32.mrf.mxu0
      %4560 = vmatprep.mubr.f32.mxu0 0.0
      %4561 = vmatmul.mubr.f32.gmra.mxu0 %v4388
      %v4562 = vpop.f32.mrf.mxu0
      %v4563 = vadd.f32 %v4370, %v4562
      %v4564 = vpop.f32.mrf.mxu0
      %4565 = vmatprep.mubr.f32.mxu0 0.0
      %4566 = vmatmul.mubr.f32.gmra.mxu0 %v4391
      %v4567 = vpop.f32.mrf.mxu0
      %v4568 = vadd.f32 %v4370, %v4567
      %v4569 = vpop.f32.mrf.mxu0
      %4570 = vmatprep.mubr.f32.mxu0 0.0
      %4571 = vmatmul.mubr.f32.gmra.mxu0 %v4394
      %v4572 = vpop.f32.mrf.mxu0
      %v4573 = vadd.f32 %v4370, %v4572
      %v4574 = vpop.f32.mrf.mxu0
      %4575 = vmatprep.mubr.f32.mxu0 0.0
      %4576 = vmatmul.mubr.f32.gmra.mxu0 %v4397
      %v4577 = vpop.f32.mrf.mxu0
      %v4578 = vadd.f32 %v4370, %v4577
      %v4579 = vpop.f32.mrf.mxu0
      %4580 = vmatprep.mubr.f32.mxu0 0.0
      %4581 = vmatmul.mubr.f32.gmra.mxu0 %v4400
      %v4582 = vpop.f32.mrf.mxu0
      %v4583 = vadd.f32 %v4370, %v4582
      %v4584 = vpop.f32.mrf.mxu0
      %4585 = vmatprep.mubr.f32.mxu0 0.0
      %4586 = vmatmul.mubr.f32.gmra.mxu0 %v4403
      %v4587 = vpop.f32.mrf.mxu0
      %v4588 = vadd.f32 %v4370, %v4587
      %v4589 = vpop.f32.mrf.mxu0
      %4590 = vmatprep.mubr.f32.mxu0 0.0
      %4591 = vmatmul.mubr.f32.gmra.mxu0 %v4406
      %v4592 = vpop.f32.mrf.mxu0
      %v4593 = vadd.f32 %v4370, %v4592
      %v4594 = vpop.f32.mrf.mxu0
      %4595 = vmatprep.mubr.f32.mxu0 0.0
      %4596 = vmatmul.mubr.f32.gmra.mxu0 %v4409
      %v4597 = vpop.f32.mrf.mxu0
      %v4598 = vadd.f32 %v4370, %v4597
      %v4599 = vpop.f32.mrf.mxu0
      %4600 = vmatprep.mubr.f32.mxu0 0.0
      %4601 = vmatmul.mubr.f32.gmra.mxu0 %v4412
      %v4602 = vpop.f32.mrf.mxu0
      %v4603 = vadd.f32 %v4370, %v4602
      %v4604 = vpop.f32.mrf.mxu0
      %4605 = vmatprep.mubr.f32.mxu0 0.0
      %4606 = vmatmul.mubr.f32.gmra.mxu0 %v4415
      %v4607 = vpop.f32.mrf.mxu0
      %v4608 = vadd.f32 %v4370, %v4607
      %v4609 = vpop.f32.mrf.mxu0
      %4610 = vmatprep.mubr.f32.mxu0 0.0
      %4611 = vmatmul.mubr.f32.gmra.mxu0 %v4418
      %v4612 = vpop.f32.mrf.mxu0
      %v4613 = vadd.f32 %v4370, %v4612
      %v4614 = vpop.f32.mrf.mxu0
      %4615 = vmatprep.mubr.f32.mxu0 0.0
      %4616 = vmatmul.mubr.f32.gmra.mxu0 %v4421
      %v4617 = vpop.f32.mrf.mxu0
      %v4618 = vadd.f32 %v4370, %v4617
      %v4619 = vpop.f32.mrf.mxu0
      %4620 = vmatprep.mubr.f32.mxu0 0.0
      %4621 = vmatmul.mubr.f32.gmra.mxu0 %v4424
      %v4622 = vpop.f32.mrf.mxu0
      %v4623 = vadd.f32 %v4370, %v4622
      %v4624 = vpop.f32.mrf.mxu0
      %4625 = vmatprep.mubr.f32.mxu0 0.0
      %4626 = vmatmul.mubr.f32.gmra.mxu0 %v4427
      %v4627 = vpop.f32.mrf.mxu0
      %v4628 = vadd.f32 %v4370, %v4627
      %v4629 = vpop.f32.mrf.mxu0
      %4630 = vmatprep.mubr.f32.mxu0 0.0
      %4631 = vmatmul.mubr.f32.gmra.mxu0 %v4430
      %v4632 = vpop.f32.mrf.mxu0
      %v4633 = vadd.f32 %v4370, %v4632
      %v4634 = vpop.f32.mrf.mxu0
      %4635 = vmatprep.mubr.f32.mxu0 0.0
      %4636 = vmatmul.mubr.f32.gmra.mxu0 %v4433
      %v4637 = vpop.f32.mrf.mxu0
      %v4638 = vadd.f32 %v4370, %v4637
      %v4639 = vpop.f32.mrf.mxu0
      %4640 = vmatprep.mubr.f32.mxu0 0.0
      %4641 = vmatmul.mubr.f32.gmra.mxu0 %v4436
      %v4642 = vpop.f32.mrf.mxu0
      %v4643 = vadd.f32 %v4370, %v4642
      %v4644 = vpop.f32.mrf.mxu0
      %4645 = vmatprep.mubr.f32.mxu0 0.0
      %4646 = vmatmul.mubr.f32.gmra.mxu0 %v4439
      %v4647 = vpop.f32.mrf.mxu0
      %v4648 = vadd.f32 %v4370, %v4647
      %v4649 = vpop.f32.mrf.mxu0
      %4650 = vmatprep.mubr.f32.mxu0 0.0
      %4651 = vmatmul.mubr.f32.gmra.mxu0 %v4442
      %v4652 = vpop.f32.mrf.mxu0
      %v4653 = vadd.f32 %v4370, %v4652
      %v4654 = vpop.f32.mrf.mxu0
      %4655 = vmatprep.mubr.f32.mxu0 0.0
      %4656 = vmatmul.mubr.f32.gmra.mxu0 %v4445
      %v4657 = vpop.f32.mrf.mxu0
      %v4658 = vadd.f32 %v4370, %v4657
      %v4659 = vpop.f32.mrf.mxu0
      %4660 = vmatprep.mubr.f32.mxu0 0.0
      %4661 = vmatmul.mubr.f32.gmra.mxu0 %v4448
      %v4662 = vpop.f32.mrf.mxu0
      %v4663 = vadd.f32 %v4370, %v4662
      %v4664 = vpop.f32.mrf.mxu0
      %4665 = vmatprep.mubr.f32.mxu0 0.0
      %4666 = vmatmul.mubr.f32.gmra.mxu0 %v4451
      %v4667 = vpop.f32.mrf.mxu0
      %v4668 = vadd.f32 %v4370, %v4667
      %v4669 = vpop.f32.mrf.mxu0
      %4670 = vmatprep.mubr.f32.mxu0 0.0
      %4671 = vmatmul.mubr.f32.gmra.mxu0 %v4454
      %v4672 = vpop.f32.mrf.mxu0
      %v4673 = vadd.f32 %v4370, %v4672
      %v4674 = vpop.f32.mrf.mxu0
      %4675 = vmatprep.mubr.f32.mxu0 0.0
      %4676 = vmatmul.mubr.f32.gmra.mxu0 %v4457
      %v4677 = vpop.f32.mrf.mxu0
      %v4678 = vadd.f32 %v4370, %v4677
      %v4679 = vpop.f32.mrf.mxu0
      %4680 = vmatprep.mubr.f32.mxu0 0.0
      %4681 = vmatmul.mubr.f32.gmra.mxu0 %v4460
      %v4682 = vpop.f32.mrf.mxu0
      %v4683 = vadd.f32 %v4370, %v4682
      %v4684 = vpop.f32.mrf.mxu0
      %4685 = vmatprep.mubr.f32.mxu0 0.0
      %4686 = vmatmul.mubr.f32.gmra.mxu0 %v4463
      %v4687 = vpop.f32.mrf.mxu0
      %v4688 = vadd.f32 %v4370, %v4687
      %v4689 = vpop.f32.mrf.mxu0
      %4690 = vmatprep.mubr.f32.mxu0 0.0
      %4691 = vmatmul.mubr.f32.gmra.mxu0 %v4466
      %v4692 = vpop.f32.mrf.mxu0
      %v4693 = vadd.f32 %v4370, %v4692
      %v4694 = vpop.f32.mrf.mxu0
      %4695 = vdwg.mxu0
      %v4696 = vsel %vm258, %v4538, 0.0
      %v4697 = vsel %vm258, %v4543, 0.0
      %v4698 = vadd.f32 %v4696, %v4697
      %v4699 = vsel %vm258, %v4548, 0.0
      %v4700 = vadd.f32 %v4698, %v4699
      %v4701 = vsel %vm258, %v4553, 0.0
      %v4702 = vadd.f32 %v4700, %v4701
      %v4703 = vsel %vm258, %v4558, 0.0
      %v4704 = vadd.f32 %v4702, %v4703
      %v4705 = vsel %vm258, %v4563, 0.0
      %v4706 = vadd.f32 %v4704, %v4705
      %v4707 = vsel %vm258, %v4568, 0.0
      %v4708 = vadd.f32 %v4706, %v4707
      %v4709 = vsel %vm258, %v4573, 0.0
      %v4710 = vadd.f32 %v4708, %v4709
      %v4711 = vsel %vm258, %v4578, 0.0
      %v4712 = vadd.f32 %v4710, %v4711
      %v4713 = vsel %vm258, %v4583, 0.0
      %v4714 = vadd.f32 %v4712, %v4713
      %v4715 = vsel %vm258, %v4588, 0.0
      %v4716 = vadd.f32 %v4714, %v4715
      %v4717 = vsel %vm258, %v4593, 0.0
      %v4718 = vadd.f32 %v4716, %v4717
      %v4719 = vsel %vm258, %v4598, 0.0
      %v4720 = vadd.f32 %v4718, %v4719
      %v4721 = vsel %vm258, %v4603, 0.0
      %v4722 = vadd.f32 %v4720, %v4721
      %v4723 = vsel %vm258, %v4608, 0.0
      %v4724 = vadd.f32 %v4722, %v4723
      %v4725 = vsel %vm258, %v4613, 0.0
      %v4726 = vadd.f32 %v4724, %v4725
      %v4727 = vsel %vm258, %v4618, 0.0
      %v4728 = vadd.f32 %v4726, %v4727
      %v4729 = vsel %vm258, %v4623, 0.0
      %v4730 = vadd.f32 %v4728, %v4729
      %v4731 = vsel %vm258, %v4628, 0.0
      %v4732 = vadd.f32 %v4730, %v4731
      %v4733 = vsel %vm258, %v4633, 0.0
      %v4734 = vadd.f32 %v4732, %v4733
      %v4735 = vsel %vm258, %v4638, 0.0
      %v4736 = vadd.f32 %v4734, %v4735
      %v4737 = vsel %vm258, %v4643, 0.0
      %v4738 = vadd.f32 %v4736, %v4737
      %v4739 = vsel %vm258, %v4648, 0.0
      %v4740 = vadd.f32 %v4738, %v4739
      %v4741 = vsel %vm258, %v4653, 0.0
      %v4742 = vadd.f32 %v4740, %v4741
      %v4743 = vsel %vm258, %v4658, 0.0
      %v4744 = vadd.f32 %v4742, %v4743
      %v4745 = vsel %vm258, %v4663, 0.0
      %v4746 = vadd.f32 %v4744, %v4745
      %v4747 = vsel %vm258, %v4668, 0.0
      %v4748 = vadd.f32 %v4746, %v4747
      %v4749 = vsel %vm258, %v4673, 0.0
      %v4750 = vadd.f32 %v4748, %v4749
      %v4751 = vsel %vm258, %v4678, 0.0
      %v4752 = vadd.f32 %v4750, %v4751
      %v4753 = vsel %vm258, %v4683, 0.0
      %v4754 = vadd.f32 %v4752, %v4753
      %v4755 = vsel %vm258, %v4688, 0.0
      %v4756 = vadd.f32 %v4754, %v4755
      %v4757 = vsel %vm258, %v4693, 0.0
      %v4758 = vadd.f32 %v4756, %v4757
      %v4759 = vrot.slane %v4758, 4
      %v4760 = vadd.f32 %v4758, %v4759
      %v4761 = vrot.slane %v4760, 2
      %v4762 = vadd.f32 %v4760, %v4761
      %v4763 = vrot.slane %v4762, 1
      %v4764 = vadd.f32 %v4762, %v4763
      %v4765 = vmul.f32 %v4764, 0.00390625
      %v4766 = vmul.f32 %v4538, %v4538
      %v4767 = vmul.f32 %v4543, %v4543
      %v4768 = vmul.f32 %v4548, %v4548
      %v4769 = vmul.f32 %v4553, %v4553
      %v4770 = vmul.f32 %v4558, %v4558
      %v4771 = vmul.f32 %v4563, %v4563
      %v4772 = vmul.f32 %v4568, %v4568
      %v4773 = vmul.f32 %v4573, %v4573
      %v4774 = vmul.f32 %v4578, %v4578
      %v4775 = vmul.f32 %v4583, %v4583
      %v4776 = vmul.f32 %v4588, %v4588
      %v4777 = vmul.f32 %v4593, %v4593
      %v4778 = vmul.f32 %v4598, %v4598
      %v4779 = vmul.f32 %v4603, %v4603
      %v4780 = vmul.f32 %v4608, %v4608
      %v4781 = vmul.f32 %v4613, %v4613
      %v4782 = vmul.f32 %v4618, %v4618
      %v4783 = vmul.f32 %v4623, %v4623
      %v4784 = vmul.f32 %v4628, %v4628
      %v4785 = vmul.f32 %v4633, %v4633
      %v4786 = vmul.f32 %v4638, %v4638
      %v4787 = vmul.f32 %v4643, %v4643
      %v4788 = vmul.f32 %v4648, %v4648
      %v4789 = vmul.f32 %v4653, %v4653
      %v4790 = vmul.f32 %v4658, %v4658
      %v4791 = vmul.f32 %v4663, %v4663
      %v4792 = vmul.f32 %v4668, %v4668
      %v4793 = vmul.f32 %v4673, %v4673
      %v4794 = vmul.f32 %v4678, %v4678
      %v4795 = vmul.f32 %v4683, %v4683
      %v4796 = vmul.f32 %v4688, %v4688
      %v4797 = vmul.f32 %v4693, %v4693
      %v4798 = vsel %vm258, %v4766, 0.0
      %v4799 = vsel %vm258, %v4767, 0.0
      %v4800 = vadd.f32 %v4798, %v4799
      %v4801 = vsel %vm258, %v4768, 0.0
      %v4802 = vadd.f32 %v4800, %v4801
      %v4803 = vsel %vm258, %v4769, 0.0
      %v4804 = vadd.f32 %v4802, %v4803
      %v4805 = vsel %vm258, %v4770, 0.0
      %v4806 = vadd.f32 %v4804, %v4805
      %v4807 = vsel %vm258, %v4771, 0.0
      %v4808 = vadd.f32 %v4806, %v4807
      %v4809 = vsel %vm258, %v4772, 0.0
      %v4810 = vadd.f32 %v4808, %v4809
      %v4811 = vsel %vm258, %v4773, 0.0
      %v4812 = vadd.f32 %v4810, %v4811
      %v4813 = vsel %vm258, %v4774, 0.0
      %v4814 = vadd.f32 %v4812, %v4813
      %v4815 = vsel %vm258, %v4775, 0.0
      %v4816 = vadd.f32 %v4814, %v4815
      %v4817 = vsel %vm258, %v4776, 0.0
      %v4818 = vadd.f32 %v4816, %v4817
      %v4819 = vsel %vm258, %v4777, 0.0
      %v4820 = vadd.f32 %v4818, %v4819
      %v4821 = vsel %vm258, %v4778, 0.0
      %v4822 = vadd.f32 %v4820, %v4821
      %v4823 = vsel %vm258, %v4779, 0.0
      %v4824 = vadd.f32 %v4822, %v4823
      %v4825 = vsel %vm258, %v4780, 0.0
      %v4826 = vadd.f32 %v4824, %v4825
      %v4827 = vsel %vm258, %v4781, 0.0
      %v4828 = vadd.f32 %v4826, %v4827
      %v4829 = vsel %vm258, %v4782, 0.0
      %v4830 = vadd.f32 %v4828, %v4829
      %v4831 = vsel %vm258, %v4783, 0.0
      %v4832 = vadd.f32 %v4830, %v4831
      %v4833 = vsel %vm258, %v4784, 0.0
      %v4834 = vadd.f32 %v4832, %v4833
      %v4835 = vsel %vm258, %v4785, 0.0
      %v4836 = vadd.f32 %v4834, %v4835
      %v4837 = vsel %vm258, %v4786, 0.0
      %v4838 = vadd.f32 %v4836, %v4837
      %v4839 = vsel %vm258, %v4787, 0.0
      %v4840 = vadd.f32 %v4838, %v4839
      %v4841 = vsel %vm258, %v4788, 0.0
      %v4842 = vadd.f32 %v4840, %v4841
      %v4843 = vsel %vm258, %v4789, 0.0
      %v4844 = vadd.f32 %v4842, %v4843
      %v4845 = vsel %vm258, %v4790, 0.0
      %v4846 = vadd.f32 %v4844, %v4845
      %v4847 = vsel %vm258, %v4791, 0.0
      %v4848 = vadd.f32 %v4846, %v4847
      %v4849 = vsel %vm258, %v4792, 0.0
      %v4850 = vadd.f32 %v4848, %v4849
      %v4851 = vsel %vm258, %v4793, 0.0
      %v4852 = vadd.f32 %v4850, %v4851
      %v4853 = vsel %vm258, %v4794, 0.0
      %v4854 = vadd.f32 %v4852, %v4853
      %v4855 = vsel %vm258, %v4795, 0.0
      %v4856 = vadd.f32 %v4854, %v4855
      %v4857 = vsel %vm258, %v4796, 0.0
      %v4858 = vadd.f32 %v4856, %v4857
      %v4859 = vsel %vm258, %v4797, 0.0
      %v4860 = vadd.f32 %v4858, %v4859
      %v4861 = vrot.slane %v4860, 4
      %v4862 = vadd.f32 %v4860, %v4861
      %v4863 = vrot.slane %v4862, 2
      %v4864 = vadd.f32 %v4862, %v4863
      %v4865 = vrot.slane %v4864, 1
      %v4866 = vadd.f32 %v4864, %v4865
      %v4867 = vmul.f32 %v4866, 0.00390625
      %v4868 = vmul.f32 %v4765, %v4765
      %v4869 = vsub.f32 %v4867, %v4868
      %v4870 = vsub.f32 %v4538, %v4765
      %v4871 = vsub.f32 %v4543, %v4765
      %v4872 = vsub.f32 %v4548, %v4765
      %v4873 = vsub.f32 %v4553, %v4765
      %v4874 = vsub.f32 %v4558, %v4765
      %v4875 = vsub.f32 %v4563, %v4765
      %v4876 = vsub.f32 %v4568, %v4765
      %v4877 = vsub.f32 %v4573, %v4765
      %v4878 = vsub.f32 %v4578, %v4765
      %v4879 = vsub.f32 %v4583, %v4765
      %v4880 = vsub.f32 %v4588, %v4765
      %v4881 = vsub.f32 %v4593, %v4765
      %v4882 = vsub.f32 %v4598, %v4765
      %v4883 = vsub.f32 %v4603, %v4765
      %v4884 = vsub.f32 %v4608, %v4765
      %v4885 = vsub.f32 %v4613, %v4765
      %v4886 = vsub.f32 %v4618, %v4765
      %v4887 = vsub.f32 %v4623, %v4765
      %v4888 = vsub.f32 %v4628, %v4765
      %v4889 = vsub.f32 %v4633, %v4765
      %v4890 = vsub.f32 %v4638, %v4765
      %v4891 = vsub.f32 %v4643, %v4765
      %v4892 = vsub.f32 %v4648, %v4765
      %v4893 = vsub.f32 %v4653, %v4765
      %v4894 = vsub.f32 %v4658, %v4765
      %v4895 = vsub.f32 %v4663, %v4765
      %v4896 = vsub.f32 %v4668, %v4765
      %v4897 = vsub.f32 %v4673, %v4765
      %v4898 = vsub.f32 %v4678, %v4765
      %v4899 = vsub.f32 %v4683, %v4765
      %v4900 = vsub.f32 %v4688, %v4765
      %v4901 = vsub.f32 %v4693, %v4765
      %v4902 = vadd.f32 %v4869, 1e-05
      %v4903 = vrsqrt.pop %v4902
      %v4904 = vmul.f32 %v4870, %v4903
      %v4905 = vmul.f32 %v4871, %v4903
      %v4906 = vmul.f32 %v4872, %v4903
      %v4907 = vmul.f32 %v4873, %v4903
      %v4908 = vmul.f32 %v4874, %v4903
      %v4909 = vmul.f32 %v4875, %v4903
      %v4910 = vmul.f32 %v4876, %v4903
      %v4911 = vmul.f32 %v4877, %v4903
      %v4912 = vmul.f32 %v4878, %v4903
      %v4913 = vmul.f32 %v4879, %v4903
      %v4914 = vmul.f32 %v4880, %v4903
      %v4915 = vmul.f32 %v4881, %v4903
      %v4916 = vmul.f32 %v4882, %v4903
      %v4917 = vmul.f32 %v4883, %v4903
      %v4918 = vmul.f32 %v4884, %v4903
      %v4919 = vmul.f32 %v4885, %v4903
      %v4920 = vmul.f32 %v4886, %v4903
      %v4921 = vmul.f32 %v4887, %v4903
      %v4922 = vmul.f32 %v4888, %v4903
      %v4923 = vmul.f32 %v4889, %v4903
      %v4924 = vmul.f32 %v4890, %v4903
      %v4925 = vmul.f32 %v4891, %v4903
      %v4926 = vmul.f32 %v4892, %v4903
      %v4927 = vmul.f32 %v4893, %v4903
      %v4928 = vmul.f32 %v4894, %v4903
      %v4929 = vmul.f32 %v4895, %v4903
      %v4930 = vmul.f32 %v4896, %v4903
      %v4931 = vmul.f32 %v4897, %v4903
      %v4932 = vmul.f32 %v4898, %v4903
      %v4933 = vmul.f32 %v4899, %v4903
      %v4934 = vmul.f32 %v4900, %v4903
      %v4935 = vmul.f32 %v4901, %v4903
      %v4936 = vld [vmem:[%s219] sm:$0xff]
      %v4937 = vld [vmem:[%s219 + $0x8] sm:$0xff]
      %v4938 = vld [vmem:[%s219 + $0x10] sm:$0xff]
      %v4939 = vld [vmem:[%s219 + $0x18] sm:$0xff]
      %v4940 = vld [vmem:[%s219 + $0x20] sm:$0xff]
      %v4941 = vld [vmem:[%s219 + $0x28] sm:$0xff]
      %v4942 = vld [vmem:[%s219 + $0x30] sm:$0xff]
      %v4943 = vld [vmem:[%s219 + $0x38] sm:$0xff]
      %v4944 = vld [vmem:[%s219 + $0x40] sm:$0xff]
      %v4945 = vld [vmem:[%s219 + $0x48] sm:$0xff]
      %v4946 = vld [vmem:[%s219 + $0x50] sm:$0xff]
      %v4947 = vld [vmem:[%s219 + $0x58] sm:$0xff]
      %v4948 = vld [vmem:[%s219 + $0x60] sm:$0xff]
      %v4949 = vld [vmem:[%s219 + $0x68] sm:$0xff]
      %v4950 = vld [vmem:[%s219 + $0x70] sm:$0xff]
      %v4951 = vld [vmem:[%s219 + $0x78] sm:$0xff]
      %v4952 = vld [vmem:[%s219 + $0x80] sm:$0xff]
      %v4953 = vld [vmem:[%s219 + $0x88] sm:$0xff]
      %v4954 = vld [vmem:[%s219 + $0x90] sm:$0xff]
      %v4955 = vld [vmem:[%s219 + $0x98] sm:$0xff]
      %v4956 = vld [vmem:[%s219 + $0xa0] sm:$0xff]
      %v4957 = vld [vmem:[%s219 + $0xa8] sm:$0xff]
      %v4958 = vld [vmem:[%s219 + $0xb0] sm:$0xff]
      %v4959 = vld [vmem:[%s219 + $0xb8] sm:$0xff]
      %v4960 = vld [vmem:[%s219 + $0xc0] sm:$0xff]
      %v4961 = vld [vmem:[%s219 + $0xc8] sm:$0xff]
      %v4962 = vld [vmem:[%s219 + $0xd0] sm:$0xff]
      %v4963 = vld [vmem:[%s219 + $0xd8] sm:$0xff]
      %v4964 = vld [vmem:[%s219 + $0xe0] sm:$0xff]
      %v4965 = vld [vmem:[%s219 + $0xe8] sm:$0xff]
      %v4966 = vld [vmem:[%s219 + $0xf0] sm:$0xff]
      %v4967 = vld [vmem:[%s219 + $0xf8] sm:$0xff]
      %v4968 = vadd.f32 %v4936, %v4904
      %v4969 = vadd.f32 %v4937, %v4905
      %v4970 = vadd.f32 %v4938, %v4906
      %v4971 = vadd.f32 %v4939, %v4907
      %v4972 = vadd.f32 %v4940, %v4908
      %v4973 = vadd.f32 %v4941, %v4909
      %v4974 = vadd.f32 %v4942, %v4910
      %v4975 = vadd.f32 %v4943, %v4911
      %v4976 = vadd.f32 %v4944, %v4912
      %v4977 = vadd.f32 %v4945, %v4913
      %v4978 = vadd.f32 %v4946, %v4914
      %v4979 = vadd.f32 %v4947, %v4915
      %v4980 = vadd.f32 %v4948, %v4916
      %v4981 = vadd.f32 %v4949, %v4917
      %v4982 = vadd.f32 %v4950, %v4918
      %v4983 = vadd.f32 %v4951, %v4919
      %v4984 = vadd.f32 %v4952, %v4920
      %v4985 = vadd.f32 %v4953, %v4921
      %v4986 = vadd.f32 %v4954, %v4922
      %v4987 = vadd.f32 %v4955, %v4923
      %v4988 = vadd.f32 %v4956, %v4924
      %v4989 = vadd.f32 %v4957, %v4925
      %v4990 = vadd.f32 %v4958, %v4926
      %v4991 = vadd.f32 %v4959, %v4927
      %v4992 = vadd.f32 %v4960, %v4928
      %v4993 = vadd.f32 %v4961, %v4929
      %v4994 = vadd.f32 %v4962, %v4930
      %v4995 = vadd.f32 %v4963, %v4931
      %v4996 = vadd.f32 %v4964, %v4932
      %v4997 = vadd.f32 %v4965, %v4933
      %v4998 = vadd.f32 %v4966, %v4934
      %v4999 = vadd.f32 %v4967, %v4935
      %5000 = vst.msk [vmem:[%s224] sm:$0xff] %vm258, %v4968
      %5001 = vst.msk [vmem:[%s224 + $0x8] sm:$0xff] %vm258, %v4969
      %5002 = vst.msk [vmem:[%s224 + $0x10] sm:$0xff] %vm258, %v4970
      %5003 = vst.msk [vmem:[%s224 + $0x18] sm:$0xff] %vm258, %v4971
      %5004 = vst.msk [vmem:[%s224 + $0x20] sm:$0xff] %vm258, %v4972
      %5005 = vst.msk [vmem:[%s224 + $0x28] sm:$0xff] %vm258, %v4973
      %5006 = vst.msk [vmem:[%s224 + $0x30] sm:$0xff] %vm258, %v4974
      %5007 = vst.msk [vmem:[%s224 + $0x38] sm:$0xff] %vm258, %v4975
      %5008 = vst.msk [vmem:[%s224 + $0x40] sm:$0xff] %vm258, %v4976
      %5009 = vst.msk [vmem:[%s224 + $0x48] sm:$0xff] %vm258, %v4977
      %5010 = vst.msk [vmem:[%s224 + $0x50] sm:$0xff] %vm258, %v4978
      %5011 = vst.msk [vmem:[%s224 + $0x58] sm:$0xff] %vm258, %v4979
      %5012 = vst.msk [vmem:[%s224 + $0x60] sm:$0xff] %vm258, %v4980
      %5013 = vst.msk [vmem:[%s224 + $0x68] sm:$0xff] %vm258, %v4981
      %5014 = vst.msk [vmem:[%s224 + $0x70] sm:$0xff] %vm258, %v4982
      %5015 = vst.msk [vmem:[%s224 + $0x78] sm:$0xff] %vm258, %v4983
      %5016 = vst.msk [vmem:[%s224 + $0x80] sm:$0xff] %vm258, %v4984
      %5017 = vst.msk [vmem:[%s224 + $0x88] sm:$0xff] %vm258, %v4985
      %5018 = vst.msk [vmem:[%s224 + $0x90] sm:$0xff] %vm258, %v4986
      %5019 = vst.msk [vmem:[%s224 + $0x98] sm:$0xff] %vm258, %v4987
      %5020 = vst.msk [vmem:[%s224 + $0xa0] sm:$0xff] %vm258, %v4988
      %5021 = vst.msk [vmem:[%s224 + $0xa8] sm:$0xff] %vm258, %v4989
      %5022 = vst.msk [vmem:[%s224 + $0xb0] sm:$0xff] %vm258, %v4990
      %5023 = vst.msk [vmem:[%s224 + $0xb8] sm:$0xff] %vm258, %v4991
      %5024 = vst.msk [vmem:[%s224 + $0xc0] sm:$0xff] %vm258, %v4992
      %5025 = vst.msk [vmem:[%s224 + $0xc8] sm:$0xff] %vm258, %v4993
      %5026 = vst.msk [vmem:[%s224 + $0xd0] sm:$0xff] %vm258, %v4994
      %5027 = vst.msk [vmem:[%s224 + $0xd8] sm:$0xff] %vm258, %v4995
      %5028 = vst.msk [vmem:[%s224 + $0xe0] sm:$0xff] %vm258, %v4996
      %5029 = vst.msk [vmem:[%s224 + $0xe8] sm:$0xff] %vm258, %v4997
      %5030 = vst.msk [vmem:[%s224 + $0xf0] sm:$0xff] %vm258, %v4998
      %5031 = vst.msk [vmem:[%s224 + $0xf8] sm:$0xff] %vm258, %v4999
      %p5032 = scmp.lt.s32.totalorder %s16, 1
      %s5033 = scalar_select %p5032, %s16, 1
      %s5034 = smul.addr %s5033, 32
      %s5035 = smul.addr %s5034, 8
      %s5036 = scalar_lea.vmem %s5, %s5035
      // Predicated region
      $region41: #{residual_block.1} parent=39 // pred_check
        %p5037 = pneg %p144
      $region42: #{residual_block.1} parent=39 // pred_check_branch
        %5039 = sbr.rel (%p5037) target = $region44
      $region43: #{residual_block.1} parent=39 // pred_region
        _
      $region44: #{residual_block.1} parent=39 // pred_fallthru
        _
    $region40: #{residual_block.1} parent=5 // pred_fallthru
      _
    %p5040 = scmp.le.s32.totalorder 2, %s11
    // Predicated region
    $region45: #{residual_block.1} parent=5 // pred_check
      %p5041 = pneg %p5040
    $region46: #{residual_block.1} parent=5 // pred_check_branch
      %5043 = sbr.rel (%p5041) target = $region48
    $region47: #{residual_block.1} parent=5 // pred_region
      %s5044 = ssub.s32 %s11, 2
      // Predicated region
      $region49: #{residual_block.1} parent=47 // pred_check
        %p5045 = pneg %p150
      $region50: #{residual_block.1} parent=47 // pred_check_branch
        %5047 = sbr.rel (%p5045) target = $region52
      $region51: #{residual_block.1} parent=47 // pred_region
        %p5048 = scmp.lt.s32.totalorder %s17, 1
        %s5049 = scalar_select %p5048, %s17, 1
        %s5050 = smul.addr %s5049, 32
        %s5051 = smul.addr %s5050, 8
        %s5052 = scalar_lea.vmem %s5, %s5051
      $region52: #{residual_block.1} parent=47 // pred_fallthru
        _
    $region48: #{residual_block.1} parent=5 // pred_fallthru
      _
  $region6: #{residual_block.1} parent=0 // loop_footer
    %s15 = sadd.s32 1, %s11
  $region7: #{residual_block.1} parent=0 // loop_footer_branch
    %10 = sbr.rel target = $region3
  $region8: #{residual_block.1} parent=0 // loop_exit
    _

</llo_original>
